<compile_context>
chip_gen: v5e
topology: v5e:2x2
jax: 0.10.0
libtpu: 0.0.40
codegen_flags: <defaults>
</compile_context>

<pallas_src>
import functools

import jax
import jax.numpy as jnp
from jax import lax
from jax.experimental import pallas as pl
from jax.experimental.pallas import tpu as pltpu


# ----------------------------------------------------------------------------
# Host-side prep: banded (FOFE filter x dilated-conv tap shift) matrices.
# Column block (h, k) of the returned (Ld, 3*H*Ld) matrix maps doc position s
# to z_h[:, t + (k-1)*win] (win = h+2), i.e. the depthwise FOFE filter for
# window `win` composed with the time shift needed by tap k of the dilated conv.
# ----------------------------------------------------------------------------
def build_fofe_tap_matrix(Ld, fofe_max_length, alpha):
    H = fofe_max_length - 1
    s = jnp.arange(Ld, dtype=jnp.int32)[:, None]      # source doc position
    t = jnp.arange(Ld, dtype=jnp.int32)[None, :]      # output doc position
    blocks = []
    for h in range(H):
        win = h + 2
        p = (win - 1) // 2
        # TODO(synk): even-window right-pad parity vs the original PyTorch
        #             fofe_conv1d is unverified (same assumption as rev 2).
        for k in range(3):
            tt = t + (k - 1) * win                    # dilated-conv tap shift
            j = s - tt + p                            # FOFE filter tap index
            expo = jnp.clip((win - 1) - j, 0, win - 1).astype(jnp.float32)
            val = alpha ** expo
            ok = (j >= 0) & (j < win) & (tt >= 0) & (tt < Ld)
            blocks.append(jnp.where(ok, val, 0.0))
    return jnp.concatenate(blocks, axis=1).astype(jnp.bfloat16)   # (Ld, 3*H*Ld)


# ----------------------------------------------------------------------------
# Fused kernel: doc FOFE conv stack -> VMEM slab -> query bias -> 1x1-conv FNN
# with training-mode BatchNorm + LeakyReLU -> score convs -> mask + log_softmax.
# Single grid step: training-mode BatchNorm needs full-batch statistics.
# ----------------------------------------------------------------------------
def make_fofe_nn_kernel(E, B, H, Ld):
    N = B * H * Ld
    BL = B * Ld
    SLOPE = 0.1

    def lrelu(v):
        return jnp.where(v >= 0, v, SLOPE * v)

    def bn_lrelu(hv, g_ref, b_ref):
        # training-mode BatchNorm2d: one-pass sum/sumsq stats (biased variance),
        # gamma folded into the scale -> single FMA per element, then LeakyReLU.
        inv_n = 1.0 / hv.shape[1]
        s1 = jnp.sum(hv, axis=1, keepdims=True)
        s2 = jnp.sum(hv * hv, axis=1, keepdims=True)
        mu = s1 * inv_n
        var = jnp.maximum(s2 * inv_n - mu * mu, 0.0)
        scale = g_ref[...] * lax.rsqrt(var + 1e-5)
        shift = b_ref[...] - mu * scale
        return lrelu(hv * scale + shift)

    def kernel(d_ref, fall_ref, wd_ref, q2_ref, aq_ref, wq_ref,
               w1d_ref, w1q_ref, g1_ref, b1_ref, w2_ref, g2_ref, b2_ref,
               w3_ref, g3_ref, b3_ref, sw_ref, m_ref,
               s_ref, e_ref, slab_ref):
        # ---- doc FOFE conv stack -> channel-major slab (E, N), cols (h,b,l) --
        for b in range(B):
            # FOFE filter + all dilated-conv tap shifts, all windows, one matmul
            zall = jnp.dot(d_ref[b], fall_ref[...],
                           preferred_element_type=jnp.float32)    # (E, 3*H*Ld)
            for h in range(H):
                y = jnp.zeros((E, Ld), jnp.float32)
                for k in range(3):
                    c0 = (h * 3 + k) * Ld
                    y = y + jnp.dot(wd_ref[h * 3 + k],
                                    zall[:, c0:c0 + Ld].astype(jnp.bfloat16),
                                    preferred_element_type=jnp.float32)
                # TODO(synk): fofe_conv1d LeakyReLU slope assumed 0.1 (not in spec).
                slab_ref[:, (h * B + b) * Ld:(h * B + b + 1) * Ld] = \
                    lrelu(y).astype(slab_ref.dtype)

        # ---- query FOFE + Linear + ReLU, folded into a per-batch bias --------
        qcode = jnp.dot(q2_ref[...], aq_ref[...],
                        preferred_element_type=jnp.float32)        # (E, B)
        q1 = jnp.maximum(jnp.dot(wq_ref[...], qcode,
                                 preferred_element_type=jnp.float32), 0.0)
        qbias = jnp.dot(w1q_ref[...], q1,
                        preferred_element_type=jnp.float32)        # (4E, B)
        # per-batch bias broadcast over Ld lanes (no selection-matrix matmul)
        bias_blk = jnp.concatenate(
            [jnp.broadcast_to(qbias[:, b:b + 1], (4 * E, Ld)) for b in range(B)],
            axis=1)                                                # (4E, B*Ld)
        bias_full = jnp.concatenate([bias_blk] * H, axis=1)        # (4E, N)

        # ---- fnn: three 1x1 convs + training-mode BN + LeakyReLU -------------
        h1 = jnp.dot(w1d_ref[...], slab_ref[...],
                     preferred_element_type=jnp.float32) + bias_full
        h1 = bn_lrelu(h1, g1_ref, b1_ref)                          # (4E, N)
        h2 = bn_lrelu(jnp.dot(w2_ref[...], h1.astype(jnp.bfloat16),
                              preferred_element_type=jnp.float32),
                      g2_ref, b2_ref)                              # (4E, N)
        h3 = bn_lrelu(jnp.dot(w3_ref[...], h2.astype(jnp.bfloat16),
                              preferred_element_type=jnp.float32),
                      g3_ref, b3_ref)                              # (2E, N)

        # ---- s_conv / e_conv: per-window (2,2E)@(2E,B*Ld), accumulated -------
        acc = jnp.zeros((2, BL), jnp.float32)
        for h in range(H):
            acc = acc + jnp.dot(sw_ref[h], h3[:, h * BL:(h + 1) * BL],
                                preferred_element_type=jnp.float32)

        # ---- mask + log_softmax (training=True), direct per-row stores -------
        for b in range(B):
            m_row = m_ref[b:b + 1, :]                  # 1.0 == masked position
            for row, out_ref in ((0, s_ref), (1, e_ref)):
                v = jnp.where(m_row > 0.5, -jnp.inf,
                              acc[row:row + 1, b * Ld:(b + 1) * Ld])
                vmax = jnp.max(v, axis=1, keepdims=True)
                lse = vmax + jnp.log(jnp.sum(jnp.exp(v - vmax),
                                             axis=1, keepdims=True))
                out_ref[b:b + 1, :] = v - lse

    return kernel


# ----------------------------------------------------------------------------
# Parameters (deterministic synthetic init, mirroring weights_init).
# ----------------------------------------------------------------------------
def init_params(key, E, fofe_max_length):
    H = fofe_max_length - 1
    ks = jax.random.split(key, 7)

    def kaiming(k, shape, fan_in):
        return jax.random.normal(k, shape, jnp.float32) * ((2.0 / fan_in) ** 0.5)

    return {
        # fofe_linear: Linear(E, E, bias=False)
        "Wq": jax.random.normal(ks[0], (E, E), jnp.float32) * (1.0 / (E ** 0.5)),
        # per-window dilated Conv1d(E, E, 3) weights, stored as (H, tap, out, in)
        "Wd": kaiming(ks[1], (H, 3, E, E), E * 3),
        # fnn 1x1 Conv2d weights (out, in)
        "W1": kaiming(ks[2], (4 * E, 2 * E), 2 * E),
        "W2": kaiming(ks[3], (4 * E, 4 * E), 4 * E),
        "W3": kaiming(ks[4], (2 * E, 4 * E), 4 * E),
        # BatchNorm2d params per weights_init: gamma = 1, beta = 1e-4
        "g1": jnp.ones((4 * E, 1), jnp.float32),
        "b1": jnp.full((4 * E, 1), 1e-4, jnp.float32),
        "g2": jnp.ones((4 * E, 1), jnp.float32),
        "b2": jnp.full((4 * E, 1), 1e-4, jnp.float32),
        "g3": jnp.ones((2 * E, 1), jnp.float32),
        "b3": jnp.full((2 * E, 1), 1e-4, jnp.float32),
        # s_conv / e_conv: Conv2d(2E, 1, (H, 1), bias=False) weights as (H, 2E)
        "Ws": kaiming(ks[5], (H, 2 * E), 2 * E * H),
        "We": kaiming(ks[6], (H, 2 * E), 2 * E * H),
    }


# ----------------------------------------------------------------------------
# Forward (thin glue; all forward compute lives in the fused kernel).
# ----------------------------------------------------------------------------
def fofe_nn_forward(params, query_emb, query_mask, doc_emb, doc_mask,
                    *, fofe_alpha, fofe_max_length):
    del query_mask                       # unused in the PyTorch forward
    B, Lq, E = query_emb.shape
    Ld = doc_emb.shape[1]
    H = fofe_max_length - 1
    N = B * H * Ld

    # doc in channel-major layout, bf16 for the MXU
    doc_t = jnp.transpose(doc_emb, (0, 2, 1)).astype(jnp.bfloat16)   # (B, E, Ld)
    # banded FOFE-filter x conv-tap-shift matrices (host-precomputed constant)
    fall = build_fofe_tap_matrix(Ld, fofe_max_length, fofe_alpha)    # (Ld, 3H*Ld)
    wd = params["Wd"].reshape(3 * H, E, E).astype(jnp.bfloat16)      # (3H, E, E)

    # query embeddings, channel-major (E, B*Lq), columns ordered (b, t)
    query_2d = jnp.transpose(query_emb, (2, 0, 1)).reshape(E, B * Lq)
    query_2d = query_2d.astype(jnp.float32)
    # block-diagonal alpha-power matrix: qcode = query_2d @ A_q -> (E, B)
    a_pows = fofe_alpha ** jnp.arange(Lq - 1, -1, -1, dtype=jnp.float32)
    A_q = jnp.kron(jnp.eye(B, dtype=jnp.float32), a_pows[:, None])   # (B*Lq, B)

    W1d = params["W1"][:, :E].astype(jnp.bfloat16)   # doc half of 1st 1x1 conv
    W1q = params["W1"][:, E:]                        # query half -> per-batch bias
    SW = jnp.stack([params["Ws"], params["We"]], axis=1)             # (H, 2, 2E)
    mask_f = doc_mask.astype(jnp.float32)

    args = (doc_t, fall, wd, query_2d, A_q, params["Wq"],
            W1d, W1q, params["g1"], params["b1"],
            params["W2"].astype(jnp.bfloat16), params["g2"], params["b2"],
            params["W3"].astype(jnp.bfloat16), params["g3"], params["b3"],
            SW, mask_f)

    def full_spec(shape):
        nd = len(shape)
        return pl.BlockSpec(shape, lambda i, _nd=nd: (0,) * _nd)

    kernel = make_fofe_nn_kernel(E, B, H, Ld)
    s_score, e_score = pl.pallas_call(
        kernel,
        out_shape=(jax.ShapeDtypeStruct((B, Ld), jnp.float32),
                   jax.ShapeDtypeStruct((B, Ld), jnp.float32)),
        grid=(1,),
        in_specs=[full_spec(a.shape) for a in args],
        out_specs=(full_spec((B, Ld)), full_spec((B, Ld))),
        scratch_shapes=[pltpu.VMEM((E, N), jnp.bfloat16)],   # doc-FOFE slab
        compiler_params=pltpu.CompilerParams(
            dimension_semantics=("arbitrary",)),
    )(*args)
    return s_score, e_score


# ----------------------------------------------------------------------------
if __name__ == "__main__":
    B, Lq, Ld, E = 2, 8, 128, 16          # emb_dims = 16
    fofe_alpha, fofe_max_length = 0.8, 4  # H = 3

    key = jax.random.PRNGKey(0)
    kq, kd, kp = jax.random.split(key, 3)
    query_emb = jax.random.normal(kq, (B, Lq, E), jnp.float32)
    doc_emb = jax.random.normal(kd, (B, Ld, E), jnp.float32)
    query_mask = jnp.zeros((B, Lq), dtype=bool)
    doc_mask = jnp.zeros((B, Ld), dtype=bool).at[:, Ld - 6:].set(True)

    params = init_params(kp, E, fofe_max_length)

    fwd = jax.jit(functools.partial(fofe_nn_forward,
                                    fofe_alpha=fofe_alpha,
                                    fofe_max_length=fofe_max_length))
    s_score, e_score = fwd(params, query_emb, query_mask, doc_emb, doc_mask)
    jax.block_until_ready((s_score, e_score))

    assert s_score.shape == (B, Ld) and e_score.shape == (B, Ld)
    # log_softmax rows must exponentiate-sum to 1 (masked positions contribute 0)
    assert bool(jnp.allclose(jnp.exp(s_score).sum(axis=1), 1.0, atol=1e-3))
    assert bool(jnp.allclose(jnp.exp(e_score).sum(axis=1), 1.0, atol=1e-3))
    # masked positions must stay -inf after log_softmax
    assert bool(jnp.all(jnp.isneginf(s_score[:, Ld - 6:])))
    print("KERNEL_OK")
</pallas_src>

<mosaic_0001>
module attributes {stable_mosaic.version = 11 : i64} {
  func.func @kernel(%arg0: i32, %arg1: memref<2x16x128xbf16, #tpu.memory_space<vmem>>, %arg2: memref<128x1152xbf16, #tpu.memory_space<vmem>>, %arg3: memref<9x16x16xbf16, #tpu.memory_space<vmem>>, %arg4: memref<16x16xf32, #tpu.memory_space<vmem>>, %arg5: memref<16x2xf32, #tpu.memory_space<vmem>>, %arg6: memref<16x16xf32, #tpu.memory_space<vmem>>, %arg7: memref<64x16xbf16, #tpu.memory_space<vmem>>, %arg8: memref<64x16xf32, #tpu.memory_space<vmem>>, %arg9: memref<64x1xf32, #tpu.memory_space<vmem>>, %arg10: memref<64x1xf32, #tpu.memory_space<vmem>>, %arg11: memref<64x64xbf16, #tpu.memory_space<vmem>>, %arg12: memref<64x1xf32, #tpu.memory_space<vmem>>, %arg13: memref<64x1xf32, #tpu.memory_space<vmem>>, %arg14: memref<32x64xbf16, #tpu.memory_space<vmem>>, %arg15: memref<32x1xf32, #tpu.memory_space<vmem>>, %arg16: memref<32x1xf32, #tpu.memory_space<vmem>>, %arg17: memref<3x2x32xf32, #tpu.memory_space<vmem>>, %arg18: memref<2x128xf32, #tpu.memory_space<vmem>>, %arg19: memref<2x128xf32, #tpu.memory_space<vmem>>, %arg20: memref<2x128xf32, #tpu.memory_space<vmem>>, %arg21: memref<16x768xbf16, #tpu.memory_space<vmem>>) attributes {dimension_semantics = [#tpu.dimension_semantics<arbitrary>], iteration_bounds = array<i64: 1>, scalar_prefetch = 0 : i64, scratch_operands = 1 : i64, tpu.core_type = #tpu.core_type<tc>, window_params = [{pipeline_mode = #tpu.pipeline_mode<synchronous>, transform_indices = @transform_0, window_bounds = array<i64: 2, 16, 128>}, {pipeline_mode = #tpu.pipeline_mode<synchronous>, transform_indices = @transform_1, window_bounds = array<i64: 128, 1152>}, {pipeline_mode = #tpu.pipeline_mode<synchronous>, transform_indices = @transform_2, window_bounds = array<i64: 9, 16, 16>}, {pipeline_mode = #tpu.pipeline_mode<synchronous>, transform_indices = @transform_3, window_bounds = array<i64: 16, 16>}, {pipeline_mode = #tpu.pipeline_mode<synchronous>, transform_indices = @transform_4, window_bounds = array<i64: 16, 2>}, {pipeline_mode = #tpu.pipeline_mode<synchronous>, transform_indices = @transform_5, window_bounds = array<i64: 16, 16>}, {pipeline_mode = #tpu.pipeline_mode<synchronous>, transform_indices = @transform_6, window_bounds = array<i64: 64, 16>}, {pipeline_mode = #tpu.pipeline_mode<synchronous>, transform_indices = @transform_7, window_bounds = array<i64: 64, 16>}, {pipeline_mode = #tpu.pipeline_mode<synchronous>, transform_indices = @transform_8, window_bounds = array<i64: 64, 1>}, {pipeline_mode = #tpu.pipeline_mode<synchronous>, transform_indices = @transform_9, window_bounds = array<i64: 64, 1>}, {pipeline_mode = #tpu.pipeline_mode<synchronous>, transform_indices = @transform_10, window_bounds = array<i64: 64, 64>}, {pipeline_mode = #tpu.pipeline_mode<synchronous>, transform_indices = @transform_11, window_bounds = array<i64: 64, 1>}, {pipeline_mode = #tpu.pipeline_mode<synchronous>, transform_indices = @transform_12, window_bounds = array<i64: 64, 1>}, {pipeline_mode = #tpu.pipeline_mode<synchronous>, transform_indices = @transform_13, window_bounds = array<i64: 32, 64>}, {pipeline_mode = #tpu.pipeline_mode<synchronous>, transform_indices = @transform_14, window_bounds = array<i64: 32, 1>}, {pipeline_mode = #tpu.pipeline_mode<synchronous>, transform_indices = @transform_15, window_bounds = array<i64: 32, 1>}, {pipeline_mode = #tpu.pipeline_mode<synchronous>, transform_indices = @transform_16, window_bounds = array<i64: 3, 2, 32>}, {pipeline_mode = #tpu.pipeline_mode<synchronous>, transform_indices = @transform_17, window_bounds = array<i64: 2, 128>}, {pipeline_mode = #tpu.pipeline_mode<synchronous>, transform_indices = @transform_18, window_bounds = array<i64: 2, 128>}, {pipeline_mode = #tpu.pipeline_mode<synchronous>, transform_indices = @transform_19, window_bounds = array<i64: 2, 128>}]} {
    %c0 = arith.constant 0 : index
    %c0_0 = arith.constant 0 : index
    %c0_1 = arith.constant 0 : index
    %0 = vector.load %arg1[%c0, %c0_0, %c0_1] : memref<2x16x128xbf16, #tpu.memory_space<vmem>>, vector<1x16x128xbf16>
    %1 = vector.shape_cast %0 : vector<1x16x128xbf16> to vector<16x128xbf16>
    %c0_2 = arith.constant 0 : index
    %c0_3 = arith.constant 0 : index
    %2 = vector.load %arg2[%c0_2, %c0_3] : memref<128x1152xbf16, #tpu.memory_space<vmem>>, vector<128x1152xbf16>
    %cst = arith.constant dense<0.000000e+00> : vector<16x1152xf32>
    %3 = tpu.matmul %1, %2, %cst {dimension_numbers = #tpu.dot_dimension_numbers<[1], [0], [0], [1], [0, 0, 1, 1], [], []>} : vector<16x128xbf16>, vector<128x1152xbf16>, vector<16x1152xf32> -> vector<16x1152xf32>
    %cst_4 = arith.constant 0.000000e+00 : f32
    %4 = vector.broadcast %cst_4 : f32 to vector<16x128xf32>
    %c0_5 = arith.constant 0 : index
    %c0_6 = arith.constant 0 : index
    %c0_7 = arith.constant 0 : index
    %5 = vector.load %arg3[%c0_5, %c0_6, %c0_7] : memref<9x16x16xbf16, #tpu.memory_space<vmem>>, vector<1x16x16xbf16>
    %6 = vector.shape_cast %5 : vector<1x16x16xbf16> to vector<16x16xbf16>
    %7 = vector.extract_strided_slice %3 {offsets = [0, 0], sizes = [16, 128], strides = [1, 1]} : vector<16x1152xf32> to vector<16x128xf32>
    %8 = arith.truncf %7 : vector<16x128xf32> to vector<16x128xbf16>
    %cst_8 = arith.constant dense<0.000000e+00> : vector<16x128xf32>
    %9 = tpu.matmul %6, %8, %cst_8 {dimension_numbers = #tpu.dot_dimension_numbers<[1], [0], [0], [1], [0, 0, 1, 1], [], []>} : vector<16x16xbf16>, vector<16x128xbf16>, vector<16x128xf32> -> vector<16x128xf32>
    %10 = arith.addf %4, %9 : vector<16x128xf32>
    %c1 = arith.constant 1 : index
    %c0_9 = arith.constant 0 : index
    %c0_10 = arith.constant 0 : index
    %11 = vector.load %arg3[%c1, %c0_9, %c0_10] : memref<9x16x16xbf16, #tpu.memory_space<vmem>>, vector<1x16x16xbf16>
    %12 = vector.shape_cast %11 : vector<1x16x16xbf16> to vector<16x16xbf16>
    %13 = vector.extract_strided_slice %3 {offsets = [0, 128], sizes = [16, 128], strides = [1, 1]} : vector<16x1152xf32> to vector<16x128xf32>
    %14 = arith.truncf %13 : vector<16x128xf32> to vector<16x128xbf16>
    %cst_11 = arith.constant dense<0.000000e+00> : vector<16x128xf32>
    %15 = tpu.matmul %12, %14, %cst_11 {dimension_numbers = #tpu.dot_dimension_numbers<[1], [0], [0], [1], [0, 0, 1, 1], [], []>} : vector<16x16xbf16>, vector<16x128xbf16>, vector<16x128xf32> -> vector<16x128xf32>
    %16 = arith.addf %10, %15 : vector<16x128xf32>
    %c2 = arith.constant 2 : index
    %c0_12 = arith.constant 0 : index
    %c0_13 = arith.constant 0 : index
    %17 = vector.load %arg3[%c2, %c0_12, %c0_13] : memref<9x16x16xbf16, #tpu.memory_space<vmem>>, vector<1x16x16xbf16>
    %18 = vector.shape_cast %17 : vector<1x16x16xbf16> to vector<16x16xbf16>
    %19 = vector.extract_strided_slice %3 {offsets = [0, 256], sizes = [16, 128], strides = [1, 1]} : vector<16x1152xf32> to vector<16x128xf32>
    %20 = arith.truncf %19 : vector<16x128xf32> to vector<16x128xbf16>
    %cst_14 = arith.constant dense<0.000000e+00> : vector<16x128xf32>
    %21 = tpu.matmul %18, %20, %cst_14 {dimension_numbers = #tpu.dot_dimension_numbers<[1], [0], [0], [1], [0, 0, 1, 1], [], []>} : vector<16x16xbf16>, vector<16x128xbf16>, vector<16x128xf32> -> vector<16x128xf32>
    %22 = arith.addf %16, %21 : vector<16x128xf32>
    %cst_15 = arith.constant 0.000000e+00 : f32
    %23 = vector.broadcast %cst_15 : f32 to vector<16x128xf32>
    %24 = arith.cmpf oge, %22, %23 : vector<16x128xf32>
    %cst_16 = arith.constant 1.000000e-01 : f32
    %25 = vector.broadcast %cst_16 : f32 to vector<16x128xf32>
    %26 = arith.mulf %25, %22 : vector<16x128xf32>
    %27 = arith.select %24, %22, %26 : vector<16x128xi1>, vector<16x128xf32>
    %28 = arith.truncf %27 : vector<16x128xf32> to vector<16x128xbf16>
    %c0_17 = arith.constant 0 : index
    %c0_18 = arith.constant 0 : index
    %29 = vector.load %arg21[%c0_17, %c0_18] : memref<16x768xbf16, #tpu.memory_space<vmem>>, vector<16x128xbf16>
    tpu.vector_store %arg21[%c0_17, %c0_18], %28 {strides = array<i32>} : memref<16x768xbf16, #tpu.memory_space<vmem>>, vector<16x128xbf16>,
    %cst_19 = arith.constant 0.000000e+00 : f32
    %30 = vector.broadcast %cst_19 : f32 to vector<16x128xf32>
    %c3 = arith.constant 3 : index
    %c0_20 = arith.constant 0 : index
    %c0_21 = arith.constant 0 : index
    %31 = vector.load %arg3[%c3, %c0_20, %c0_21] : memref<9x16x16xbf16, #tpu.memory_space<vmem>>, vector<1x16x16xbf16>
    %32 = vector.shape_cast %31 : vector<1x16x16xbf16> to vector<16x16xbf16>
    %33 = vector.extract_strided_slice %3 {offsets = [0, 384], sizes = [16, 128], strides = [1, 1]} : vector<16x1152xf32> to vector<16x128xf32>
    %34 = arith.truncf %33 : vector<16x128xf32> to vector<16x128xbf16>
    %cst_22 = arith.constant dense<0.000000e+00> : vector<16x128xf32>
    %35 = tpu.matmul %32, %34, %cst_22 {dimension_numbers = #tpu.dot_dimension_numbers<[1], [0], [0], [1], [0, 0, 1, 1], [], []>} : vector<16x16xbf16>, vector<16x128xbf16>, vector<16x128xf32> -> vector<16x128xf32>
    %36 = arith.addf %30, %35 : vector<16x128xf32>
    %c4 = arith.constant 4 : index
    %c0_23 = arith.constant 0 : index
    %c0_24 = arith.constant 0 : index
    %37 = vector.load %arg3[%c4, %c0_23, %c0_24] : memref<9x16x16xbf16, #tpu.memory_space<vmem>>, vector<1x16x16xbf16>
    %38 = vector.shape_cast %37 : vector<1x16x16xbf16> to vector<16x16xbf16>
    %39 = vector.extract_strided_slice %3 {offsets = [0, 512], sizes = [16, 128], strides = [1, 1]} : vector<16x1152xf32> to vector<16x128xf32>
    %40 = arith.truncf %39 : vector<16x128xf32> to vector<16x128xbf16>
    %cst_25 = arith.constant dense<0.000000e+00> : vector<16x128xf32>
    %41 = tpu.matmul %38, %40, %cst_25 {dimension_numbers = #tpu.dot_dimension_numbers<[1], [0], [0], [1], [0, 0, 1, 1], [], []>} : vector<16x16xbf16>, vector<16x128xbf16>, vector<16x128xf32> -> vector<16x128xf32>
    %42 = arith.addf %36, %41 : vector<16x128xf32>
    %c5 = arith.constant 5 : index
    %c0_26 = arith.constant 0 : index
    %c0_27 = arith.constant 0 : index
    %43 = vector.load %arg3[%c5, %c0_26, %c0_27] : memref<9x16x16xbf16, #tpu.memory_space<vmem>>, vector<1x16x16xbf16>
    %44 = vector.shape_cast %43 : vector<1x16x16xbf16> to vector<16x16xbf16>
    %45 = vector.extract_strided_slice %3 {offsets = [0, 640], sizes = [16, 128], strides = [1, 1]} : vector<16x1152xf32> to vector<16x128xf32>
    %46 = arith.truncf %45 : vector<16x128xf32> to vector<16x128xbf16>
    %cst_28 = arith.constant dense<0.000000e+00> : vector<16x128xf32>
    %47 = tpu.matmul %44, %46, %cst_28 {dimension_numbers = #tpu.dot_dimension_numbers<[1], [0], [0], [1], [0, 0, 1, 1], [], []>} : vector<16x16xbf16>, vector<16x128xbf16>, vector<16x128xf32> -> vector<16x128xf32>
    %48 = arith.addf %42, %47 : vector<16x128xf32>
    %cst_29 = arith.constant 0.000000e+00 : f32
    %49 = vector.broadcast %cst_29 : f32 to vector<16x128xf32>
    %50 = arith.cmpf oge, %48, %49 : vector<16x128xf32>
    %cst_30 = arith.constant 1.000000e-01 : f32
    %51 = vector.broadcast %cst_30 : f32 to vector<16x128xf32>
    %52 = arith.mulf %51, %48 : vector<16x128xf32>
    %53 = arith.select %50, %48, %52 : vector<16x128xi1>, vector<16x128xf32>
    %54 = arith.truncf %53 : vector<16x128xf32> to vector<16x128xbf16>
    %c0_31 = arith.constant 0 : index
    %c256 = arith.constant 256 : index
    %55 = vector.load %arg21[%c0_31, %c256] : memref<16x768xbf16, #tpu.memory_space<vmem>>, vector<16x128xbf16>
    tpu.vector_store %arg21[%c0_31, %c256], %54 {strides = array<i32>} : memref<16x768xbf16, #tpu.memory_space<vmem>>, vector<16x128xbf16>,
    %cst_32 = arith.constant 0.000000e+00 : f32
    %56 = vector.broadcast %cst_32 : f32 to vector<16x128xf32>
    %c6 = arith.constant 6 : index
    %c0_33 = arith.constant 0 : index
    %c0_34 = arith.constant 0 : index
    %57 = vector.load %arg3[%c6, %c0_33, %c0_34] : memref<9x16x16xbf16, #tpu.memory_space<vmem>>, vector<1x16x16xbf16>
    %58 = vector.shape_cast %57 : vector<1x16x16xbf16> to vector<16x16xbf16>
    %59 = vector.extract_strided_slice %3 {offsets = [0, 768], sizes = [16, 128], strides = [1, 1]} : vector<16x1152xf32> to vector<16x128xf32>
    %60 = arith.truncf %59 : vector<16x128xf32> to vector<16x128xbf16>
    %cst_35 = arith.constant dense<0.000000e+00> : vector<16x128xf32>
    %61 = tpu.matmul %58, %60, %cst_35 {dimension_numbers = #tpu.dot_dimension_numbers<[1], [0], [0], [1], [0, 0, 1, 1], [], []>} : vector<16x16xbf16>, vector<16x128xbf16>, vector<16x128xf32> -> vector<16x128xf32>
    %62 = arith.addf %56, %61 : vector<16x128xf32>
    %c7 = arith.constant 7 : index
    %c0_36 = arith.constant 0 : index
    %c0_37 = arith.constant 0 : index
    %63 = vector.load %arg3[%c7, %c0_36, %c0_37] : memref<9x16x16xbf16, #tpu.memory_space<vmem>>, vector<1x16x16xbf16>
    %64 = vector.shape_cast %63 : vector<1x16x16xbf16> to vector<16x16xbf16>
    %65 = vector.extract_strided_slice %3 {offsets = [0, 896], sizes = [16, 128], strides = [1, 1]} : vector<16x1152xf32> to vector<16x128xf32>
    %66 = arith.truncf %65 : vector<16x128xf32> to vector<16x128xbf16>
    %cst_38 = arith.constant dense<0.000000e+00> : vector<16x128xf32>
    %67 = tpu.matmul %64, %66, %cst_38 {dimension_numbers = #tpu.dot_dimension_numbers<[1], [0], [0], [1], [0, 0, 1, 1], [], []>} : vector<16x16xbf16>, vector<16x128xbf16>, vector<16x128xf32> -> vector<16x128xf32>
    %68 = arith.addf %62, %67 : vector<16x128xf32>
    %c8 = arith.constant 8 : index
    %c0_39 = arith.constant 0 : index
    %c0_40 = arith.constant 0 : index
    %69 = vector.load %arg3[%c8, %c0_39, %c0_40] : memref<9x16x16xbf16, #tpu.memory_space<vmem>>, vector<1x16x16xbf16>
    %70 = vector.shape_cast %69 : vector<1x16x16xbf16> to vector<16x16xbf16>
    %71 = vector.extract_strided_slice %3 {offsets = [0, 1024], sizes = [16, 128], strides = [1, 1]} : vector<16x1152xf32> to vector<16x128xf32>
    %72 = arith.truncf %71 : vector<16x128xf32> to vector<16x128xbf16>
    %cst_41 = arith.constant dense<0.000000e+00> : vector<16x128xf32>
    %73 = tpu.matmul %70, %72, %cst_41 {dimension_numbers = #tpu.dot_dimension_numbers<[1], [0], [0], [1], [0, 0, 1, 1], [], []>} : vector<16x16xbf16>, vector<16x128xbf16>, vector<16x128xf32> -> vector<16x128xf32>
    %74 = arith.addf %68, %73 : vector<16x128xf32>
    %cst_42 = arith.constant 0.000000e+00 : f32
    %75 = vector.broadcast %cst_42 : f32 to vector<16x128xf32>
    %76 = arith.cmpf oge, %74, %75 : vector<16x128xf32>
    %cst_43 = arith.constant 1.000000e-01 : f32
    %77 = vector.broadcast %cst_43 : f32 to vector<16x128xf32>
    %78 = arith.mulf %77, %74 : vector<16x128xf32>
    %79 = arith.select %76, %74, %78 : vector<16x128xi1>, vector<16x128xf32>
    %80 = arith.truncf %79 : vector<16x128xf32> to vector<16x128xbf16>
    %c0_44 = arith.constant 0 : index
    %c512 = arith.constant 512 : index
    %81 = vector.load %arg21[%c0_44, %c512] : memref<16x768xbf16, #tpu.memory_space<vmem>>, vector<16x128xbf16>
    tpu.vector_store %arg21[%c0_44, %c512], %80 {strides = array<i32>} : memref<16x768xbf16, #tpu.memory_space<vmem>>, vector<16x128xbf16>,
    %c1_45 = arith.constant 1 : index
    %c0_46 = arith.constant 0 : index
    %c0_47 = arith.constant 0 : index
    %82 = vector.load %arg1[%c1_45, %c0_46, %c0_47] : memref<2x16x128xbf16, #tpu.memory_space<vmem>>, vector<1x16x128xbf16>
    %83 = vector.shape_cast %82 : vector<1x16x128xbf16> to vector<16x128xbf16>
    %c0_48 = arith.constant 0 : index
    %c0_49 = arith.constant 0 : index
    %84 = vector.load %arg2[%c0_48, %c0_49] : memref<128x1152xbf16, #tpu.memory_space<vmem>>, vector<128x1152xbf16>
    %cst_50 = arith.constant dense<0.000000e+00> : vector<16x1152xf32>
    %85 = tpu.matmul %83, %84, %cst_50 {dimension_numbers = #tpu.dot_dimension_numbers<[1], [0], [0], [1], [0, 0, 1, 1], [], []>} : vector<16x128xbf16>, vector<128x1152xbf16>, vector<16x1152xf32> -> vector<16x1152xf32>
    %cst_51 = arith.constant 0.000000e+00 : f32
    %86 = vector.broadcast %cst_51 : f32 to vector<16x128xf32>
    %c0_52 = arith.constant 0 : index
    %c0_53 = arith.constant 0 : index
    %c0_54 = arith.constant 0 : index
    %87 = vector.load %arg3[%c0_52, %c0_53, %c0_54] : memref<9x16x16xbf16, #tpu.memory_space<vmem>>, vector<1x16x16xbf16>
    %88 = vector.shape_cast %87 : vector<1x16x16xbf16> to vector<16x16xbf16>
    %89 = vector.extract_strided_slice %85 {offsets = [0, 0], sizes = [16, 128], strides = [1, 1]} : vector<16x1152xf32> to vector<16x128xf32>
    %90 = arith.truncf %89 : vector<16x128xf32> to vector<16x128xbf16>
    %cst_55 = arith.constant dense<0.000000e+00> : vector<16x128xf32>
    %91 = tpu.matmul %88, %90, %cst_55 {dimension_numbers = #tpu.dot_dimension_numbers<[1], [0], [0], [1], [0, 0, 1, 1], [], []>} : vector<16x16xbf16>, vector<16x128xbf16>, vector<16x128xf32> -> vector<16x128xf32>
    %92 = arith.addf %86, %91 : vector<16x128xf32>
    %c1_56 = arith.constant 1 : index
    %c0_57 = arith.constant 0 : index
    %c0_58 = arith.constant 0 : index
    %93 = vector.load %arg3[%c1_56, %c0_57, %c0_58] : memref<9x16x16xbf16, #tpu.memory_space<vmem>>, vector<1x16x16xbf16>
    %94 = vector.shape_cast %93 : vector<1x16x16xbf16> to vector<16x16xbf16>
    %95 = vector.extract_strided_slice %85 {offsets = [0, 128], sizes = [16, 128], strides = [1, 1]} : vector<16x1152xf32> to vector<16x128xf32>
    %96 = arith.truncf %95 : vector<16x128xf32> to vector<16x128xbf16>
    %cst_59 = arith.constant dense<0.000000e+00> : vector<16x128xf32>
    %97 = tpu.matmul %94, %96, %cst_59 {dimension_numbers = #tpu.dot_dimension_numbers<[1], [0], [0], [1], [0, 0, 1, 1], [], []>} : vector<16x16xbf16>, vector<16x128xbf16>, vector<16x128xf32> -> vector<16x128xf32>
    %98 = arith.addf %92, %97 : vector<16x128xf32>
    %c2_60 = arith.constant 2 : index
    %c0_61 = arith.constant 0 : index
    %c0_62 = arith.constant 0 : index
    %99 = vector.load %arg3[%c2_60, %c0_61, %c0_62] : memref<9x16x16xbf16, #tpu.memory_space<vmem>>, vector<1x16x16xbf16>
    %100 = vector.shape_cast %99 : vector<1x16x16xbf16> to vector<16x16xbf16>
    %101 = vector.extract_strided_slice %85 {offsets = [0, 256], sizes = [16, 128], strides = [1, 1]} : vector<16x1152xf32> to vector<16x128xf32>
    %102 = arith.truncf %101 : vector<16x128xf32> to vector<16x128xbf16>
    %cst_63 = arith.constant dense<0.000000e+00> : vector<16x128xf32>
    %103 = tpu.matmul %100, %102, %cst_63 {dimension_numbers = #tpu.dot_dimension_numbers<[1], [0], [0], [1], [0, 0, 1, 1], [], []>} : vector<16x16xbf16>, vector<16x128xbf16>, vector<16x128xf32> -> vector<16x128xf32>
    %104 = arith.addf %98, %103 : vector<16x128xf32>
    %cst_64 = arith.constant 0.000000e+00 : f32
    %105 = vector.broadcast %cst_64 : f32 to vector<16x128xf32>
    %106 = arith.cmpf oge, %104, %105 : vector<16x128xf32>
    %cst_65 = arith.constant 1.000000e-01 : f32
    %107 = vector.broadcast %cst_65 : f32 to vector<16x128xf32>
    %108 = arith.mulf %107, %104 : vector<16x128xf32>
    %109 = arith.select %106, %104, %108 : vector<16x128xi1>, vector<16x128xf32>
    %110 = arith.truncf %109 : vector<16x128xf32> to vector<16x128xbf16>
    %c0_66 = arith.constant 0 : index
    %c128 = arith.constant 128 : index
    %111 = vector.load %arg21[%c0_66, %c128] : memref<16x768xbf16, #tpu.memory_space<vmem>>, vector<16x128xbf16>
    tpu.vector_store %arg21[%c0_66, %c128], %110 {strides = array<i32>} : memref<16x768xbf16, #tpu.memory_space<vmem>>, vector<16x128xbf16>,
    %cst_67 = arith.constant 0.000000e+00 : f32
    %112 = vector.broadcast %cst_67 : f32 to vector<16x128xf32>
    %c3_68 = arith.constant 3 : index
    %c0_69 = arith.constant 0 : index
    %c0_70 = arith.constant 0 : index
    %113 = vector.load %arg3[%c3_68, %c0_69, %c0_70] : memref<9x16x16xbf16, #tpu.memory_space<vmem>>, vector<1x16x16xbf16>
    %114 = vector.shape_cast %113 : vector<1x16x16xbf16> to vector<16x16xbf16>
    %115 = vector.extract_strided_slice %85 {offsets = [0, 384], sizes = [16, 128], strides = [1, 1]} : vector<16x1152xf32> to vector<16x128xf32>
    %116 = arith.truncf %115 : vector<16x128xf32> to vector<16x128xbf16>
    %cst_71 = arith.constant dense<0.000000e+00> : vector<16x128xf32>
    %117 = tpu.matmul %114, %116, %cst_71 {dimension_numbers = #tpu.dot_dimension_numbers<[1], [0], [0], [1], [0, 0, 1, 1], [], []>} : vector<16x16xbf16>, vector<16x128xbf16>, vector<16x128xf32> -> vector<16x128xf32>
    %118 = arith.addf %112, %117 : vector<16x128xf32>
    %c4_72 = arith.constant 4 : index
    %c0_73 = arith.constant 0 : index
    %c0_74 = arith.constant 0 : index
    %119 = vector.load %arg3[%c4_72, %c0_73, %c0_74] : memref<9x16x16xbf16, #tpu.memory_space<vmem>>, vector<1x16x16xbf16>
    %120 = vector.shape_cast %119 : vector<1x16x16xbf16> to vector<16x16xbf16>
    %121 = vector.extract_strided_slice %85 {offsets = [0, 512], sizes = [16, 128], strides = [1, 1]} : vector<16x1152xf32> to vector<16x128xf32>
    %122 = arith.truncf %121 : vector<16x128xf32> to vector<16x128xbf16>
    %cst_75 = arith.constant dense<0.000000e+00> : vector<16x128xf32>
    %123 = tpu.matmul %120, %122, %cst_75 {dimension_numbers = #tpu.dot_dimension_numbers<[1], [0], [0], [1], [0, 0, 1, 1], [], []>} : vector<16x16xbf16>, vector<16x128xbf16>, vector<16x128xf32> -> vector<16x128xf32>
    %124 = arith.addf %118, %123 : vector<16x128xf32>
    %c5_76 = arith.constant 5 : index
    %c0_77 = arith.constant 0 : index
    %c0_78 = arith.constant 0 : index
    %125 = vector.load %arg3[%c5_76, %c0_77, %c0_78] : memref<9x16x16xbf16, #tpu.memory_space<vmem>>, vector<1x16x16xbf16>
    %126 = vector.shape_cast %125 : vector<1x16x16xbf16> to vector<16x16xbf16>
    %127 = vector.extract_strided_slice %85 {offsets = [0, 640], sizes = [16, 128], strides = [1, 1]} : vector<16x1152xf32> to vector<16x128xf32>
    %128 = arith.truncf %127 : vector<16x128xf32> to vector<16x128xbf16>
    %cst_79 = arith.constant dense<0.000000e+00> : vector<16x128xf32>
    %129 = tpu.matmul %126, %128, %cst_79 {dimension_numbers = #tpu.dot_dimension_numbers<[1], [0], [0], [1], [0, 0, 1, 1], [], []>} : vector<16x16xbf16>, vector<16x128xbf16>, vector<16x128xf32> -> vector<16x128xf32>
    %130 = arith.addf %124, %129 : vector<16x128xf32>
    %cst_80 = arith.constant 0.000000e+00 : f32
    %131 = vector.broadcast %cst_80 : f32 to vector<16x128xf32>
    %132 = arith.cmpf oge, %130, %131 : vector<16x128xf32>
    %cst_81 = arith.constant 1.000000e-01 : f32
    %133 = vector.broadcast %cst_81 : f32 to vector<16x128xf32>
    %134 = arith.mulf %133, %130 : vector<16x128xf32>
    %135 = arith.select %132, %130, %134 : vector<16x128xi1>, vector<16x128xf32>
    %136 = arith.truncf %135 : vector<16x128xf32> to vector<16x128xbf16>
    %c0_82 = arith.constant 0 : index
    %c384 = arith.constant 384 : index
    %137 = vector.load %arg21[%c0_82, %c384] : memref<16x768xbf16, #tpu.memory_space<vmem>>, vector<16x128xbf16>
    tpu.vector_store %arg21[%c0_82, %c384], %136 {strides = array<i32>} : memref<16x768xbf16, #tpu.memory_space<vmem>>, vector<16x128xbf16>,
    %cst_83 = arith.constant 0.000000e+00 : f32
    %138 = vector.broadcast %cst_83 : f32 to vector<16x128xf32>
    %c6_84 = arith.constant 6 : index
    %c0_85 = arith.constant 0 : index
    %c0_86 = arith.constant 0 : index
    %139 = vector.load %arg3[%c6_84, %c0_85, %c0_86] : memref<9x16x16xbf16, #tpu.memory_space<vmem>>, vector<1x16x16xbf16>
    %140 = vector.shape_cast %139 : vector<1x16x16xbf16> to vector<16x16xbf16>
    %141 = vector.extract_strided_slice %85 {offsets = [0, 768], sizes = [16, 128], strides = [1, 1]} : vector<16x1152xf32> to vector<16x128xf32>
    %142 = arith.truncf %141 : vector<16x128xf32> to vector<16x128xbf16>
    %cst_87 = arith.constant dense<0.000000e+00> : vector<16x128xf32>
    %143 = tpu.matmul %140, %142, %cst_87 {dimension_numbers = #tpu.dot_dimension_numbers<[1], [0], [0], [1], [0, 0, 1, 1], [], []>} : vector<16x16xbf16>, vector<16x128xbf16>, vector<16x128xf32> -> vector<16x128xf32>
    %144 = arith.addf %138, %143 : vector<16x128xf32>
    %c7_88 = arith.constant 7 : index
    %c0_89 = arith.constant 0 : index
    %c0_90 = arith.constant 0 : index
    %145 = vector.load %arg3[%c7_88, %c0_89, %c0_90] : memref<9x16x16xbf16, #tpu.memory_space<vmem>>, vector<1x16x16xbf16>
    %146 = vector.shape_cast %145 : vector<1x16x16xbf16> to vector<16x16xbf16>
    %147 = vector.extract_strided_slice %85 {offsets = [0, 896], sizes = [16, 128], strides = [1, 1]} : vector<16x1152xf32> to vector<16x128xf32>
    %148 = arith.truncf %147 : vector<16x128xf32> to vector<16x128xbf16>
    %cst_91 = arith.constant dense<0.000000e+00> : vector<16x128xf32>
    %149 = tpu.matmul %146, %148, %cst_91 {dimension_numbers = #tpu.dot_dimension_numbers<[1], [0], [0], [1], [0, 0, 1, 1], [], []>} : vector<16x16xbf16>, vector<16x128xbf16>, vector<16x128xf32> -> vector<16x128xf32>
    %150 = arith.addf %144, %149 : vector<16x128xf32>
    %c8_92 = arith.constant 8 : index
    %c0_93 = arith.constant 0 : index
    %c0_94 = arith.constant 0 : index
    %151 = vector.load %arg3[%c8_92, %c0_93, %c0_94] : memref<9x16x16xbf16, #tpu.memory_space<vmem>>, vector<1x16x16xbf16>
    %152 = vector.shape_cast %151 : vector<1x16x16xbf16> to vector<16x16xbf16>
    %153 = vector.extract_strided_slice %85 {offsets = [0, 1024], sizes = [16, 128], strides = [1, 1]} : vector<16x1152xf32> to vector<16x128xf32>
    %154 = arith.truncf %153 : vector<16x128xf32> to vector<16x128xbf16>
    %cst_95 = arith.constant dense<0.000000e+00> : vector<16x128xf32>
    %155 = tpu.matmul %152, %154, %cst_95 {dimension_numbers = #tpu.dot_dimension_numbers<[1], [0], [0], [1], [0, 0, 1, 1], [], []>} : vector<16x16xbf16>, vector<16x128xbf16>, vector<16x128xf32> -> vector<16x128xf32>
    %156 = arith.addf %150, %155 : vector<16x128xf32>
    %cst_96 = arith.constant 0.000000e+00 : f32
    %157 = vector.broadcast %cst_96 : f32 to vector<16x128xf32>
    %158 = arith.cmpf oge, %156, %157 : vector<16x128xf32>
    %cst_97 = arith.constant 1.000000e-01 : f32
    %159 = vector.broadcast %cst_97 : f32 to vector<16x128xf32>
    %160 = arith.mulf %159, %156 : vector<16x128xf32>
    %161 = arith.select %158, %156, %160 : vector<16x128xi1>, vector<16x128xf32>
    %162 = arith.truncf %161 : vector<16x128xf32> to vector<16x128xbf16>
    %c0_98 = arith.constant 0 : index
    %c640 = arith.constant 640 : index
    %163 = vector.load %arg21[%c0_98, %c640] : memref<16x768xbf16, #tpu.memory_space<vmem>>, vector<16x128xbf16>
    tpu.vector_store %arg21[%c0_98, %c640], %162 {strides = array<i32>} : memref<16x768xbf16, #tpu.memory_space<vmem>>, vector<16x128xbf16>,
    %c0_99 = arith.constant 0 : index
    %c0_100 = arith.constant 0 : index
    %164 = vector.load %arg4[%c0_99, %c0_100] : memref<16x16xf32, #tpu.memory_space<vmem>>, vector<16x16xf32>
    %c0_101 = arith.constant 0 : index
    %c0_102 = arith.constant 0 : index
    %165 = vector.load %arg5[%c0_101, %c0_102] : memref<16x2xf32, #tpu.memory_space<vmem>>, vector<16x2xf32>
    %cst_103 = arith.constant dense<0.000000e+00> : vector<16x2xf32>
    %166 = tpu.matmul %164, %165, %cst_103 {dimension_numbers = #tpu.dot_dimension_numbers<[1], [0], [0], [1], [0, 0, 1, 1], [], []>} : vector<16x16xf32>, vector<16x2xf32>, vector<16x2xf32> -> vector<16x2xf32>
    %c0_104 = arith.constant 0 : index
    %c0_105 = arith.constant 0 : index
    %167 = vector.load %arg6[%c0_104, %c0_105] : memref<16x16xf32, #tpu.memory_space<vmem>>, vector<16x16xf32>
    %cst_106 = arith.constant dense<0.000000e+00> : vector<16x2xf32>
    %168 = tpu.matmul %167, %166, %cst_106 {dimension_numbers = #tpu.dot_dimension_numbers<[1], [0], [0], [1], [0, 0, 1, 1], [], []>} : vector<16x16xf32>, vector<16x2xf32>, vector<16x2xf32> -> vector<16x2xf32>
    %cst_107 = arith.constant 0.000000e+00 : f32
    %169 = vector.broadcast %cst_107 : f32 to vector<16x2xf32>
    %170 = arith.maximumf %168, %169 : vector<16x2xf32>
    %c0_108 = arith.constant 0 : index
    %c0_109 = arith.constant 0 : index
    %171 = vector.load %arg8[%c0_108, %c0_109] : memref<64x16xf32, #tpu.memory_space<vmem>>, vector<64x16xf32>
    %cst_110 = arith.constant dense<0.000000e+00> : vector<64x2xf32>
    %172 = tpu.matmul %171, %170, %cst_110 {dimension_numbers = #tpu.dot_dimension_numbers<[1], [0], [0], [1], [0, 0, 1, 1], [], []>} : vector<64x16xf32>, vector<16x2xf32>, vector<64x2xf32> -> vector<64x2xf32>
    %173 = vector.extract_strided_slice %172 {offsets = [0, 0], sizes = [64, 1], strides = [1, 1]} : vector<64x2xf32> to vector<64x1xf32>
    %174 = vector.shape_cast %173 : vector<64x1xf32> to vector<64x1xf32>
    %175 = vector.broadcast %174 : vector<64x1xf32> to vector<64x128xf32>
    %176 = vector.extract_strided_slice %172 {offsets = [0, 1], sizes = [64, 1], strides = [1, 1]} : vector<64x2xf32> to vector<64x1xf32>
    %177 = vector.shape_cast %176 : vector<64x1xf32> to vector<64x1xf32>
    %178 = vector.broadcast %177 : vector<64x1xf32> to vector<64x128xf32>
    %179 = tpu.concatenate %175, %178 in 1 : vector<64x128xf32>, vector<64x128xf32> -> vector<64x256xf32>
    %180 = tpu.concatenate %179, %179, %179 in 1 : vector<64x256xf32>, vector<64x256xf32>, vector<64x256xf32> -> vector<64x768xf32>
    %c0_111 = arith.constant 0 : index
    %c0_112 = arith.constant 0 : index
    %181 = vector.load %arg7[%c0_111, %c0_112] : memref<64x16xbf16, #tpu.memory_space<vmem>>, vector<64x16xbf16>
    %c0_113 = arith.constant 0 : index
    %c0_114 = arith.constant 0 : index
    %182 = vector.load %arg21[%c0_113, %c0_114] : memref<16x768xbf16, #tpu.memory_space<vmem>>, vector<16x768xbf16>
    %cst_115 = arith.constant dense<0.000000e+00> : vector<64x768xf32>
    %183 = tpu.matmul %181, %182, %cst_115 {dimension_numbers = #tpu.dot_dimension_numbers<[1], [0], [0], [1], [0, 0, 1, 1], [], []>} : vector<64x16xbf16>, vector<16x768xbf16>, vector<64x768xf32> -> vector<64x768xf32>
    %184 = arith.addf %183, %180 : vector<64x768xf32>
    %cst_116 = arith.constant dense<0.000000e+00> : vector<64xf32>
    %185 = vector.multi_reduction <add>, %184, %cst_116 [1] : vector<64x768xf32> to vector<64xf32>
    %186 = vector.shape_cast %185 : vector<64xf32> to vector<64x1xf32>
    %187 = arith.mulf %184, %184 : vector<64x768xf32>
    %cst_117 = arith.constant dense<0.000000e+00> : vector<64xf32>
    %188 = vector.multi_reduction <add>, %187, %cst_117 [1] : vector<64x768xf32> to vector<64xf32>
    %189 = vector.shape_cast %188 : vector<64xf32> to vector<64x1xf32>
    %cst_118 = arith.constant 0.00130208337 : f32
    %190 = vector.broadcast %cst_118 : f32 to vector<64x1xf32>
    %191 = arith.mulf %186, %190 : vector<64x1xf32>
    %cst_119 = arith.constant 0.00130208337 : f32
    %192 = vector.broadcast %cst_119 : f32 to vector<64x1xf32>
    %193 = arith.mulf %189, %192 : vector<64x1xf32>
    %194 = arith.mulf %191, %191 : vector<64x1xf32>
    %195 = arith.subf %193, %194 : vector<64x1xf32>
    %cst_120 = arith.constant 0.000000e+00 : f32
    %196 = vector.broadcast %cst_120 : f32 to vector<64x1xf32>
    %197 = arith.maximumf %195, %196 : vector<64x1xf32>
    %c0_121 = arith.constant 0 : index
    %c0_122 = arith.constant 0 : index
    %198 = vector.load %arg9[%c0_121, %c0_122] : memref<64x1xf32, #tpu.memory_space<vmem>>, vector<64x1xf32>
    %cst_123 = arith.constant 9.99999974E-6 : f32
    %199 = vector.broadcast %cst_123 : f32 to vector<64x1xf32>
    %200 = arith.addf %197, %199 : vector<64x1xf32>
    %201 = math.rsqrt %200 : vector<64x1xf32>
    %202 = arith.mulf %198, %201 : vector<64x1xf32>
    %c0_124 = arith.constant 0 : index
    %c0_125 = arith.constant 0 : index
    %203 = vector.load %arg10[%c0_124, %c0_125] : memref<64x1xf32, #tpu.memory_space<vmem>>, vector<64x1xf32>
    %204 = arith.mulf %191, %202 : vector<64x1xf32>
    %205 = arith.subf %203, %204 : vector<64x1xf32>
    %206 = vector.broadcast %202 : vector<64x1xf32> to vector<64x768xf32>
    %207 = arith.mulf %184, %206 : vector<64x768xf32>
    %208 = vector.broadcast %205 : vector<64x1xf32> to vector<64x768xf32>
    %209 = arith.addf %207, %208 : vector<64x768xf32>
    %cst_126 = arith.constant 0.000000e+00 : f32
    %210 = vector.broadcast %cst_126 : f32 to vector<64x768xf32>
    %211 = arith.cmpf oge, %209, %210 : vector<64x768xf32>
    %cst_127 = arith.constant 1.000000e-01 : f32
    %212 = vector.broadcast %cst_127 : f32 to vector<64x768xf32>
    %213 = arith.mulf %212, %209 : vector<64x768xf32>
    %214 = arith.select %211, %209, %213 : vector<64x768xi1>, vector<64x768xf32>
    %c0_128 = arith.constant 0 : index
    %c0_129 = arith.constant 0 : index
    %215 = vector.load %arg11[%c0_128, %c0_129] : memref<64x64xbf16, #tpu.memory_space<vmem>>, vector<64x64xbf16>
    %216 = arith.truncf %214 : vector<64x768xf32> to vector<64x768xbf16>
    %cst_130 = arith.constant dense<0.000000e+00> : vector<64x768xf32>
    %217 = tpu.matmul %215, %216, %cst_130 {dimension_numbers = #tpu.dot_dimension_numbers<[1], [0], [0], [1], [0, 0, 1, 1], [], []>} : vector<64x64xbf16>, vector<64x768xbf16>, vector<64x768xf32> -> vector<64x768xf32>
    %cst_131 = arith.constant dense<0.000000e+00> : vector<64xf32>
    %218 = vector.multi_reduction <add>, %217, %cst_131 [1] : vector<64x768xf32> to vector<64xf32>
    %219 = vector.shape_cast %218 : vector<64xf32> to vector<64x1xf32>
    %220 = arith.mulf %217, %217 : vector<64x768xf32>
    %cst_132 = arith.constant dense<0.000000e+00> : vector<64xf32>
    %221 = vector.multi_reduction <add>, %220, %cst_132 [1] : vector<64x768xf32> to vector<64xf32>
    %222 = vector.shape_cast %221 : vector<64xf32> to vector<64x1xf32>
    %cst_133 = arith.constant 0.00130208337 : f32
    %223 = vector.broadcast %cst_133 : f32 to vector<64x1xf32>
    %224 = arith.mulf %219, %223 : vector<64x1xf32>
    %cst_134 = arith.constant 0.00130208337 : f32
    %225 = vector.broadcast %cst_134 : f32 to vector<64x1xf32>
    %226 = arith.mulf %222, %225 : vector<64x1xf32>
    %227 = arith.mulf %224, %224 : vector<64x1xf32>
    %228 = arith.subf %226, %227 : vector<64x1xf32>
    %cst_135 = arith.constant 0.000000e+00 : f32
    %229 = vector.broadcast %cst_135 : f32 to vector<64x1xf32>
    %230 = arith.maximumf %228, %229 : vector<64x1xf32>
    %c0_136 = arith.constant 0 : index
    %c0_137 = arith.constant 0 : index
    %231 = vector.load %arg12[%c0_136, %c0_137] : memref<64x1xf32, #tpu.memory_space<vmem>>, vector<64x1xf32>
    %cst_138 = arith.constant 9.99999974E-6 : f32
    %232 = vector.broadcast %cst_138 : f32 to vector<64x1xf32>
    %233 = arith.addf %230, %232 : vector<64x1xf32>
    %234 = math.rsqrt %233 : vector<64x1xf32>
    %235 = arith.mulf %231, %234 : vector<64x1xf32>
    %c0_139 = arith.constant 0 : index
    %c0_140 = arith.constant 0 : index
    %236 = vector.load %arg13[%c0_139, %c0_140] : memref<64x1xf32, #tpu.memory_space<vmem>>, vector<64x1xf32>
    %237 = arith.mulf %224, %235 : vector<64x1xf32>
    %238 = arith.subf %236, %237 : vector<64x1xf32>
    %239 = vector.broadcast %235 : vector<64x1xf32> to vector<64x768xf32>
    %240 = arith.mulf %217, %239 : vector<64x768xf32>
    %241 = vector.broadcast %238 : vector<64x1xf32> to vector<64x768xf32>
    %242 = arith.addf %240, %241 : vector<64x768xf32>
    %cst_141 = arith.constant 0.000000e+00 : f32
    %243 = vector.broadcast %cst_141 : f32 to vector<64x768xf32>
    %244 = arith.cmpf oge, %242, %243 : vector<64x768xf32>
    %cst_142 = arith.constant 1.000000e-01 : f32
    %245 = vector.broadcast %cst_142 : f32 to vector<64x768xf32>
    %246 = arith.mulf %245, %242 : vector<64x768xf32>
    %247 = arith.select %244, %242, %246 : vector<64x768xi1>, vector<64x768xf32>
    %c0_143 = arith.constant 0 : index
    %c0_144 = arith.constant 0 : index
    %248 = vector.load %arg14[%c0_143, %c0_144] : memref<32x64xbf16, #tpu.memory_space<vmem>>, vector<32x64xbf16>
    %249 = arith.truncf %247 : vector<64x768xf32> to vector<64x768xbf16>
    %cst_145 = arith.constant dense<0.000000e+00> : vector<32x768xf32>
    %250 = tpu.matmul %248, %249, %cst_145 {dimension_numbers = #tpu.dot_dimension_numbers<[1], [0], [0], [1], [0, 0, 1, 1], [], []>} : vector<32x64xbf16>, vector<64x768xbf16>, vector<32x768xf32> -> vector<32x768xf32>
    %cst_146 = arith.constant dense<0.000000e+00> : vector<32xf32>
    %251 = vector.multi_reduction <add>, %250, %cst_146 [1] : vector<32x768xf32> to vector<32xf32>
    %252 = vector.shape_cast %251 : vector<32xf32> to vector<32x1xf32>
    %253 = arith.mulf %250, %250 : vector<32x768xf32>
    %cst_147 = arith.constant dense<0.000000e+00> : vector<32xf32>
    %254 = vector.multi_reduction <add>, %253, %cst_147 [1] : vector<32x768xf32> to vector<32xf32>
    %255 = vector.shape_cast %254 : vector<32xf32> to vector<32x1xf32>
    %cst_148 = arith.constant 0.00130208337 : f32
    %256 = vector.broadcast %cst_148 : f32 to vector<32x1xf32>
    %257 = arith.mulf %252, %256 : vector<32x1xf32>
    %cst_149 = arith.constant 0.00130208337 : f32
    %258 = vector.broadcast %cst_149 : f32 to vector<32x1xf32>
    %259 = arith.mulf %255, %258 : vector<32x1xf32>
    %260 = arith.mulf %257, %257 : vector<32x1xf32>
    %261 = arith.subf %259, %260 : vector<32x1xf32>
    %cst_150 = arith.constant 0.000000e+00 : f32
    %262 = vector.broadcast %cst_150 : f32 to vector<32x1xf32>
    %263 = arith.maximumf %261, %262 : vector<32x1xf32>
    %c0_151 = arith.constant 0 : index
    %c0_152 = arith.constant 0 : index
    %264 = vector.load %arg15[%c0_151, %c0_152] : memref<32x1xf32, #tpu.memory_space<vmem>>, vector<32x1xf32>
    %cst_153 = arith.constant 9.99999974E-6 : f32
    %265 = vector.broadcast %cst_153 : f32 to vector<32x1xf32>
    %266 = arith.addf %263, %265 : vector<32x1xf32>
    %267 = math.rsqrt %266 : vector<32x1xf32>
    %268 = arith.mulf %264, %267 : vector<32x1xf32>
    %c0_154 = arith.constant 0 : index
    %c0_155 = arith.constant 0 : index
    %269 = vector.load %arg16[%c0_154, %c0_155] : memref<32x1xf32, #tpu.memory_space<vmem>>, vector<32x1xf32>
    %270 = arith.mulf %257, %268 : vector<32x1xf32>
    %271 = arith.subf %269, %270 : vector<32x1xf32>
    %272 = vector.broadcast %268 : vector<32x1xf32> to vector<32x768xf32>
    %273 = arith.mulf %250, %272 : vector<32x768xf32>
    %274 = vector.broadcast %271 : vector<32x1xf32> to vector<32x768xf32>
    %275 = arith.addf %273, %274 : vector<32x768xf32>
    %cst_156 = arith.constant 0.000000e+00 : f32
    %276 = vector.broadcast %cst_156 : f32 to vector<32x768xf32>
    %277 = arith.cmpf oge, %275, %276 : vector<32x768xf32>
    %cst_157 = arith.constant 1.000000e-01 : f32
    %278 = vector.broadcast %cst_157 : f32 to vector<32x768xf32>
    %279 = arith.mulf %278, %275 : vector<32x768xf32>
    %280 = arith.select %277, %275, %279 : vector<32x768xi1>, vector<32x768xf32>
    %cst_158 = arith.constant 0.000000e+00 : f32
    %281 = vector.broadcast %cst_158 : f32 to vector<2x256xf32>
    %c0_159 = arith.constant 0 : index
    %c0_160 = arith.constant 0 : index
    %c0_161 = arith.constant 0 : index
    %282 = vector.load %arg17[%c0_159, %c0_160, %c0_161] : memref<3x2x32xf32, #tpu.memory_space<vmem>>, vector<1x2x32xf32>
    %283 = vector.shape_cast %282 : vector<1x2x32xf32> to vector<2x32xf32>
    %284 = vector.extract_strided_slice %280 {offsets = [0, 0], sizes = [32, 256], strides = [1, 1]} : vector<32x768xf32> to vector<32x256xf32>
    %cst_162 = arith.constant dense<0.000000e+00> : vector<2x256xf32>
    %285 = tpu.matmul %283, %284, %cst_162 {dimension_numbers = #tpu.dot_dimension_numbers<[1], [0], [0], [1], [0, 0, 1, 1], [], []>} : vector<2x32xf32>, vector<32x256xf32>, vector<2x256xf32> -> vector<2x256xf32>
    %286 = arith.addf %281, %285 : vector<2x256xf32>
    %c1_163 = arith.constant 1 : index
    %c0_164 = arith.constant 0 : index
    %c0_165 = arith.constant 0 : index
    %287 = vector.load %arg17[%c1_163, %c0_164, %c0_165] : memref<3x2x32xf32, #tpu.memory_space<vmem>>, vector<1x2x32xf32>
    %288 = vector.shape_cast %287 : vector<1x2x32xf32> to vector<2x32xf32>
    %289 = vector.extract_strided_slice %280 {offsets = [0, 256], sizes = [32, 256], strides = [1, 1]} : vector<32x768xf32> to vector<32x256xf32>
    %cst_166 = arith.constant dense<0.000000e+00> : vector<2x256xf32>
    %290 = tpu.matmul %288, %289, %cst_166 {dimension_numbers = #tpu.dot_dimension_numbers<[1], [0], [0], [1], [0, 0, 1, 1], [], []>} : vector<2x32xf32>, vector<32x256xf32>, vector<2x256xf32> -> vector<2x256xf32>
    %291 = arith.addf %286, %290 : vector<2x256xf32>
    %c2_167 = arith.constant 2 : index
    %c0_168 = arith.constant 0 : index
    %c0_169 = arith.constant 0 : index
    %292 = vector.load %arg17[%c2_167, %c0_168, %c0_169] : memref<3x2x32xf32, #tpu.memory_space<vmem>>, vector<1x2x32xf32>
    %293 = vector.shape_cast %292 : vector<1x2x32xf32> to vector<2x32xf32>
    %294 = vector.extract_strided_slice %280 {offsets = [0, 512], sizes = [32, 256], strides = [1, 1]} : vector<32x768xf32> to vector<32x256xf32>
    %cst_170 = arith.constant dense<0.000000e+00> : vector<2x256xf32>
    %295 = tpu.matmul %293, %294, %cst_170 {dimension_numbers = #tpu.dot_dimension_numbers<[1], [0], [0], [1], [0, 0, 1, 1], [], []>} : vector<2x32xf32>, vector<32x256xf32>, vector<2x256xf32> -> vector<2x256xf32>
    %296 = arith.addf %291, %295 : vector<2x256xf32>
    %c0_171 = arith.constant 0 : index
    %c0_172 = arith.constant 0 : index
    %297 = vector.load %arg18[%c0_171, %c0_172] : memref<2x128xf32, #tpu.memory_space<vmem>>, vector<1x128xf32>
    %cst_173 = arith.constant 5.000000e-01 : f32
    %298 = vector.broadcast %cst_173 : f32 to vector<1x128xf32>
    %299 = arith.cmpf ogt, %297, %298 : vector<1x128xf32>
    %300 = vector.extract_strided_slice %296 {offsets = [0, 0], sizes = [1, 128], strides = [1, 1]} : vector<2x256xf32> to vector<1x128xf32>
    %cst_174 = arith.constant 0xFF800000 : f32
    %301 = vector.broadcast %cst_174 : f32 to vector<1x128xf32>
    %302 = arith.select %299, %301, %300 : vector<1x128xi1>, vector<1x128xf32>
    %cst_175 = arith.constant dense<0xFF800000> : vector<1xf32>
    %303 = vector.multi_reduction <maximumf>, %302, %cst_175 [1] : vector<1x128xf32> to vector<1xf32>
    %304 = vector.shape_cast %303 : vector<1xf32> to vector<1x1xf32>
    %305 = vector.broadcast %304 : vector<1x1xf32> to vector<1x128xf32>
    %306 = arith.subf %302, %305 : vector<1x128xf32>
    %307 = math.exp %306 : vector<1x128xf32>
    %cst_176 = arith.constant dense<0.000000e+00> : vector<1xf32>
    %308 = vector.multi_reduction <add>, %307, %cst_176 [1] : vector<1x128xf32> to vector<1xf32>
    %309 = vector.shape_cast %308 : vector<1xf32> to vector<1x1xf32>
    %310 = math.log %309 : vector<1x1xf32>
    %311 = arith.addf %304, %310 : vector<1x1xf32>
    %312 = vector.broadcast %311 : vector<1x1xf32> to vector<1x128xf32>
    %313 = arith.subf %302, %312 : vector<1x128xf32>
    %c0_177 = arith.constant 0 : index
    %c0_178 = arith.constant 0 : index
    %314 = vector.load %arg19[%c0_177, %c0_178] : memref<2x128xf32, #tpu.memory_space<vmem>>, vector<1x128xf32>
    tpu.vector_store %arg19[%c0_177, %c0_178], %313 {strides = array<i32>} : memref<2x128xf32, #tpu.memory_space<vmem>>, vector<1x128xf32>,
    %cst_179 = arith.constant 5.000000e-01 : f32
    %315 = vector.broadcast %cst_179 : f32 to vector<1x128xf32>
    %316 = arith.cmpf ogt, %297, %315 : vector<1x128xf32>
    %317 = vector.extract_strided_slice %296 {offsets = [1, 0], sizes = [1, 128], strides = [1, 1]} : vector<2x256xf32> to vector<1x128xf32>
    %cst_180 = arith.constant 0xFF800000 : f32
    %318 = vector.broadcast %cst_180 : f32 to vector<1x128xf32>
    %319 = arith.select %316, %318, %317 : vector<1x128xi1>, vector<1x128xf32>
    %cst_181 = arith.constant dense<0xFF800000> : vector<1xf32>
    %320 = vector.multi_reduction <maximumf>, %319, %cst_181 [1] : vector<1x128xf32> to vector<1xf32>
    %321 = vector.shape_cast %320 : vector<1xf32> to vector<1x1xf32>
    %322 = vector.broadcast %321 : vector<1x1xf32> to vector<1x128xf32>
    %323 = arith.subf %319, %322 : vector<1x128xf32>
    %324 = math.exp %323 : vector<1x128xf32>
    %cst_182 = arith.constant dense<0.000000e+00> : vector<1xf32>
    %325 = vector.multi_reduction <add>, %324, %cst_182 [1] : vector<1x128xf32> to vector<1xf32>
    %326 = vector.shape_cast %325 : vector<1xf32> to vector<1x1xf32>
    %327 = math.log %326 : vector<1x1xf32>
    %328 = arith.addf %321, %327 : vector<1x1xf32>
    %329 = vector.broadcast %328 : vector<1x1xf32> to vector<1x128xf32>
    %330 = arith.subf %319, %329 : vector<1x128xf32>
    %c0_183 = arith.constant 0 : index
    %c0_184 = arith.constant 0 : index
    %331 = vector.load %arg20[%c0_183, %c0_184] : memref<2x128xf32, #tpu.memory_space<vmem>>, vector<1x128xf32>
    tpu.vector_store %arg20[%c0_183, %c0_184], %330 {strides = array<i32>} : memref<2x128xf32, #tpu.memory_space<vmem>>, vector<1x128xf32>,
    %c1_185 = arith.constant 1 : index
    %c0_186 = arith.constant 0 : index
    %332 = vector.load %arg18[%c1_185, %c0_186] : memref<2x128xf32, #tpu.memory_space<vmem>>, vector<1x128xf32>
    %cst_187 = arith.constant 5.000000e-01 : f32
    %333 = vector.broadcast %cst_187 : f32 to vector<1x128xf32>
    %334 = arith.cmpf ogt, %332, %333 : vector<1x128xf32>
    %335 = vector.extract_strided_slice %296 {offsets = [0, 128], sizes = [1, 128], strides = [1, 1]} : vector<2x256xf32> to vector<1x128xf32>
    %cst_188 = arith.constant 0xFF800000 : f32
    %336 = vector.broadcast %cst_188 : f32 to vector<1x128xf32>
    %337 = arith.select %334, %336, %335 : vector<1x128xi1>, vector<1x128xf32>
    %cst_189 = arith.constant dense<0xFF800000> : vector<1xf32>
    %338 = vector.multi_reduction <maximumf>, %337, %cst_189 [1] : vector<1x128xf32> to vector<1xf32>
    %339 = vector.shape_cast %338 : vector<1xf32> to vector<1x1xf32>
    %340 = vector.broadcast %339 : vector<1x1xf32> to vector<1x128xf32>
    %341 = arith.subf %337, %340 : vector<1x128xf32>
    %342 = math.exp %341 : vector<1x128xf32>
    %cst_190 = arith.constant dense<0.000000e+00> : vector<1xf32>
    %343 = vector.multi_reduction <add>, %342, %cst_190 [1] : vector<1x128xf32> to vector<1xf32>
    %344 = vector.shape_cast %343 : vector<1xf32> to vector<1x1xf32>
    %345 = math.log %344 : vector<1x1xf32>
    %346 = arith.addf %339, %345 : vector<1x1xf32>
    %347 = vector.broadcast %346 : vector<1x1xf32> to vector<1x128xf32>
    %348 = arith.subf %337, %347 : vector<1x128xf32>
    %c1_191 = arith.constant 1 : index
    %c0_192 = arith.constant 0 : index
    %349 = vector.load %arg19[%c1_191, %c0_192] : memref<2x128xf32, #tpu.memory_space<vmem>>, vector<1x128xf32>
    tpu.vector_store %arg19[%c1_191, %c0_192], %348 {strides = array<i32>} : memref<2x128xf32, #tpu.memory_space<vmem>>, vector<1x128xf32>,
    %cst_193 = arith.constant 5.000000e-01 : f32
    %350 = vector.broadcast %cst_193 : f32 to vector<1x128xf32>
    %351 = arith.cmpf ogt, %332, %350 : vector<1x128xf32>
    %352 = vector.extract_strided_slice %296 {offsets = [1, 128], sizes = [1, 128], strides = [1, 1]} : vector<2x256xf32> to vector<1x128xf32>
    %cst_194 = arith.constant 0xFF800000 : f32
    %353 = vector.broadcast %cst_194 : f32 to vector<1x128xf32>
    %354 = arith.select %351, %353, %352 : vector<1x128xi1>, vector<1x128xf32>
    %cst_195 = arith.constant dense<0xFF800000> : vector<1xf32>
    %355 = vector.multi_reduction <maximumf>, %354, %cst_195 [1] : vector<1x128xf32> to vector<1xf32>
    %356 = vector.shape_cast %355 : vector<1xf32> to vector<1x1xf32>
    %357 = vector.broadcast %356 : vector<1x1xf32> to vector<1x128xf32>
    %358 = arith.subf %354, %357 : vector<1x128xf32>
    %359 = math.exp %358 : vector<1x128xf32>
    %cst_196 = arith.constant dense<0.000000e+00> : vector<1xf32>
    %360 = vector.multi_reduction <add>, %359, %cst_196 [1] : vector<1x128xf32> to vector<1xf32>
    %361 = vector.shape_cast %360 : vector<1xf32> to vector<1x1xf32>
    %362 = math.log %361 : vector<1x1xf32>
    %363 = arith.addf %356, %362 : vector<1x1xf32>
    %364 = vector.broadcast %363 : vector<1x1xf32> to vector<1x128xf32>
    %365 = arith.subf %354, %364 : vector<1x128xf32>
    %c1_197 = arith.constant 1 : index
    %c0_198 = arith.constant 0 : index
    %366 = vector.load %arg20[%c1_197, %c0_198] : memref<2x128xf32, #tpu.memory_space<vmem>>, vector<1x128xf32>
    tpu.vector_store %arg20[%c1_197, %c0_198], %365 {strides = array<i32>} : memref<2x128xf32, #tpu.memory_space<vmem>>, vector<1x128xf32>,
    return
  }
  func.func @transform_0(%arg0: i32) -> (i32, i32, i32) {
    %c0_i32 = arith.constant 0 : i32
    %c0_i32_0 = arith.constant 0 : i32
    %c0_i32_1 = arith.constant 0 : i32
    %c0_i32_2 = arith.constant 0 : i32
    return %c0_i32, %c0_i32_0, %c0_i32_1 : i32, i32, i32
  }
  func.func @transform_1(%arg0: i32) -> (i32, i32) {
    %c0_i32 = arith.constant 0 : i32
    %c0_i32_0 = arith.constant 0 : i32
    %c0_i32_1 = arith.constant 0 : i32
    return %c0_i32, %c0_i32_0 : i32, i32
  }
  func.func @transform_2(%arg0: i32) -> (i32, i32, i32) {
    %c0_i32 = arith.constant 0 : i32
    %c0_i32_0 = arith.constant 0 : i32
    %c0_i32_1 = arith.constant 0 : i32
    %c0_i32_2 = arith.constant 0 : i32
    return %c0_i32, %c0_i32_0, %c0_i32_1 : i32, i32, i32
  }
  func.func @transform_3(%arg0: i32) -> (i32, i32) {
    %c0_i32 = arith.constant 0 : i32
    %c0_i32_0 = arith.constant 0 : i32
    %c0_i32_1 = arith.constant 0 : i32
    return %c0_i32, %c0_i32_0 : i32, i32
  }
  func.func @transform_4(%arg0: i32) -> (i32, i32) {
    %c0_i32 = arith.constant 0 : i32
    %c0_i32_0 = arith.constant 0 : i32
    %c0_i32_1 = arith.constant 0 : i32
    return %c0_i32, %c0_i32_0 : i32, i32
  }
  func.func @transform_5(%arg0: i32) -> (i32, i32) {
    %c0_i32 = arith.constant 0 : i32
    %c0_i32_0 = arith.constant 0 : i32
    %c0_i32_1 = arith.constant 0 : i32
    return %c0_i32, %c0_i32_0 : i32, i32
  }
  func.func @transform_6(%arg0: i32) -> (i32, i32) {
    %c0_i32 = arith.constant 0 : i32
    %c0_i32_0 = arith.constant 0 : i32
    %c0_i32_1 = arith.constant 0 : i32
    return %c0_i32, %c0_i32_0 : i32, i32
  }
  func.func @transform_7(%arg0: i32) -> (i32, i32) {
    %c0_i32 = arith.constant 0 : i32
    %c0_i32_0 = arith.constant 0 : i32
    %c0_i32_1 = arith.constant 0 : i32
    return %c0_i32, %c0_i32_0 : i32, i32
  }
  func.func @transform_8(%arg0: i32) -> (i32, i32) {
    %c0_i32 = arith.constant 0 : i32
    %c0_i32_0 = arith.constant 0 : i32
    %c0_i32_1 = arith.constant 0 : i32
    return %c0_i32, %c0_i32_0 : i32, i32
  }
  func.func @transform_9(%arg0: i32) -> (i32, i32) {
    %c0_i32 = arith.constant 0 : i32
    %c0_i32_0 = arith.constant 0 : i32
    %c0_i32_1 = arith.constant 0 : i32
    return %c0_i32, %c0_i32_0 : i32, i32
  }
  func.func @transform_10(%arg0: i32) -> (i32, i32) {
    %c0_i32 = arith.constant 0 : i32
    %c0_i32_0 = arith.constant 0 : i32
    %c0_i32_1 = arith.constant 0 : i32
    return %c0_i32, %c0_i32_0 : i32, i32
  }
  func.func @transform_11(%arg0: i32) -> (i32, i32) {
    %c0_i32 = arith.constant 0 : i32
    %c0_i32_0 = arith.constant 0 : i32
    %c0_i32_1 = arith.constant 0 : i32
    return %c0_i32, %c0_i32_0 : i32, i32
  }
  func.func @transform_12(%arg0: i32) -> (i32, i32) {
    %c0_i32 = arith.constant 0 : i32
    %c0_i32_0 = arith.constant 0 : i32
    %c0_i32_1 = arith.constant 0 : i32
    return %c0_i32, %c0_i32_0 : i32, i32
  }
  func.func @transform_13(%arg0: i32) -> (i32, i32) {
    %c0_i32 = arith.constant 0 : i32
    %c0_i32_0 = arith.constant 0 : i32
    %c0_i32_1 = arith.constant 0 : i32
    return %c0_i32, %c0_i32_0 : i32, i32
  }
  func.func @transform_14(%arg0: i32) -> (i32, i32) {
    %c0_i32 = arith.constant 0 : i32
    %c0_i32_0 = arith.constant 0 : i32
    %c0_i32_1 = arith.constant 0 : i32
    return %c0_i32, %c0_i32_0 : i32, i32
  }
  func.func @transform_15(%arg0: i32) -> (i32, i32) {
    %c0_i32 = arith.constant 0 : i32
    %c0_i32_0 = arith.constant 0 : i32
    %c0_i32_1 = arith.constant 0 : i32
    return %c0_i32, %c0_i32_0 : i32, i32
  }
  func.func @transform_16(%arg0: i32) -> (i32, i32, i32) {
    %c0_i32 = arith.constant 0 : i32
    %c0_i32_0 = arith.constant 0 : i32
    %c0_i32_1 = arith.constant 0 : i32
    %c0_i32_2 = arith.constant 0 : i32
    return %c0_i32, %c0_i32_0, %c0_i32_1 : i32, i32, i32
  }
  func.func @transform_17(%arg0: i32) -> (i32, i32) {
    %c0_i32 = arith.constant 0 : i32
    %c0_i32_0 = arith.constant 0 : i32
    %c0_i32_1 = arith.constant 0 : i32
    return %c0_i32, %c0_i32_0 : i32, i32
  }
  func.func @transform_18(%arg0: i32) -> (i32, i32) {
    %c0_i32 = arith.constant 0 : i32
    %c0_i32_0 = arith.constant 0 : i32
    %c0_i32_1 = arith.constant 0 : i32
    return %c0_i32, %c0_i32_0 : i32, i32
  }
  func.func @transform_19(%arg0: i32) -> (i32, i32) {
    %c0_i32 = arith.constant 0 : i32
    %c0_i32_0 = arith.constant 0 : i32
    %c0_i32_1 = arith.constant 0 : i32
    return %c0_i32, %c0_i32_0 : i32, i32
  }
}

</mosaic_0001>

<llo_original>
// kernel: fofe_nn_forward.1
$region0: #{fofe_nn_forward.1}
  #allocation0 [shape = 'u32[]', space=smem, size = 0x4, offset = 0x4, fixed_abs, tag = 'smem constant byte address 0x4 - core index']
  #allocation1 [shape = 'u32[72,128]{1,0:T(1,128)}', space=vmem, size = 0x9000, scoped, tag = 'internal scratch']
  #allocation2 [shape = 'bf16[16,768]{1,0:T(8,128)(2,1)}', space=vmem, size = 0x6000, scoped, tag = 'scratch operand']
  %s0 = inlined_call_operand.vmem [shape: bf16[2,16,128], index: 0, kind: input, shape index: {}]
  %s1 = inlined_call_operand.vmem [shape: bf16[128,1152], index: 1, kind: input, shape index: {}]
  %s2 = inlined_call_operand.vmem [shape: bf16[9,16,16], index: 2, kind: input, shape index: {}]
  %s3 = inlined_call_operand.vmem [shape: f32[16,16], index: 3, kind: input, shape index: {}]
  %s4 = inlined_call_operand.vmem [shape: f32[16,2], index: 4, kind: input, shape index: {}]
  %s5 = inlined_call_operand.vmem [shape: f32[16,16], index: 5, kind: input, shape index: {}]
  %s6 = inlined_call_operand.vmem [shape: bf16[64,16], index: 6, kind: input, shape index: {}]
  %s7 = inlined_call_operand.vmem [shape: f32[64,16], index: 7, kind: input, shape index: {}]
  %s8 = inlined_call_operand.vmem [shape: f32[64,1], index: 8, kind: input, shape index: {}]
  %s9 = inlined_call_operand.vmem [shape: f32[64,1], index: 9, kind: input, shape index: {}]
  %s10 = inlined_call_operand.vmem [shape: bf16[64,64], index: 10, kind: input, shape index: {}]
  %s11 = inlined_call_operand.vmem [shape: f32[64,1], index: 11, kind: input, shape index: {}]
  %s12 = inlined_call_operand.vmem [shape: f32[64,1], index: 12, kind: input, shape index: {}]
  %s13 = inlined_call_operand.vmem [shape: bf16[32,64], index: 13, kind: input, shape index: {}]
  %s14 = inlined_call_operand.vmem [shape: f32[32,1], index: 14, kind: input, shape index: {}]
  %s15 = inlined_call_operand.vmem [shape: f32[32,1], index: 15, kind: input, shape index: {}]
  %s16 = inlined_call_operand.vmem [shape: f32[3,2,32], index: 16, kind: input, shape index: {}]
  %s17 = inlined_call_operand.vmem [shape: f32[2,128], index: 17, kind: input, shape index: {}]
  %s18 = inlined_call_operand.hbm [shape: f32[2,128], index: 18, kind: output, shape index: {0}]
  %s19 = inlined_call_operand.hbm [shape: f32[2,128], index: 19, kind: output, shape index: {1}]
  %20 = xla_tuple %s18, %s19
  %s21 = sld [smem:[#allocation0]]
  $region90: #{fofe_nn_forward.1} parent=0
    _
  %s23 = ssub.s32 1, %s21
  %s24 = scalar_select 0, %s23, %s21
  $region1: #{fofe_nn_forward.1} parent=0
    #allocation3 [shape = 'u8[1024]{0}', space=vmem, size = 0x400, scoped, tag = 'output window, operand 0, single buffered']
    #allocation4 [shape = 's32[1]{0}', space=sflag, size = 0x4, scoped, tag = 'scoped memory for fofe_nn_forward.1']
    #allocation5 [shape = 'u8[1024]{0}', space=vmem, size = 0x400, scoped, tag = 'output window, operand 1, single buffered']
    #allocation6 [shape = 's32[1]{0}', space=sflag, size = 0x4, scoped, tag = 'scoped memory for fofe_nn_forward.1']
    %25 = vsyncpa [#allocation4], 0
    %26 = vsyncpa [#allocation6], 0
    // Predicated region
    $region2: #{fofe_nn_forward.1} parent=1 // pred_check
      _
    $region3: #{fofe_nn_forward.1} parent=1 // pred_check_branch
      %28 = sbr.rel (0) target = $region5
    $region4: #{fofe_nn_forward.1} parent=1 // pred_region
      _
    $region5: #{fofe_nn_forward.1} parent=1 // pred_fallthru
      _
    // Predicated region
    $region6: #{fofe_nn_forward.1} parent=1 // pred_check
      _
    $region7: #{fofe_nn_forward.1} parent=1 // pred_check_branch
      %30 = sbr.rel (0) target = $region9
    $region8: #{fofe_nn_forward.1} parent=1 // pred_region
      _
    $region9: #{fofe_nn_forward.1} parent=1 // pred_fallthru
      _
    // Predicated region
    $region10: #{fofe_nn_forward.1} parent=1 // pred_check
      _
    $region11: #{fofe_nn_forward.1} parent=1 // pred_check_branch
      %32 = sbr.rel (0) target = $region13
    $region12: #{fofe_nn_forward.1} parent=1 // pred_region
      _
    $region13: #{fofe_nn_forward.1} parent=1 // pred_fallthru
      _
    // Predicated region
    $region14: #{fofe_nn_forward.1} parent=1 // pred_check
      _
    $region15: #{fofe_nn_forward.1} parent=1 // pred_check_branch
      %34 = sbr.rel (0) target = $region17
    $region16: #{fofe_nn_forward.1} parent=1 // pred_region
      _
    $region17: #{fofe_nn_forward.1} parent=1 // pred_fallthru
      _
    // Predicated region
    $region18: #{fofe_nn_forward.1} parent=1 // pred_check
      _
    $region19: #{fofe_nn_forward.1} parent=1 // pred_check_branch
      %36 = sbr.rel (0) target = $region21
    $region20: #{fofe_nn_forward.1} parent=1 // pred_region
      _
    $region21: #{fofe_nn_forward.1} parent=1 // pred_fallthru
      _
    // Predicated region
    $region22: #{fofe_nn_forward.1} parent=1 // pred_check
      _
    $region23: #{fofe_nn_forward.1} parent=1 // pred_check_branch
      %38 = sbr.rel (0) target = $region25
    $region24: #{fofe_nn_forward.1} parent=1 // pred_region
      _
    $region25: #{fofe_nn_forward.1} parent=1 // pred_fallthru
      _
    // Predicated region
    $region26: #{fofe_nn_forward.1} parent=1 // pred_check
      _
    $region27: #{fofe_nn_forward.1} parent=1 // pred_check_branch
      %40 = sbr.rel (0) target = $region29
    $region28: #{fofe_nn_forward.1} parent=1 // pred_region
      _
    $region29: #{fofe_nn_forward.1} parent=1 // pred_fallthru
      _
    // Predicated region
    $region30: #{fofe_nn_forward.1} parent=1 // pred_check
      _
    $region31: #{fofe_nn_forward.1} parent=1 // pred_check_branch
      %42 = sbr.rel (0) target = $region33
    $region32: #{fofe_nn_forward.1} parent=1 // pred_region
      _
    $region33: #{fofe_nn_forward.1} parent=1 // pred_fallthru
      _
    // Predicated region
    $region34: #{fofe_nn_forward.1} parent=1 // pred_check
      _
    $region35: #{fofe_nn_forward.1} parent=1 // pred_check_branch
      %44 = sbr.rel (0) target = $region37
    $region36: #{fofe_nn_forward.1} parent=1 // pred_region
      _
    $region37: #{fofe_nn_forward.1} parent=1 // pred_fallthru
      _
    // Predicated region
    $region38: #{fofe_nn_forward.1} parent=1 // pred_check
      _
    $region39: #{fofe_nn_forward.1} parent=1 // pred_check_branch
      %46 = sbr.rel (0) target = $region41
    $region40: #{fofe_nn_forward.1} parent=1 // pred_region
      _
    $region41: #{fofe_nn_forward.1} parent=1 // pred_fallthru
      _
    // Predicated region
    $region42: #{fofe_nn_forward.1} parent=1 // pred_check
      _
    $region43: #{fofe_nn_forward.1} parent=1 // pred_check_branch
      %48 = sbr.rel (0) target = $region45
    $region44: #{fofe_nn_forward.1} parent=1 // pred_region
      _
    $region45: #{fofe_nn_forward.1} parent=1 // pred_fallthru
      _
    // Predicated region
    $region46: #{fofe_nn_forward.1} parent=1 // pred_check
      _
    $region47: #{fofe_nn_forward.1} parent=1 // pred_check_branch
      %50 = sbr.rel (0) target = $region49
    $region48: #{fofe_nn_forward.1} parent=1 // pred_region
      _
    $region49: #{fofe_nn_forward.1} parent=1 // pred_fallthru
      _
    // Predicated region
    $region50: #{fofe_nn_forward.1} parent=1 // pred_check
      _
    $region51: #{fofe_nn_forward.1} parent=1 // pred_check_branch
      %52 = sbr.rel (0) target = $region53
    $region52: #{fofe_nn_forward.1} parent=1 // pred_region
      _
    $region53: #{fofe_nn_forward.1} parent=1 // pred_fallthru
      _
    // Predicated region
    $region54: #{fofe_nn_forward.1} parent=1 // pred_check
      _
    $region55: #{fofe_nn_forward.1} parent=1 // pred_check_branch
      %54 = sbr.rel (0) target = $region57
    $region56: #{fofe_nn_forward.1} parent=1 // pred_region
      _
    $region57: #{fofe_nn_forward.1} parent=1 // pred_fallthru
      _
    // Predicated region
    $region58: #{fofe_nn_forward.1} parent=1 // pred_check
      _
    $region59: #{fofe_nn_forward.1} parent=1 // pred_check_branch
      %56 = sbr.rel (0) target = $region61
    $region60: #{fofe_nn_forward.1} parent=1 // pred_region
      _
    $region61: #{fofe_nn_forward.1} parent=1 // pred_fallthru
      _
    // Predicated region
    $region62: #{fofe_nn_forward.1} parent=1 // pred_check
      _
    $region63: #{fofe_nn_forward.1} parent=1 // pred_check_branch
      %58 = sbr.rel (0) target = $region65
    $region64: #{fofe_nn_forward.1} parent=1 // pred_region
      _
    $region65: #{fofe_nn_forward.1} parent=1 // pred_fallthru
      _
    // Predicated region
    $region66: #{fofe_nn_forward.1} parent=1 // pred_check
      _
    $region67: #{fofe_nn_forward.1} parent=1 // pred_check_branch
      %60 = sbr.rel (0) target = $region69
    $region68: #{fofe_nn_forward.1} parent=1 // pred_region
      _
    $region69: #{fofe_nn_forward.1} parent=1 // pred_fallthru
      _
    // Predicated region
    $region70: #{fofe_nn_forward.1} parent=1 // pred_check
      _
    $region71: #{fofe_nn_forward.1} parent=1 // pred_check_branch
      %62 = sbr.rel (0) target = $region73
    $region72: #{fofe_nn_forward.1} parent=1 // pred_region
      _
    $region73: #{fofe_nn_forward.1} parent=1 // pred_fallthru
      _
    %v64 = vld [vmem:[%s0] sm:$0xf]
    %v65 = vld [vmem:[%s0 + $0x4] sm:$0xf]
    %v66 = vld [vmem:[%s1] sm:$0xff]
    %v67 = vld [vmem:[%s1 + $0x8] sm:$0xff]
    %v68 = vld [vmem:[%s1 + $0x10] sm:$0xff]
    %v69 = vld [vmem:[%s1 + $0x18] sm:$0xff]
    %v70 = vld [vmem:[%s1 + $0x20] sm:$0xf]
    %v71 = vld [vmem:[%s1 + $0x24] sm:$0xff]
    %v72 = vld [vmem:[%s1 + $0x2c] sm:$0xff]
    %v73 = vld [vmem:[%s1 + $0x34] sm:$0xff]
    %v74 = vld [vmem:[%s1 + $0x3c] sm:$0xff]
    %v75 = vld [vmem:[%s1 + $0x44] sm:$0xf]
    %v76 = vld [vmem:[%s1 + $0x48] sm:$0xff]
    %v77 = vld [vmem:[%s1 + $0x50] sm:$0xff]
    %v78 = vld [vmem:[%s1 + $0x58] sm:$0xff]
    %v79 = vld [vmem:[%s1 + $0x60] sm:$0xff]
    %v80 = vld [vmem:[%s1 + $0x68] sm:$0xf]
    %v81 = vld [vmem:[%s1 + $0x6c] sm:$0xff]
    %v82 = vld [vmem:[%s1 + $0x74] sm:$0xff]
    %v83 = vld [vmem:[%s1 + $0x7c] sm:$0xff]
    %v84 = vld [vmem:[%s1 + $0x84] sm:$0xff]
    %v85 = vld [vmem:[%s1 + $0x8c] sm:$0xf]
    %v86 = vld [vmem:[%s1 + $0x90] sm:$0xff]
    %v87 = vld [vmem:[%s1 + $0x98] sm:$0xff]
    %v88 = vld [vmem:[%s1 + $0xa0] sm:$0xff]
    %v89 = vld [vmem:[%s1 + $0xa8] sm:$0xff]
    %v90 = vld [vmem:[%s1 + $0xb0] sm:$0xf]
    %v91 = vld [vmem:[%s1 + $0xb4] sm:$0xff]
    %v92 = vld [vmem:[%s1 + $0xbc] sm:$0xff]
    %v93 = vld [vmem:[%s1 + $0xc4] sm:$0xff]
    %v94 = vld [vmem:[%s1 + $0xcc] sm:$0xff]
    %v95 = vld [vmem:[%s1 + $0xd4] sm:$0xf]
    %v96 = vld [vmem:[%s1 + $0xd8] sm:$0xff]
    %v97 = vld [vmem:[%s1 + $0xe0] sm:$0xff]
    %v98 = vld [vmem:[%s1 + $0xe8] sm:$0xff]
    %v99 = vld [vmem:[%s1 + $0xf0] sm:$0xff]
    %v100 = vld [vmem:[%s1 + $0xf8] sm:$0xf]
    %v101 = vld [vmem:[%s1 + $0xfc] sm:$0xff]
    %v102 = vld [vmem:[%s1 + $0x104] sm:$0xff]
    %v103 = vld [vmem:[%s1 + $0x10c] sm:$0xff]
    %v104 = vld [vmem:[%s1 + $0x114] sm:$0xff]
    %v105 = vld [vmem:[%s1 + $0x11c] sm:$0xf]
    %v106 = vld [vmem:[%s1 + $0x120] sm:$0xff]
    %v107 = vld [vmem:[%s1 + $0x128] sm:$0xff]
    %v108 = vld [vmem:[%s1 + $0x130] sm:$0xff]
    %v109 = vld [vmem:[%s1 + $0x138] sm:$0xff]
    %v110 = vld [vmem:[%s1 + $0x140] sm:$0xf]
    %v111 = vld [vmem:[%s1 + $0x144] sm:$0xff]
    %v112 = vld [vmem:[%s1 + $0x14c] sm:$0xff]
    %v113 = vld [vmem:[%s1 + $0x154] sm:$0xff]
    %v114 = vld [vmem:[%s1 + $0x15c] sm:$0xff]
    %v115 = vld [vmem:[%s1 + $0x164] sm:$0xf]
    %v116 = vld [vmem:[%s1 + $0x168] sm:$0xff]
    %v117 = vld [vmem:[%s1 + $0x170] sm:$0xff]
    %v118 = vld [vmem:[%s1 + $0x178] sm:$0xff]
    %v119 = vld [vmem:[%s1 + $0x180] sm:$0xff]
    %v120 = vld [vmem:[%s1 + $0x188] sm:$0xf]
    %v121 = vld [vmem:[%s1 + $0x18c] sm:$0xff]
    %v122 = vld [vmem:[%s1 + $0x194] sm:$0xff]
    %v123 = vld [vmem:[%s1 + $0x19c] sm:$0xff]
    %v124 = vld [vmem:[%s1 + $0x1a4] sm:$0xff]
    %v125 = vld [vmem:[%s1 + $0x1ac] sm:$0xf]
    %v126 = vld [vmem:[%s1 + $0x1b0] sm:$0xff]
    %v127 = vld [vmem:[%s1 + $0x1b8] sm:$0xff]
    %v128 = vld [vmem:[%s1 + $0x1c0] sm:$0xff]
    %v129 = vld [vmem:[%s1 + $0x1c8] sm:$0xff]
    %v130 = vld [vmem:[%s1 + $0x1d0] sm:$0xf]
    %v131 = vld [vmem:[%s1 + $0x1d4] sm:$0xff]
    %v132 = vld [vmem:[%s1 + $0x1dc] sm:$0xff]
    %v133 = vld [vmem:[%s1 + $0x1e4] sm:$0xff]
    %v134 = vld [vmem:[%s1 + $0x1ec] sm:$0xff]
    %v135 = vld [vmem:[%s1 + $0x1f4] sm:$0xf]
    %v136 = vld [vmem:[%s1 + $0x1f8] sm:$0xff]
    %v137 = vld [vmem:[%s1 + $0x200] sm:$0xff]
    %v138 = vld [vmem:[%s1 + $0x208] sm:$0xff]
    %v139 = vld [vmem:[%s1 + $0x210] sm:$0xff]
    %v140 = vld [vmem:[%s1 + $0x218] sm:$0xf]
    %v141 = vld [vmem:[%s1 + $0x21c] sm:$0xff]
    %v142 = vld [vmem:[%s1 + $0x224] sm:$0xff]
    %v143 = vld [vmem:[%s1 + $0x22c] sm:$0xff]
    %v144 = vld [vmem:[%s1 + $0x234] sm:$0xff]
    %v145 = vld [vmem:[%s1 + $0x23c] sm:$0xf]
    %v148 = vunpack.c.l.b16 %v64
    %v149 = vunpack.c.l.b16 %v65
    %v150 = vpack.c.b16 %v149, %v148
    %v232 = vunpack.c.l.b16 %v66
    %v233 = vunpack.c.h.b16 %v66
    %v234 = vunpack.c.l.b16 %v67
    %v235 = vunpack.c.h.b16 %v67
    %v236 = vunpack.c.l.b16 %v68
    %v237 = vunpack.c.h.b16 %v68
    %v238 = vunpack.c.l.b16 %v69
    %v239 = vunpack.c.h.b16 %v69
    %v240 = vunpack.c.l.b16 %v70
    %v241 = vunpack.c.l.b16 %v71
    %v242 = vunpack.c.h.b16 %v71
    %v243 = vunpack.c.l.b16 %v72
    %v244 = vunpack.c.h.b16 %v72
    %v245 = vunpack.c.l.b16 %v73
    %v246 = vunpack.c.h.b16 %v73
    %v247 = vunpack.c.l.b16 %v74
    %v248 = vunpack.c.h.b16 %v74
    %v249 = vunpack.c.l.b16 %v75
    %v250 = vunpack.c.l.b16 %v76
    %v251 = vunpack.c.h.b16 %v76
    %v252 = vunpack.c.l.b16 %v77
    %v253 = vunpack.c.h.b16 %v77
    %v254 = vunpack.c.l.b16 %v78
    %v255 = vunpack.c.h.b16 %v78
    %v256 = vunpack.c.l.b16 %v79
    %v257 = vunpack.c.h.b16 %v79
    %v258 = vunpack.c.l.b16 %v80
    %v259 = vunpack.c.l.b16 %v81
    %v260 = vunpack.c.h.b16 %v81
    %v261 = vunpack.c.l.b16 %v82
    %v262 = vunpack.c.h.b16 %v82
    %v263 = vunpack.c.l.b16 %v83
    %v264 = vunpack.c.h.b16 %v83
    %v265 = vunpack.c.l.b16 %v84
    %v266 = vunpack.c.h.b16 %v84
    %v267 = vunpack.c.l.b16 %v85
    %v268 = vunpack.c.l.b16 %v86
    %v269 = vunpack.c.h.b16 %v86
    %v270 = vunpack.c.l.b16 %v87
    %v271 = vunpack.c.h.b16 %v87
    %v272 = vunpack.c.l.b16 %v88
    %v273 = vunpack.c.h.b16 %v88
    %v274 = vunpack.c.l.b16 %v89
    %v275 = vunpack.c.h.b16 %v89
    %v276 = vunpack.c.l.b16 %v90
    %v277 = vunpack.c.l.b16 %v91
    %v278 = vunpack.c.h.b16 %v91
    %v279 = vunpack.c.l.b16 %v92
    %v280 = vunpack.c.h.b16 %v92
    %v281 = vunpack.c.l.b16 %v93
    %v282 = vunpack.c.h.b16 %v93
    %v283 = vunpack.c.l.b16 %v94
    %v284 = vunpack.c.h.b16 %v94
    %v285 = vunpack.c.l.b16 %v95
    %v286 = vunpack.c.l.b16 %v96
    %v287 = vunpack.c.h.b16 %v96
    %v288 = vunpack.c.l.b16 %v97
    %v289 = vunpack.c.h.b16 %v97
    %v290 = vunpack.c.l.b16 %v98
    %v291 = vunpack.c.h.b16 %v98
    %v292 = vunpack.c.l.b16 %v99
    %v293 = vunpack.c.h.b16 %v99
    %v294 = vunpack.c.l.b16 %v100
    %v295 = vunpack.c.l.b16 %v101
    %v296 = vunpack.c.h.b16 %v101
    %v297 = vunpack.c.l.b16 %v102
    %v298 = vunpack.c.h.b16 %v102
    %v299 = vunpack.c.l.b16 %v103
    %v300 = vunpack.c.h.b16 %v103
    %v301 = vunpack.c.l.b16 %v104
    %v302 = vunpack.c.h.b16 %v104
    %v303 = vunpack.c.l.b16 %v105
    %v304 = vunpack.c.l.b16 %v106
    %v305 = vunpack.c.h.b16 %v106
    %v306 = vunpack.c.l.b16 %v107
    %v307 = vunpack.c.h.b16 %v107
    %v308 = vunpack.c.l.b16 %v108
    %v309 = vunpack.c.h.b16 %v108
    %v310 = vunpack.c.l.b16 %v109
    %v311 = vunpack.c.h.b16 %v109
    %v312 = vunpack.c.l.b16 %v110
    %v313 = vunpack.c.l.b16 %v111
    %v314 = vunpack.c.h.b16 %v111
    %v315 = vunpack.c.l.b16 %v112
    %v316 = vunpack.c.h.b16 %v112
    %v317 = vunpack.c.l.b16 %v113
    %v318 = vunpack.c.h.b16 %v113
    %v319 = vunpack.c.l.b16 %v114
    %v320 = vunpack.c.h.b16 %v114
    %v321 = vunpack.c.l.b16 %v115
    %v322 = vunpack.c.l.b16 %v116
    %v323 = vunpack.c.h.b16 %v116
    %v324 = vunpack.c.l.b16 %v117
    %v325 = vunpack.c.h.b16 %v117
    %v326 = vunpack.c.l.b16 %v118
    %v327 = vunpack.c.h.b16 %v118
    %v328 = vunpack.c.l.b16 %v119
    %v329 = vunpack.c.h.b16 %v119
    %v330 = vunpack.c.l.b16 %v120
    %v331 = vunpack.c.l.b16 %v121
    %v332 = vunpack.c.h.b16 %v121
    %v333 = vunpack.c.l.b16 %v122
    %v334 = vunpack.c.h.b16 %v122
    %v335 = vunpack.c.l.b16 %v123
    %v336 = vunpack.c.h.b16 %v123
    %v337 = vunpack.c.l.b16 %v124
    %v338 = vunpack.c.h.b16 %v124
    %v339 = vunpack.c.l.b16 %v125
    %v340 = vunpack.c.l.b16 %v126
    %v341 = vunpack.c.h.b16 %v126
    %v342 = vunpack.c.l.b16 %v127
    %v343 = vunpack.c.h.b16 %v127
    %v344 = vunpack.c.l.b16 %v128
    %v345 = vunpack.c.h.b16 %v128
    %v346 = vunpack.c.l.b16 %v129
    %v347 = vunpack.c.h.b16 %v129
    %v348 = vunpack.c.l.b16 %v130
    %v349 = vunpack.c.l.b16 %v131
    %v350 = vunpack.c.h.b16 %v131
    %v351 = vunpack.c.l.b16 %v132
    %v352 = vunpack.c.h.b16 %v132
    %v353 = vunpack.c.l.b16 %v133
    %v354 = vunpack.c.h.b16 %v133
    %v355 = vunpack.c.l.b16 %v134
    %v356 = vunpack.c.h.b16 %v134
    %v357 = vunpack.c.l.b16 %v135
    %v358 = vunpack.c.l.b16 %v136
    %v359 = vunpack.c.h.b16 %v136
    %v360 = vunpack.c.l.b16 %v137
    %v361 = vunpack.c.h.b16 %v137
    %v362 = vunpack.c.l.b16 %v138
    %v363 = vunpack.c.h.b16 %v138
    %v364 = vunpack.c.l.b16 %v139
    %v365 = vunpack.c.h.b16 %v139
    %v366 = vunpack.c.l.b16 %v140
    %v367 = vunpack.c.l.b16 %v141
    %v368 = vunpack.c.h.b16 %v141
    %v369 = vunpack.c.l.b16 %v142
    %v370 = vunpack.c.h.b16 %v142
    %v371 = vunpack.c.l.b16 %v143
    %v372 = vunpack.c.h.b16 %v143
    %v373 = vunpack.c.l.b16 %v144
    %v374 = vunpack.c.h.b16 %v144
    %v375 = vunpack.c.l.b16 %v145
    %v376 = vpack.c.b16 %v241, %v232
    %v377 = vpack.c.b16 %v242, %v233
    %v378 = vpack.c.b16 %v243, %v234
    %v379 = vpack.c.b16 %v244, %v235
    %v380 = vpack.c.b16 %v245, %v236
    %v381 = vpack.c.b16 %v246, %v237
    %v382 = vpack.c.b16 %v247, %v238
    %v383 = vpack.c.b16 %v248, %v239
    %v384 = vpack.c.b16 %v249, %v240
    %v385 = vpack.c.b16 %v259, %v250
    %v386 = vpack.c.b16 %v260, %v251
    %v387 = vpack.c.b16 %v261, %v252
    %v388 = vpack.c.b16 %v262, %v253
    %v389 = vpack.c.b16 %v263, %v254
    %v390 = vpack.c.b16 %v264, %v255
    %v391 = vpack.c.b16 %v265, %v256
    %v392 = vpack.c.b16 %v266, %v257
    %v393 = vpack.c.b16 %v267, %v258
    %v394 = vpack.c.b16 %v277, %v268
    %v395 = vpack.c.b16 %v278, %v269
    %v396 = vpack.c.b16 %v279, %v270
    %v397 = vpack.c.b16 %v280, %v271
    %v398 = vpack.c.b16 %v281, %v272
    %v399 = vpack.c.b16 %v282, %v273
    %v400 = vpack.c.b16 %v283, %v274
    %v401 = vpack.c.b16 %v284, %v275
    %v402 = vpack.c.b16 %v285, %v276
    %v403 = vpack.c.b16 %v295, %v286
    %v404 = vpack.c.b16 %v296, %v287
    %v405 = vpack.c.b16 %v297, %v288
    %v406 = vpack.c.b16 %v298, %v289
    %v407 = vpack.c.b16 %v299, %v290
    %v408 = vpack.c.b16 %v300, %v291
    %v409 = vpack.c.b16 %v301, %v292
    %v410 = vpack.c.b16 %v302, %v293
    %v411 = vpack.c.b16 %v303, %v294
    %v412 = vpack.c.b16 %v313, %v304
    %v413 = vpack.c.b16 %v314, %v305
    %v414 = vpack.c.b16 %v315, %v306
    %v415 = vpack.c.b16 %v316, %v307
    %v416 = vpack.c.b16 %v317, %v308
    %v417 = vpack.c.b16 %v318, %v309
    %v418 = vpack.c.b16 %v319, %v310
    %v419 = vpack.c.b16 %v320, %v311
    %v420 = vpack.c.b16 %v321, %v312
    %v421 = vpack.c.b16 %v331, %v322
    %v422 = vpack.c.b16 %v332, %v323
    %v423 = vpack.c.b16 %v333, %v324
    %v424 = vpack.c.b16 %v334, %v325
    %v425 = vpack.c.b16 %v335, %v326
    %v426 = vpack.c.b16 %v336, %v327
    %v427 = vpack.c.b16 %v337, %v328
    %v428 = vpack.c.b16 %v338, %v329
    %v429 = vpack.c.b16 %v339, %v330
    %v430 = vpack.c.b16 %v349, %v340
    %v431 = vpack.c.b16 %v350, %v341
    %v432 = vpack.c.b16 %v351, %v342
    %v433 = vpack.c.b16 %v352, %v343
    %v434 = vpack.c.b16 %v353, %v344
    %v435 = vpack.c.b16 %v354, %v345
    %v436 = vpack.c.b16 %v355, %v346
    %v437 = vpack.c.b16 %v356, %v347
    %v438 = vpack.c.b16 %v357, %v348
    %v439 = vpack.c.b16 %v367, %v358
    %v440 = vpack.c.b16 %v368, %v359
    %v441 = vpack.c.b16 %v369, %v360
    %v442 = vpack.c.b16 %v370, %v361
    %v443 = vpack.c.b16 %v371, %v362
    %v444 = vpack.c.b16 %v372, %v363
    %v445 = vpack.c.b16 %v373, %v364
    %v446 = vpack.c.b16 %v374, %v365
    %v447 = vpack.c.b16 %v375, %v366
    %520 = vmatpush.bf16.msra.mxu0 %v439
    %521 = vmatpush.bf16.msra.mxu0 %v430
    %522 = vmatpush.bf16.msra.mxu0 %v421
    %523 = vmatpush.bf16.msra.mxu0 %v412
    %524 = vmatpush.bf16.msra.mxu0 %v403
    %525 = vmatpush.bf16.msra.mxu0 %v394
    %526 = vmatpush.bf16.msra.mxu0 %v385
    %527 = vmatpush.bf16.msra.mxu0 %v376
    %528 = vmatmul.bf16.gmra.mxu0 %v150
    %v529 = vpop.f32.mrf.mxu0
    %v530 = vadd.f32 0.0, %v529
    %v531 = vpop.f32.mrf.mxu0
    %v532 = vadd.f32 0.0, %v531
    %533 = vdwg.mxu0
    %534 = vmatpush.bf16.msra.mxu0 %v440
    %535 = vmatpush.bf16.msra.mxu0 %v431
    %536 = vmatpush.bf16.msra.mxu0 %v422
    %537 = vmatpush.bf16.msra.mxu0 %v413
    %538 = vmatpush.bf16.msra.mxu0 %v404
    %539 = vmatpush.bf16.msra.mxu0 %v395
    %540 = vmatpush.bf16.msra.mxu0 %v386
    %541 = vmatpush.bf16.msra.mxu0 %v377
    %542 = vmatmul.bf16.gmra.mxu0 %v150
    %v543 = vpop.f32.mrf.mxu0
    %v544 = vadd.f32 0.0, %v543
    %v545 = vpop.f32.mrf.mxu0
    %v546 = vadd.f32 0.0, %v545
    %547 = vdwg.mxu0
    %548 = vmatpush.bf16.msra.mxu0 %v441
    %549 = vmatpush.bf16.msra.mxu0 %v432
    %550 = vmatpush.bf16.msra.mxu0 %v423
    %551 = vmatpush.bf16.msra.mxu0 %v414
    %552 = vmatpush.bf16.msra.mxu0 %v405
    %553 = vmatpush.bf16.msra.mxu0 %v396
    %554 = vmatpush.bf16.msra.mxu0 %v387
    %555 = vmatpush.bf16.msra.mxu0 %v378
    %556 = vmatmul.bf16.gmra.mxu0 %v150
    %v557 = vpop.f32.mrf.mxu0
    %v558 = vadd.f32 0.0, %v557
    %v559 = vpop.f32.mrf.mxu0
    %v560 = vadd.f32 0.0, %v559
    %561 = vdwg.mxu0
    %562 = vmatpush.bf16.msra.mxu0 %v442
    %563 = vmatpush.bf16.msra.mxu0 %v433
    %564 = vmatpush.bf16.msra.mxu0 %v424
    %565 = vmatpush.bf16.msra.mxu0 %v415
    %566 = vmatpush.bf16.msra.mxu0 %v406
    %567 = vmatpush.bf16.msra.mxu0 %v397
    %568 = vmatpush.bf16.msra.mxu0 %v388
    %569 = vmatpush.bf16.msra.mxu0 %v379
    %570 = vmatmul.bf16.gmra.mxu0 %v150
    %v571 = vpop.f32.mrf.mxu0
    %v572 = vadd.f32 0.0, %v571
    %v573 = vpop.f32.mrf.mxu0
    %v574 = vadd.f32 0.0, %v573
    %575 = vdwg.mxu0
    %576 = vmatpush.bf16.msra.mxu0 %v443
    %577 = vmatpush.bf16.msra.mxu0 %v434
    %578 = vmatpush.bf16.msra.mxu0 %v425
    %579 = vmatpush.bf16.msra.mxu0 %v416
    %580 = vmatpush.bf16.msra.mxu0 %v407
    %581 = vmatpush.bf16.msra.mxu0 %v398
    %582 = vmatpush.bf16.msra.mxu0 %v389
    %583 = vmatpush.bf16.msra.mxu0 %v380
    %584 = vmatmul.bf16.gmra.mxu0 %v150
    %v585 = vpop.f32.mrf.mxu0
    %v586 = vadd.f32 0.0, %v585
    %v587 = vpop.f32.mrf.mxu0
    %v588 = vadd.f32 0.0, %v587
    %589 = vdwg.mxu0
    %590 = vmatpush.bf16.msra.mxu0 %v444
    %591 = vmatpush.bf16.msra.mxu0 %v435
    %592 = vmatpush.bf16.msra.mxu0 %v426
    %593 = vmatpush.bf16.msra.mxu0 %v417
    %594 = vmatpush.bf16.msra.mxu0 %v408
    %595 = vmatpush.bf16.msra.mxu0 %v399
    %596 = vmatpush.bf16.msra.mxu0 %v390
    %597 = vmatpush.bf16.msra.mxu0 %v381
    %598 = vmatmul.bf16.gmra.mxu0 %v150
    %v599 = vpop.f32.mrf.mxu0
    %v600 = vadd.f32 0.0, %v599
    %v601 = vpop.f32.mrf.mxu0
    %v602 = vadd.f32 0.0, %v601
    %603 = vdwg.mxu0
    %604 = vmatpush.bf16.msra.mxu0 %v445
    %605 = vmatpush.bf16.msra.mxu0 %v436
    %606 = vmatpush.bf16.msra.mxu0 %v427
    %607 = vmatpush.bf16.msra.mxu0 %v418
    %608 = vmatpush.bf16.msra.mxu0 %v409
    %609 = vmatpush.bf16.msra.mxu0 %v400
    %610 = vmatpush.bf16.msra.mxu0 %v391
    %611 = vmatpush.bf16.msra.mxu0 %v382
    %612 = vmatmul.bf16.gmra.mxu0 %v150
    %v613 = vpop.f32.mrf.mxu0
    %v614 = vadd.f32 0.0, %v613
    %v615 = vpop.f32.mrf.mxu0
    %v616 = vadd.f32 0.0, %v615
    %617 = vdwg.mxu0
    %618 = vmatpush.bf16.msra.mxu0 %v446
    %619 = vmatpush.bf16.msra.mxu0 %v437
    %620 = vmatpush.bf16.msra.mxu0 %v428
    %621 = vmatpush.bf16.msra.mxu0 %v419
    %622 = vmatpush.bf16.msra.mxu0 %v410
    %623 = vmatpush.bf16.msra.mxu0 %v401
    %624 = vmatpush.bf16.msra.mxu0 %v392
    %625 = vmatpush.bf16.msra.mxu0 %v383
    %626 = vmatmul.bf16.gmra.mxu0 %v150
    %v627 = vpop.f32.mrf.mxu0
    %v628 = vadd.f32 0.0, %v627
    %v629 = vpop.f32.mrf.mxu0
    %v630 = vadd.f32 0.0, %v629
    %631 = vdwg.mxu0
    %632 = vmatpush.bf16.msra.mxu0 %v447
    %633 = vmatpush.bf16.msra.mxu0 %v438
    %634 = vmatpush.bf16.msra.mxu0 %v429
    %635 = vmatpush.bf16.msra.mxu0 %v420
    %636 = vmatpush.bf16.msra.mxu0 %v411
    %637 = vmatpush.bf16.msra.mxu0 %v402
    %638 = vmatpush.bf16.msra.mxu0 %v393
    %639 = vmatpush.bf16.msra.mxu0 %v384
    %640 = vmatmul.bf16.gmra.mxu0 %v150
    %v641 = vpop.f32.mrf.mxu0
    %v642 = vadd.f32 0.0, %v641
    %v643 = vpop.f32.mrf.mxu0
    %v644 = vadd.f32 0.0, %v643
    %645 = vdwg.mxu0
    %v646 = vld [vmem:[%s2] sm:$0xf]
    %v647 = vld [vmem:[%s2 + $0x4] sm:$0xf]
    %v648 = vpack.c.bf16 %v532, %v530
    %s649 = scalar_lea.vmem %s2, 8
    %v650 = vld [vmem:[%s649] sm:$0xf]
    %v651 = vld [vmem:[%s649 + $0x4] sm:$0xf]
    %v652 = vpack.c.bf16 %v546, %v544
    %v655 = vunpack.c.l.b16 %v650
    %v656 = vunpack.c.l.b16 %v651
    %v657 = vpack.c.b16 %v656, %v655
    %vm658 = vcmask 130048
    %v660 = vsel %vm658, %v657, 0
    %662 = vmatpush.bf16.msra.mxu0 0
    %663 = vmatpush.bf16.msra.mxu0 0
    %664 = vmatpush.bf16.msra.mxu0 0
    %665 = vmatpush.bf16.msra.mxu0 0
    %666 = vmatpush.bf16.msra.mxu0 0
    %667 = vmatpush.bf16.msra.mxu0 0
    %668 = vmatpush.bf16.msra.mxu0 0
    %669 = vmatpush.bf16.msra.mxu0 %v652
    %670 = vmatmul.bf16.gmra.mxu0 %v660
    %v671 = vpop.f32.mrf.mxu0
    %v672 = vadd.f32 0.0, %v671
    %v673 = vpop.f32.mrf.mxu0
    %v674 = vadd.f32 0.0, %v673
    %675 = vdwg.mxu0
    %v678 = vunpack.c.l.b16 %v646
    %v679 = vunpack.c.l.b16 %v647
    %v680 = vpack.c.b16 %v679, %v678
    %v682 = vsel %vm658, %v680, 0
    %684 = vmatpush.bf16.msra.mxu0 0
    %685 = vmatpush.bf16.msra.mxu0 0
    %686 = vmatpush.bf16.msra.mxu0 0
    %687 = vmatpush.bf16.msra.mxu0 0
    %688 = vmatpush.bf16.msra.mxu0 0
    %689 = vmatpush.bf16.msra.mxu0 0
    %690 = vmatpush.bf16.msra.mxu0 0
    %691 = vmatpush.bf16.msra.mxu0 %v648
    %692 = vmatmul.bf16.gmra.mxu0 %v682
    %v693 = vpop.f32.mrf.mxu0
    %v694 = vadd.f32 %v672, %v693
    %v695 = vpop.f32.mrf.mxu0
    %v696 = vadd.f32 %v674, %v695
    %697 = vdwg.mxu0
    %s698 = scalar_lea.vmem %s2, 16
    %v699 = vld [vmem:[%s698] sm:$0xf]
    %v700 = vld [vmem:[%s698 + $0x4] sm:$0xf]
    %v701 = vpack.c.bf16 %v560, %v558
    %v704 = vunpack.c.l.b16 %v699
    %v705 = vunpack.c.l.b16 %v700
    %v706 = vpack.c.b16 %v705, %v704
    %v708 = vsel %vm658, %v706, 0
    %710 = vmatpush.bf16.msra.mxu0 0
    %711 = vmatpush.bf16.msra.mxu0 0
    %712 = vmatpush.bf16.msra.mxu0 0
    %713 = vmatpush.bf16.msra.mxu0 0
    %714 = vmatpush.bf16.msra.mxu0 0
    %715 = vmatpush.bf16.msra.mxu0 0
    %716 = vmatpush.bf16.msra.mxu0 0
    %717 = vmatpush.bf16.msra.mxu0 %v701
    %718 = vmatmul.bf16.gmra.mxu0 %v708
    %v719 = vpop.f32.mrf.mxu0
    %v720 = vadd.f32 0.0, %v719
    %v721 = vpop.f32.mrf.mxu0
    %v722 = vadd.f32 0.0, %v721
    %723 = vdwg.mxu0
    %v724 = vadd.f32 %v694, %v720
    %v725 = vadd.f32 %v696, %v722
    %vm726 = vcmp.ge.f32.partialorder %v724, 0.0
    %vm727 = vcmp.ge.f32.partialorder %v725, 0.0
    %v728 = vmul.f32 %v724, 0.1
    %v729 = vmul.f32 %v725, 0.1
    %v730 = vsel %vm726, %v724, %v728
    %v731 = vsel %vm727, %v725, %v729
    %v732 = vpack.c.bf16 %v730, %v730
    %v733 = vpack.c.bf16 %v731, %v731
    %734 = vst [vmem:[#allocation2] sm:$0xf] %v732
    %735 = vst [vmem:[#allocation2 + $0x18] sm:$0xf] %v733
    %s736 = scalar_lea.vmem %s2, 24
    %v737 = vld [vmem:[%s736] sm:$0xf]
    %v738 = vld [vmem:[%s736 + $0x4] sm:$0xf]
    %v739 = vpack.c.bf16 %v574, %v572
    %s740 = scalar_lea.vmem %s2, 32
    %v741 = vld [vmem:[%s740] sm:$0xf]
    %v742 = vld [vmem:[%s740 + $0x4] sm:$0xf]
    %v743 = vpack.c.bf16 %v588, %v586
    %v746 = vunpack.c.l.b16 %v741
    %v747 = vunpack.c.l.b16 %v742
    %v748 = vpack.c.b16 %v747, %v746
    %v750 = vsel %vm658, %v748, 0
    %752 = vmatpush.bf16.msra.mxu0 0
    %753 = vmatpush.bf16.msra.mxu0 0
    %754 = vmatpush.bf16.msra.mxu0 0
    %755 = vmatpush.bf16.msra.mxu0 0
    %756 = vmatpush.bf16.msra.mxu0 0
    %757 = vmatpush.bf16.msra.mxu0 0
    %758 = vmatpush.bf16.msra.mxu0 0
    %759 = vmatpush.bf16.msra.mxu0 %v743
    %760 = vmatmul.bf16.gmra.mxu0 %v750
    %v761 = vpop.f32.mrf.mxu0
    %v762 = vadd.f32 0.0, %v761
    %v763 = vpop.f32.mrf.mxu0
    %v764 = vadd.f32 0.0, %v763
    %765 = vdwg.mxu0
    %v768 = vunpack.c.l.b16 %v737
    %v769 = vunpack.c.l.b16 %v738
    %v770 = vpack.c.b16 %v769, %v768
    %v772 = vsel %vm658, %v770, 0
    %774 = vmatpush.bf16.msra.mxu0 0
    %775 = vmatpush.bf16.msra.mxu0 0
    %776 = vmatpush.bf16.msra.mxu0 0
    %777 = vmatpush.bf16.msra.mxu0 0
    %778 = vmatpush.bf16.msra.mxu0 0
    %779 = vmatpush.bf16.msra.mxu0 0
    %780 = vmatpush.bf16.msra.mxu0 0
    %781 = vmatpush.bf16.msra.mxu0 %v739
    %782 = vmatmul.bf16.gmra.mxu0 %v772
    %v783 = vpop.f32.mrf.mxu0
    %v784 = vadd.f32 %v762, %v783
    %v785 = vpop.f32.mrf.mxu0
    %v786 = vadd.f32 %v764, %v785
    %787 = vdwg.mxu0
    %s788 = scalar_lea.vmem %s2, 40
    %v789 = vld [vmem:[%s788] sm:$0xf]
    %v790 = vld [vmem:[%s788 + $0x4] sm:$0xf]
    %v791 = vpack.c.bf16 %v602, %v600
    %v794 = vunpack.c.l.b16 %v789
    %v795 = vunpack.c.l.b16 %v790
    %v796 = vpack.c.b16 %v795, %v794
    %v798 = vsel %vm658, %v796, 0
    %800 = vmatpush.bf16.msra.mxu0 0
    %801 = vmatpush.bf16.msra.mxu0 0
    %802 = vmatpush.bf16.msra.mxu0 0
    %803 = vmatpush.bf16.msra.mxu0 0
    %804 = vmatpush.bf16.msra.mxu0 0
    %805 = vmatpush.bf16.msra.mxu0 0
    %806 = vmatpush.bf16.msra.mxu0 0
    %807 = vmatpush.bf16.msra.mxu0 %v791
    %808 = vmatmul.bf16.gmra.mxu0 %v798
    %v809 = vpop.f32.mrf.mxu0
    %v810 = vadd.f32 0.0, %v809
    %v811 = vpop.f32.mrf.mxu0
    %v812 = vadd.f32 0.0, %v811
    %813 = vdwg.mxu0
    %v814 = vadd.f32 %v784, %v810
    %v815 = vadd.f32 %v786, %v812
    %vm816 = vcmp.ge.f32.partialorder %v814, 0.0
    %vm817 = vcmp.ge.f32.partialorder %v815, 0.0
    %v818 = vmul.f32 %v814, 0.1
    %v819 = vmul.f32 %v815, 0.1
    %v820 = vsel %vm816, %v814, %v818
    %v821 = vsel %vm817, %v815, %v819
    %v822 = vpack.c.bf16 %v820, %v820
    %v823 = vpack.c.bf16 %v821, %v821
    %824 = vst [vmem:[#allocation2 + $0x8] sm:$0xf] %v822
    %825 = vst [vmem:[#allocation2 + $0x20] sm:$0xf] %v823
    %s826 = scalar_lea.vmem %s2, 48
    %v827 = vld [vmem:[%s826] sm:$0xf]
    %v828 = vld [vmem:[%s826 + $0x4] sm:$0xf]
    %v829 = vpack.c.bf16 %v616, %v614
    %s830 = scalar_lea.vmem %s2, 56
    %v831 = vld [vmem:[%s830] sm:$0xf]
    %v832 = vld [vmem:[%s830 + $0x4] sm:$0xf]
    %v833 = vpack.c.bf16 %v630, %v628
    %v836 = vunpack.c.l.b16 %v831
    %v837 = vunpack.c.l.b16 %v832
    %v838 = vpack.c.b16 %v837, %v836
    %v840 = vsel %vm658, %v838, 0
    %842 = vmatpush.bf16.msra.mxu0 0
    %843 = vmatpush.bf16.msra.mxu0 0
    %844 = vmatpush.bf16.msra.mxu0 0
    %845 = vmatpush.bf16.msra.mxu0 0
    %846 = vmatpush.bf16.msra.mxu0 0
    %847 = vmatpush.bf16.msra.mxu0 0
    %848 = vmatpush.bf16.msra.mxu0 0
    %849 = vmatpush.bf16.msra.mxu0 %v833
    %850 = vmatmul.bf16.gmra.mxu0 %v840
    %v851 = vpop.f32.mrf.mxu0
    %v852 = vadd.f32 0.0, %v851
    %v853 = vpop.f32.mrf.mxu0
    %v854 = vadd.f32 0.0, %v853
    %855 = vdwg.mxu0
    %v858 = vunpack.c.l.b16 %v827
    %v859 = vunpack.c.l.b16 %v828
    %v860 = vpack.c.b16 %v859, %v858
    %v862 = vsel %vm658, %v860, 0
    %864 = vmatpush.bf16.msra.mxu0 0
    %865 = vmatpush.bf16.msra.mxu0 0
    %866 = vmatpush.bf16.msra.mxu0 0
    %867 = vmatpush.bf16.msra.mxu0 0
    %868 = vmatpush.bf16.msra.mxu0 0
    %869 = vmatpush.bf16.msra.mxu0 0
    %870 = vmatpush.bf16.msra.mxu0 0
    %871 = vmatpush.bf16.msra.mxu0 %v829
    %872 = vmatmul.bf16.gmra.mxu0 %v862
    %v873 = vpop.f32.mrf.mxu0
    %v874 = vadd.f32 %v852, %v873
    %v875 = vpop.f32.mrf.mxu0
    %v876 = vadd.f32 %v854, %v875
    %877 = vdwg.mxu0
    %s878 = scalar_lea.vmem %s2, 64
    %v879 = vld [vmem:[%s878] sm:$0xf]
    %v880 = vld [vmem:[%s878 + $0x4] sm:$0xf]
    %v881 = vpack.c.bf16 %v644, %v642
    %v884 = vunpack.c.l.b16 %v879
    %v885 = vunpack.c.l.b16 %v880
    %v886 = vpack.c.b16 %v885, %v884
    %v888 = vsel %vm658, %v886, 0
    %890 = vmatpush.bf16.msra.mxu0 0
    %891 = vmatpush.bf16.msra.mxu0 0
    %892 = vmatpush.bf16.msra.mxu0 0
    %893 = vmatpush.bf16.msra.mxu0 0
    %894 = vmatpush.bf16.msra.mxu0 0
    %895 = vmatpush.bf16.msra.mxu0 0
    %896 = vmatpush.bf16.msra.mxu0 0
    %897 = vmatpush.bf16.msra.mxu0 %v881
    %898 = vmatmul.bf16.gmra.mxu0 %v888
    %v899 = vpop.f32.mrf.mxu0
    %v900 = vadd.f32 0.0, %v899
    %v901 = vpop.f32.mrf.mxu0
    %v902 = vadd.f32 0.0, %v901
    %903 = vdwg.mxu0
    %v904 = vadd.f32 %v874, %v900
    %v905 = vadd.f32 %v876, %v902
    %vm906 = vcmp.ge.f32.partialorder %v904, 0.0
    %vm907 = vcmp.ge.f32.partialorder %v905, 0.0
    %v908 = vmul.f32 %v904, 0.1
    %v909 = vmul.f32 %v905, 0.1
    %v910 = vsel %vm906, %v904, %v908
    %v911 = vsel %vm907, %v905, %v909
    %v912 = vpack.c.bf16 %v910, %v910
    %v913 = vpack.c.bf16 %v911, %v911
    %914 = vst [vmem:[#allocation2 + $0x10] sm:$0xf] %v912
    %915 = vst [vmem:[#allocation2 + $0x28] sm:$0xf] %v913
    %s916 = scalar_lea.vmem %s0, 8
    %v917 = vld [vmem:[%s916] sm:$0xf]
    %v918 = vld [vmem:[%s916 + $0x4] sm:$0xf]
    %v919 = vld [vmem:[%s1] sm:$0xff]
    %v920 = vld [vmem:[%s1 + $0x8] sm:$0xff]
    %v921 = vld [vmem:[%s1 + $0x10] sm:$0xff]
    %v922 = vld [vmem:[%s1 + $0x18] sm:$0xff]
    %v923 = vld [vmem:[%s1 + $0x20] sm:$0xf]
    %v924 = vld [vmem:[%s1 + $0x24] sm:$0xff]
    %v925 = vld [vmem:[%s1 + $0x2c] sm:$0xff]
    %v926 = vld [vmem:[%s1 + $0x34] sm:$0xff]
    %v927 = vld [vmem:[%s1 + $0x3c] sm:$0xff]
    %v928 = vld [vmem:[%s1 + $0x44] sm:$0xf]
    %v929 = vld [vmem:[%s1 + $0x48] sm:$0xff]
    %v930 = vld [vmem:[%s1 + $0x50] sm:$0xff]
    %v931 = vld [vmem:[%s1 + $0x58] sm:$0xff]
    %v932 = vld [vmem:[%s1 + $0x60] sm:$0xff]
    %v933 = vld [vmem:[%s1 + $0x68] sm:$0xf]
    %v934 = vld [vmem:[%s1 + $0x6c] sm:$0xff]
    %v935 = vld [vmem:[%s1 + $0x74] sm:$0xff]
    %v936 = vld [vmem:[%s1 + $0x7c] sm:$0xff]
    %v937 = vld [vmem:[%s1 + $0x84] sm:$0xff]
    %v938 = vld [vmem:[%s1 + $0x8c] sm:$0xf]
    %v939 = vld [vmem:[%s1 + $0x90] sm:$0xff]
    %v940 = vld [vmem:[%s1 + $0x98] sm:$0xff]
    %v941 = vld [vmem:[%s1 + $0xa0] sm:$0xff]
    %v942 = vld [vmem:[%s1 + $0xa8] sm:$0xff]
    %v943 = vld [vmem:[%s1 + $0xb0] sm:$0xf]
    %v944 = vld [vmem:[%s1 + $0xb4] sm:$0xff]
    %v945 = vld [vmem:[%s1 + $0xbc] sm:$0xff]
    %v946 = vld [vmem:[%s1 + $0xc4] sm:$0xff]
    %v947 = vld [vmem:[%s1 + $0xcc] sm:$0xff]
    %v948 = vld [vmem:[%s1 + $0xd4] sm:$0xf]
    %v949 = vld [vmem:[%s1 + $0xd8] sm:$0xff]
    %v950 = vld [vmem:[%s1 + $0xe0] sm:$0xff]
    %v951 = vld [vmem:[%s1 + $0xe8] sm:$0xff]
    %v952 = vld [vmem:[%s1 + $0xf0] sm:$0xff]
    %v953 = vld [vmem:[%s1 + $0xf8] sm:$0xf]
    %v954 = vld [vmem:[%s1 + $0xfc] sm:$0xff]
    %v955 = vld [vmem:[%s1 + $0x104] sm:$0xff]
    %v956 = vld [vmem:[%s1 + $0x10c] sm:$0xff]
    %v957 = vld [vmem:[%s1 + $0x114] sm:$0xff]
    %v958 = vld [vmem:[%s1 + $0x11c] sm:$0xf]
    %v959 = vld [vmem:[%s1 + $0x120] sm:$0xff]
    %v960 = vld [vmem:[%s1 + $0x128] sm:$0xff]
    %v961 = vld [vmem:[%s1 + $0x130] sm:$0xff]
    %v962 = vld [vmem:[%s1 + $0x138] sm:$0xff]
    %v963 = vld [vmem:[%s1 + $0x140] sm:$0xf]
    %v964 = vld [vmem:[%s1 + $0x144] sm:$0xff]
    %v965 = vld [vmem:[%s1 + $0x14c] sm:$0xff]
    %v966 = vld [vmem:[%s1 + $0x154] sm:$0xff]
    %v967 = vld [vmem:[%s1 + $0x15c] sm:$0xff]
    %v968 = vld [vmem:[%s1 + $0x164] sm:$0xf]
    %v969 = vld [vmem:[%s1 + $0x168] sm:$0xff]
    %v970 = vld [vmem:[%s1 + $0x170] sm:$0xff]
    %v971 = vld [vmem:[%s1 + $0x178] sm:$0xff]
    %v972 = vld [vmem:[%s1 + $0x180] sm:$0xff]
    %v973 = vld [vmem:[%s1 + $0x188] sm:$0xf]
    %v974 = vld [vmem:[%s1 + $0x18c] sm:$0xff]
    %v975 = vld [vmem:[%s1 + $0x194] sm:$0xff]
    %v976 = vld [vmem:[%s1 + $0x19c] sm:$0xff]
    %v977 = vld [vmem:[%s1 + $0x1a4] sm:$0xff]
    %v978 = vld [vmem:[%s1 + $0x1ac] sm:$0xf]
    %v979 = vld [vmem:[%s1 + $0x1b0] sm:$0xff]
    %v980 = vld [vmem:[%s1 + $0x1b8] sm:$0xff]
    %v981 = vld [vmem:[%s1 + $0x1c0] sm:$0xff]
    %v982 = vld [vmem:[%s1 + $0x1c8] sm:$0xff]
    %v983 = vld [vmem:[%s1 + $0x1d0] sm:$0xf]
    %v984 = vld [vmem:[%s1 + $0x1d4] sm:$0xff]
    %v985 = vld [vmem:[%s1 + $0x1dc] sm:$0xff]
    %v986 = vld [vmem:[%s1 + $0x1e4] sm:$0xff]
    %v987 = vld [vmem:[%s1 + $0x1ec] sm:$0xff]
    %v988 = vld [vmem:[%s1 + $0x1f4] sm:$0xf]
    %v989 = vld [vmem:[%s1 + $0x1f8] sm:$0xff]
    %v990 = vld [vmem:[%s1 + $0x200] sm:$0xff]
    %v991 = vld [vmem:[%s1 + $0x208] sm:$0xff]
    %v992 = vld [vmem:[%s1 + $0x210] sm:$0xff]
    %v993 = vld [vmem:[%s1 + $0x218] sm:$0xf]
    %v994 = vld [vmem:[%s1 + $0x21c] sm:$0xff]
    %v995 = vld [vmem:[%s1 + $0x224] sm:$0xff]
    %v996 = vld [vmem:[%s1 + $0x22c] sm:$0xff]
    %v997 = vld [vmem:[%s1 + $0x234] sm:$0xff]
    %v998 = vld [vmem:[%s1 + $0x23c] sm:$0xf]
    %v1001 = vunpack.c.l.b16 %v917
    %v1002 = vunpack.c.l.b16 %v918
    %v1003 = vpack.c.b16 %v1002, %v1001
    %v1085 = vunpack.c.l.b16 %v919
    %v1086 = vunpack.c.h.b16 %v919
    %v1087 = vunpack.c.l.b16 %v920
    %v1088 = vunpack.c.h.b16 %v920
    %v1089 = vunpack.c.l.b16 %v921
    %v1090 = vunpack.c.h.b16 %v921
    %v1091 = vunpack.c.l.b16 %v922
    %v1092 = vunpack.c.h.b16 %v922
    %v1093 = vunpack.c.l.b16 %v923
    %v1094 = vunpack.c.l.b16 %v924
    %v1095 = vunpack.c.h.b16 %v924
    %v1096 = vunpack.c.l.b16 %v925
    %v1097 = vunpack.c.h.b16 %v925
    %v1098 = vunpack.c.l.b16 %v926
    %v1099 = vunpack.c.h.b16 %v926
    %v1100 = vunpack.c.l.b16 %v927
    %v1101 = vunpack.c.h.b16 %v927
    %v1102 = vunpack.c.l.b16 %v928
    %v1103 = vunpack.c.l.b16 %v929
    %v1104 = vunpack.c.h.b16 %v929
    %v1105 = vunpack.c.l.b16 %v930
    %v1106 = vunpack.c.h.b16 %v930
    %v1107 = vunpack.c.l.b16 %v931
    %v1108 = vunpack.c.h.b16 %v931
    %v1109 = vunpack.c.l.b16 %v932
    %v1110 = vunpack.c.h.b16 %v932
    %v1111 = vunpack.c.l.b16 %v933
    %v1112 = vunpack.c.l.b16 %v934
    %v1113 = vunpack.c.h.b16 %v934
    %v1114 = vunpack.c.l.b16 %v935
    %v1115 = vunpack.c.h.b16 %v935
    %v1116 = vunpack.c.l.b16 %v936
    %v1117 = vunpack.c.h.b16 %v936
    %v1118 = vunpack.c.l.b16 %v937
    %v1119 = vunpack.c.h.b16 %v937
    %v1120 = vunpack.c.l.b16 %v938
    %v1121 = vunpack.c.l.b16 %v939
    %v1122 = vunpack.c.h.b16 %v939
    %v1123 = vunpack.c.l.b16 %v940
    %v1124 = vunpack.c.h.b16 %v940
    %v1125 = vunpack.c.l.b16 %v941
    %v1126 = vunpack.c.h.b16 %v941
    %v1127 = vunpack.c.l.b16 %v942
    %v1128 = vunpack.c.h.b16 %v942
    %v1129 = vunpack.c.l.b16 %v943
    %v1130 = vunpack.c.l.b16 %v944
    %v1131 = vunpack.c.h.b16 %v944
    %v1132 = vunpack.c.l.b16 %v945
    %v1133 = vunpack.c.h.b16 %v945
    %v1134 = vunpack.c.l.b16 %v946
    %v1135 = vunpack.c.h.b16 %v946
    %v1136 = vunpack.c.l.b16 %v947
    %v1137 = vunpack.c.h.b16 %v947
    %v1138 = vunpack.c.l.b16 %v948
    %v1139 = vunpack.c.l.b16 %v949
    %v1140 = vunpack.c.h.b16 %v949
    %v1141 = vunpack.c.l.b16 %v950
    %v1142 = vunpack.c.h.b16 %v950
    %v1143 = vunpack.c.l.b16 %v951
    %v1144 = vunpack.c.h.b16 %v951
    %v1145 = vunpack.c.l.b16 %v952
    %v1146 = vunpack.c.h.b16 %v952
    %v1147 = vunpack.c.l.b16 %v953
    %v1148 = vunpack.c.l.b16 %v954
    %v1149 = vunpack.c.h.b16 %v954
    %v1150 = vunpack.c.l.b16 %v955
    %v1151 = vunpack.c.h.b16 %v955
    %v1152 = vunpack.c.l.b16 %v956
    %v1153 = vunpack.c.h.b16 %v956
    %v1154 = vunpack.c.l.b16 %v957
    %v1155 = vunpack.c.h.b16 %v957
    %v1156 = vunpack.c.l.b16 %v958
    %v1157 = vunpack.c.l.b16 %v959
    %v1158 = vunpack.c.h.b16 %v959
    %v1159 = vunpack.c.l.b16 %v960
    %v1160 = vunpack.c.h.b16 %v960
    %v1161 = vunpack.c.l.b16 %v961
    %v1162 = vunpack.c.h.b16 %v961
    %v1163 = vunpack.c.l.b16 %v962
    %v1164 = vunpack.c.h.b16 %v962
    %v1165 = vunpack.c.l.b16 %v963
    %v1166 = vunpack.c.l.b16 %v964
    %v1167 = vunpack.c.h.b16 %v964
    %v1168 = vunpack.c.l.b16 %v965
    %v1169 = vunpack.c.h.b16 %v965
    %v1170 = vunpack.c.l.b16 %v966
    %v1171 = vunpack.c.h.b16 %v966
    %v1172 = vunpack.c.l.b16 %v967
    %v1173 = vunpack.c.h.b16 %v967
    %v1174 = vunpack.c.l.b16 %v968
    %v1175 = vunpack.c.l.b16 %v969
    %v1176 = vunpack.c.h.b16 %v969
    %v1177 = vunpack.c.l.b16 %v970
    %v1178 = vunpack.c.h.b16 %v970
    %v1179 = vunpack.c.l.b16 %v971
    %v1180 = vunpack.c.h.b16 %v971
    %v1181 = vunpack.c.l.b16 %v972
    %v1182 = vunpack.c.h.b16 %v972
    %v1183 = vunpack.c.l.b16 %v973
    %v1184 = vunpack.c.l.b16 %v974
    %v1185 = vunpack.c.h.b16 %v974
    %v1186 = vunpack.c.l.b16 %v975
    %v1187 = vunpack.c.h.b16 %v975
    %v1188 = vunpack.c.l.b16 %v976
    %v1189 = vunpack.c.h.b16 %v976
    %v1190 = vunpack.c.l.b16 %v977
    %v1191 = vunpack.c.h.b16 %v977
    %v1192 = vunpack.c.l.b16 %v978
    %v1193 = vunpack.c.l.b16 %v979
    %v1194 = vunpack.c.h.b16 %v979
    %v1195 = vunpack.c.l.b16 %v980
    %v1196 = vunpack.c.h.b16 %v980
    %v1197 = vunpack.c.l.b16 %v981
    %v1198 = vunpack.c.h.b16 %v981
    %v1199 = vunpack.c.l.b16 %v982
    %v1200 = vunpack.c.h.b16 %v982
    %v1201 = vunpack.c.l.b16 %v983
    %v1202 = vunpack.c.l.b16 %v984
    %v1203 = vunpack.c.h.b16 %v984
    %v1204 = vunpack.c.l.b16 %v985
    %v1205 = vunpack.c.h.b16 %v985
    %v1206 = vunpack.c.l.b16 %v986
    %v1207 = vunpack.c.h.b16 %v986
    %v1208 = vunpack.c.l.b16 %v987
    %v1209 = vunpack.c.h.b16 %v987
    %v1210 = vunpack.c.l.b16 %v988
    %v1211 = vunpack.c.l.b16 %v989
    %v1212 = vunpack.c.h.b16 %v989
    %v1213 = vunpack.c.l.b16 %v990
    %v1214 = vunpack.c.h.b16 %v990
    %v1215 = vunpack.c.l.b16 %v991
    %v1216 = vunpack.c.h.b16 %v991
    %v1217 = vunpack.c.l.b16 %v992
    %v1218 = vunpack.c.h.b16 %v992
    %v1219 = vunpack.c.l.b16 %v993
    %v1220 = vunpack.c.l.b16 %v994
    %v1221 = vunpack.c.h.b16 %v994
    %v1222 = vunpack.c.l.b16 %v995
    %v1223 = vunpack.c.h.b16 %v995
    %v1224 = vunpack.c.l.b16 %v996
    %v1225 = vunpack.c.h.b16 %v996
    %v1226 = vunpack.c.l.b16 %v997
    %v1227 = vunpack.c.h.b16 %v997
    %v1228 = vunpack.c.l.b16 %v998
    %v1229 = vpack.c.b16 %v1094, %v1085
    %v1230 = vpack.c.b16 %v1095, %v1086
    %v1231 = vpack.c.b16 %v1096, %v1087
    %v1232 = vpack.c.b16 %v1097, %v1088
    %v1233 = vpack.c.b16 %v1098, %v1089
    %v1234 = vpack.c.b16 %v1099, %v1090
    %v1235 = vpack.c.b16 %v1100, %v1091
    %v1236 = vpack.c.b16 %v1101, %v1092
    %v1237 = vpack.c.b16 %v1102, %v1093
    %v1238 = vpack.c.b16 %v1112, %v1103
    %v1239 = vpack.c.b16 %v1113, %v1104
    %v1240 = vpack.c.b16 %v1114, %v1105
    %v1241 = vpack.c.b16 %v1115, %v1106
    %v1242 = vpack.c.b16 %v1116, %v1107
    %v1243 = vpack.c.b16 %v1117, %v1108
    %v1244 = vpack.c.b16 %v1118, %v1109
    %v1245 = vpack.c.b16 %v1119, %v1110
    %v1246 = vpack.c.b16 %v1120, %v1111
    %v1247 = vpack.c.b16 %v1130, %v1121
    %v1248 = vpack.c.b16 %v1131, %v1122
    %v1249 = vpack.c.b16 %v1132, %v1123
    %v1250 = vpack.c.b16 %v1133, %v1124
    %v1251 = vpack.c.b16 %v1134, %v1125
    %v1252 = vpack.c.b16 %v1135, %v1126
    %v1253 = vpack.c.b16 %v1136, %v1127
    %v1254 = vpack.c.b16 %v1137, %v1128
    %v1255 = vpack.c.b16 %v1138, %v1129
    %v1256 = vpack.c.b16 %v1148, %v1139
    %v1257 = vpack.c.b16 %v1149, %v1140
    %v1258 = vpack.c.b16 %v1150, %v1141
    %v1259 = vpack.c.b16 %v1151, %v1142
    %v1260 = vpack.c.b16 %v1152, %v1143
    %v1261 = vpack.c.b16 %v1153, %v1144
    %v1262 = vpack.c.b16 %v1154, %v1145
    %v1263 = vpack.c.b16 %v1155, %v1146
    %v1264 = vpack.c.b16 %v1156, %v1147
    %v1265 = vpack.c.b16 %v1166, %v1157
    %v1266 = vpack.c.b16 %v1167, %v1158
    %v1267 = vpack.c.b16 %v1168, %v1159
    %v1268 = vpack.c.b16 %v1169, %v1160
    %v1269 = vpack.c.b16 %v1170, %v1161
    %v1270 = vpack.c.b16 %v1171, %v1162
    %v1271 = vpack.c.b16 %v1172, %v1163
    %v1272 = vpack.c.b16 %v1173, %v1164
    %v1273 = vpack.c.b16 %v1174, %v1165
    %v1274 = vpack.c.b16 %v1184, %v1175
    %v1275 = vpack.c.b16 %v1185, %v1176
    %v1276 = vpack.c.b16 %v1186, %v1177
    %v1277 = vpack.c.b16 %v1187, %v1178
    %v1278 = vpack.c.b16 %v1188, %v1179
    %v1279 = vpack.c.b16 %v1189, %v1180
    %v1280 = vpack.c.b16 %v1190, %v1181
    %v1281 = vpack.c.b16 %v1191, %v1182
    %v1282 = vpack.c.b16 %v1192, %v1183
    %v1283 = vpack.c.b16 %v1202, %v1193
    %v1284 = vpack.c.b16 %v1203, %v1194
    %v1285 = vpack.c.b16 %v1204, %v1195
    %v1286 = vpack.c.b16 %v1205, %v1196
    %v1287 = vpack.c.b16 %v1206, %v1197
    %v1288 = vpack.c.b16 %v1207, %v1198
    %v1289 = vpack.c.b16 %v1208, %v1199
    %v1290 = vpack.c.b16 %v1209, %v1200
    %v1291 = vpack.c.b16 %v1210, %v1201
    %v1292 = vpack.c.b16 %v1220, %v1211
    %v1293 = vpack.c.b16 %v1221, %v1212
    %v1294 = vpack.c.b16 %v1222, %v1213
    %v1295 = vpack.c.b16 %v1223, %v1214
    %v1296 = vpack.c.b16 %v1224, %v1215
    %v1297 = vpack.c.b16 %v1225, %v1216
    %v1298 = vpack.c.b16 %v1226, %v1217
    %v1299 = vpack.c.b16 %v1227, %v1218
    %v1300 = vpack.c.b16 %v1228, %v1219
    %1373 = vmatpush.bf16.msra.mxu0 %v1292
    %1374 = vmatpush.bf16.msra.mxu0 %v1283
    %1375 = vmatpush.bf16.msra.mxu0 %v1274
    %1376 = vmatpush.bf16.msra.mxu0 %v1265
    %1377 = vmatpush.bf16.msra.mxu0 %v1256
    %1378 = vmatpush.bf16.msra.mxu0 %v1247
    %1379 = vmatpush.bf16.msra.mxu0 %v1238
    %1380 = vmatpush.bf16.msra.mxu0 %v1229
    %1381 = vmatmul.bf16.gmra.mxu0 %v1003
    %v1382 = vpop.f32.mrf.mxu0
    %v1383 = vadd.f32 0.0, %v1382
    %v1384 = vpop.f32.mrf.mxu0
    %v1385 = vadd.f32 0.0, %v1384
    %1386 = vdwg.mxu0
    %1387 = vmatpush.bf16.msra.mxu0 %v1293
    %1388 = vmatpush.bf16.msra.mxu0 %v1284
    %1389 = vmatpush.bf16.msra.mxu0 %v1275
    %1390 = vmatpush.bf16.msra.mxu0 %v1266
    %1391 = vmatpush.bf16.msra.mxu0 %v1257
    %1392 = vmatpush.bf16.msra.mxu0 %v1248
    %1393 = vmatpush.bf16.msra.mxu0 %v1239
    %1394 = vmatpush.bf16.msra.mxu0 %v1230
    %1395 = vmatmul.bf16.gmra.mxu0 %v1003
    %v1396 = vpop.f32.mrf.mxu0
    %v1397 = vadd.f32 0.0, %v1396
    %v1398 = vpop.f32.mrf.mxu0
    %v1399 = vadd.f32 0.0, %v1398
    %1400 = vdwg.mxu0
    %1401 = vmatpush.bf16.msra.mxu0 %v1294
    %1402 = vmatpush.bf16.msra.mxu0 %v1285
    %1403 = vmatpush.bf16.msra.mxu0 %v1276
    %1404 = vmatpush.bf16.msra.mxu0 %v1267
    %1405 = vmatpush.bf16.msra.mxu0 %v1258
    %1406 = vmatpush.bf16.msra.mxu0 %v1249
    %1407 = vmatpush.bf16.msra.mxu0 %v1240
    %1408 = vmatpush.bf16.msra.mxu0 %v1231
    %1409 = vmatmul.bf16.gmra.mxu0 %v1003
    %v1410 = vpop.f32.mrf.mxu0
    %v1411 = vadd.f32 0.0, %v1410
    %v1412 = vpop.f32.mrf.mxu0
    %v1413 = vadd.f32 0.0, %v1412
    %1414 = vdwg.mxu0
    %1415 = vmatpush.bf16.msra.mxu0 %v1295
    %1416 = vmatpush.bf16.msra.mxu0 %v1286
    %1417 = vmatpush.bf16.msra.mxu0 %v1277
    %1418 = vmatpush.bf16.msra.mxu0 %v1268
    %1419 = vmatpush.bf16.msra.mxu0 %v1259
    %1420 = vmatpush.bf16.msra.mxu0 %v1250
    %1421 = vmatpush.bf16.msra.mxu0 %v1241
    %1422 = vmatpush.bf16.msra.mxu0 %v1232
    %1423 = vmatmul.bf16.gmra.mxu0 %v1003
    %v1424 = vpop.f32.mrf.mxu0
    %v1425 = vadd.f32 0.0, %v1424
    %v1426 = vpop.f32.mrf.mxu0
    %v1427 = vadd.f32 0.0, %v1426
    %1428 = vdwg.mxu0
    %1429 = vmatpush.bf16.msra.mxu0 %v1296
    %1430 = vmatpush.bf16.msra.mxu0 %v1287
    %1431 = vmatpush.bf16.msra.mxu0 %v1278
    %1432 = vmatpush.bf16.msra.mxu0 %v1269
    %1433 = vmatpush.bf16.msra.mxu0 %v1260
    %1434 = vmatpush.bf16.msra.mxu0 %v1251
    %1435 = vmatpush.bf16.msra.mxu0 %v1242
    %1436 = vmatpush.bf16.msra.mxu0 %v1233
    %1437 = vmatmul.bf16.gmra.mxu0 %v1003
    %v1438 = vpop.f32.mrf.mxu0
    %v1439 = vadd.f32 0.0, %v1438
    %v1440 = vpop.f32.mrf.mxu0
    %v1441 = vadd.f32 0.0, %v1440
    %1442 = vdwg.mxu0
    %1443 = vmatpush.bf16.msra.mxu0 %v1297
    %1444 = vmatpush.bf16.msra.mxu0 %v1288
    %1445 = vmatpush.bf16.msra.mxu0 %v1279
    %1446 = vmatpush.bf16.msra.mxu0 %v1270
    %1447 = vmatpush.bf16.msra.mxu0 %v1261
    %1448 = vmatpush.bf16.msra.mxu0 %v1252
    %1449 = vmatpush.bf16.msra.mxu0 %v1243
    %1450 = vmatpush.bf16.msra.mxu0 %v1234
    %1451 = vmatmul.bf16.gmra.mxu0 %v1003
    %v1452 = vpop.f32.mrf.mxu0
    %v1453 = vadd.f32 0.0, %v1452
    %v1454 = vpop.f32.mrf.mxu0
    %v1455 = vadd.f32 0.0, %v1454
    %1456 = vdwg.mxu0
    %1457 = vmatpush.bf16.msra.mxu0 %v1298
    %1458 = vmatpush.bf16.msra.mxu0 %v1289
    %1459 = vmatpush.bf16.msra.mxu0 %v1280
    %1460 = vmatpush.bf16.msra.mxu0 %v1271
    %1461 = vmatpush.bf16.msra.mxu0 %v1262
    %1462 = vmatpush.bf16.msra.mxu0 %v1253
    %1463 = vmatpush.bf16.msra.mxu0 %v1244
    %1464 = vmatpush.bf16.msra.mxu0 %v1235
    %1465 = vmatmul.bf16.gmra.mxu0 %v1003
    %v1466 = vpop.f32.mrf.mxu0
    %v1467 = vadd.f32 0.0, %v1466
    %v1468 = vpop.f32.mrf.mxu0
    %v1469 = vadd.f32 0.0, %v1468
    %1470 = vdwg.mxu0
    %1471 = vmatpush.bf16.msra.mxu0 %v1299
    %1472 = vmatpush.bf16.msra.mxu0 %v1290
    %1473 = vmatpush.bf16.msra.mxu0 %v1281
    %1474 = vmatpush.bf16.msra.mxu0 %v1272
    %1475 = vmatpush.bf16.msra.mxu0 %v1263
    %1476 = vmatpush.bf16.msra.mxu0 %v1254
    %1477 = vmatpush.bf16.msra.mxu0 %v1245
    %1478 = vmatpush.bf16.msra.mxu0 %v1236
    %1479 = vmatmul.bf16.gmra.mxu0 %v1003
    %v1480 = vpop.f32.mrf.mxu0
    %v1481 = vadd.f32 0.0, %v1480
    %v1482 = vpop.f32.mrf.mxu0
    %v1483 = vadd.f32 0.0, %v1482
    %1484 = vdwg.mxu0
    %1485 = vmatpush.bf16.msra.mxu0 %v1300
    %1486 = vmatpush.bf16.msra.mxu0 %v1291
    %1487 = vmatpush.bf16.msra.mxu0 %v1282
    %1488 = vmatpush.bf16.msra.mxu0 %v1273
    %1489 = vmatpush.bf16.msra.mxu0 %v1264
    %1490 = vmatpush.bf16.msra.mxu0 %v1255
    %1491 = vmatpush.bf16.msra.mxu0 %v1246
    %1492 = vmatpush.bf16.msra.mxu0 %v1237
    %1493 = vmatmul.bf16.gmra.mxu0 %v1003
    %v1494 = vpop.f32.mrf.mxu0
    %v1495 = vadd.f32 0.0, %v1494
    %v1496 = vpop.f32.mrf.mxu0
    %v1497 = vadd.f32 0.0, %v1496
    %1498 = vdwg.mxu0
    %v1499 = vld [vmem:[%s2] sm:$0xf]
    %v1500 = vld [vmem:[%s2 + $0x4] sm:$0xf]
    %v1501 = vpack.c.bf16 %v1385, %v1383
    %v1502 = vld [vmem:[%s649] sm:$0xf]
    %v1503 = vld [vmem:[%s649 + $0x4] sm:$0xf]
    %v1504 = vpack.c.bf16 %v1399, %v1397
    %v1507 = vunpack.c.l.b16 %v1502
    %v1508 = vunpack.c.l.b16 %v1503
    %v1509 = vpack.c.b16 %v1508, %v1507
    %v1511 = vsel %vm658, %v1509, 0
    %1513 = vmatpush.bf16.msra.mxu0 0
    %1514 = vmatpush.bf16.msra.mxu0 0
    %1515 = vmatpush.bf16.msra.mxu0 0
    %1516 = vmatpush.bf16.msra.mxu0 0
    %1517 = vmatpush.bf16.msra.mxu0 0
    %1518 = vmatpush.bf16.msra.mxu0 0
    %1519 = vmatpush.bf16.msra.mxu0 0
    %1520 = vmatpush.bf16.msra.mxu0 %v1504
    %1521 = vmatmul.bf16.gmra.mxu0 %v1511
    %v1522 = vpop.f32.mrf.mxu0
    %v1523 = vadd.f32 0.0, %v1522
    %v1524 = vpop.f32.mrf.mxu0
    %v1525 = vadd.f32 0.0, %v1524
    %1526 = vdwg.mxu0
    %v1529 = vunpack.c.l.b16 %v1499
    %v1530 = vunpack.c.l.b16 %v1500
    %v1531 = vpack.c.b16 %v1530, %v1529
    %v1533 = vsel %vm658, %v1531, 0
    %1535 = vmatpush.bf16.msra.mxu0 0
    %1536 = vmatpush.bf16.msra.mxu0 0
    %1537 = vmatpush.bf16.msra.mxu0 0
    %1538 = vmatpush.bf16.msra.mxu0 0
    %1539 = vmatpush.bf16.msra.mxu0 0
    %1540 = vmatpush.bf16.msra.mxu0 0
    %1541 = vmatpush.bf16.msra.mxu0 0
    %1542 = vmatpush.bf16.msra.mxu0 %v1501
    %1543 = vmatmul.bf16.gmra.mxu0 %v1533
    %v1544 = vpop.f32.mrf.mxu0
    %v1545 = vadd.f32 %v1523, %v1544
    %v1546 = vpop.f32.mrf.mxu0
    %v1547 = vadd.f32 %v1525, %v1546
    %1548 = vdwg.mxu0
    %v1549 = vld [vmem:[%s698] sm:$0xf]
    %v1550 = vld [vmem:[%s698 + $0x4] sm:$0xf]
    %v1551 = vpack.c.bf16 %v1413, %v1411
    %v1554 = vunpack.c.l.b16 %v1549
    %v1555 = vunpack.c.l.b16 %v1550
    %v1556 = vpack.c.b16 %v1555, %v1554
    %v1558 = vsel %vm658, %v1556, 0
    %1560 = vmatpush.bf16.msra.mxu0 0
    %1561 = vmatpush.bf16.msra.mxu0 0
    %1562 = vmatpush.bf16.msra.mxu0 0
    %1563 = vmatpush.bf16.msra.mxu0 0
    %1564 = vmatpush.bf16.msra.mxu0 0
    %1565 = vmatpush.bf16.msra.mxu0 0
    %1566 = vmatpush.bf16.msra.mxu0 0
    %1567 = vmatpush.bf16.msra.mxu0 %v1551
    %1568 = vmatmul.bf16.gmra.mxu0 %v1558
    %v1569 = vpop.f32.mrf.mxu0
    %v1570 = vadd.f32 0.0, %v1569
    %v1571 = vpop.f32.mrf.mxu0
    %v1572 = vadd.f32 0.0, %v1571
    %1573 = vdwg.mxu0
    %v1574 = vadd.f32 %v1545, %v1570
    %v1575 = vadd.f32 %v1547, %v1572
    %vm1576 = vcmp.ge.f32.partialorder %v1574, 0.0
    %vm1577 = vcmp.ge.f32.partialorder %v1575, 0.0
    %v1578 = vmul.f32 %v1574, 0.1
    %v1579 = vmul.f32 %v1575, 0.1
    %v1580 = vsel %vm1576, %v1574, %v1578
    %v1581 = vsel %vm1577, %v1575, %v1579
    %v1582 = vpack.c.bf16 %v1580, %v1580
    %v1583 = vpack.c.bf16 %v1581, %v1581
    %1584 = vst [vmem:[#allocation2 + $0x4] sm:$0xf] %v1582
    %1585 = vst [vmem:[#allocation2 + $0x1c] sm:$0xf] %v1583
    %v1586 = vld [vmem:[%s736] sm:$0xf]
    %v1587 = vld [vmem:[%s736 + $0x4] sm:$0xf]
    %v1588 = vpack.c.bf16 %v1427, %v1425
    %v1589 = vld [vmem:[%s740] sm:$0xf]
    %v1590 = vld [vmem:[%s740 + $0x4] sm:$0xf]
    %v1591 = vpack.c.bf16 %v1441, %v1439
    %v1594 = vunpack.c.l.b16 %v1589
    %v1595 = vunpack.c.l.b16 %v1590
    %v1596 = vpack.c.b16 %v1595, %v1594
    %v1598 = vsel %vm658, %v1596, 0
    %1600 = vmatpush.bf16.msra.mxu0 0
    %1601 = vmatpush.bf16.msra.mxu0 0
    %1602 = vmatpush.bf16.msra.mxu0 0
    %1603 = vmatpush.bf16.msra.mxu0 0
    %1604 = vmatpush.bf16.msra.mxu0 0
    %1605 = vmatpush.bf16.msra.mxu0 0
    %1606 = vmatpush.bf16.msra.mxu0 0
    %1607 = vmatpush.bf16.msra.mxu0 %v1591
    %1608 = vmatmul.bf16.gmra.mxu0 %v1598
    %v1609 = vpop.f32.mrf.mxu0
    %v1610 = vadd.f32 0.0, %v1609
    %v1611 = vpop.f32.mrf.mxu0
    %v1612 = vadd.f32 0.0, %v1611
    %1613 = vdwg.mxu0
    %v1616 = vunpack.c.l.b16 %v1586
    %v1617 = vunpack.c.l.b16 %v1587
    %v1618 = vpack.c.b16 %v1617, %v1616
    %v1620 = vsel %vm658, %v1618, 0
    %1622 = vmatpush.bf16.msra.mxu0 0
    %1623 = vmatpush.bf16.msra.mxu0 0
    %1624 = vmatpush.bf16.msra.mxu0 0
    %1625 = vmatpush.bf16.msra.mxu0 0
    %1626 = vmatpush.bf16.msra.mxu0 0
    %1627 = vmatpush.bf16.msra.mxu0 0
    %1628 = vmatpush.bf16.msra.mxu0 0
    %1629 = vmatpush.bf16.msra.mxu0 %v1588
    %1630 = vmatmul.bf16.gmra.mxu0 %v1620
    %v1631 = vpop.f32.mrf.mxu0
    %v1632 = vadd.f32 %v1610, %v1631
    %v1633 = vpop.f32.mrf.mxu0
    %v1634 = vadd.f32 %v1612, %v1633
    %1635 = vdwg.mxu0
    %v1636 = vld [vmem:[%s788] sm:$0xf]
    %v1637 = vld [vmem:[%s788 + $0x4] sm:$0xf]
    %v1638 = vpack.c.bf16 %v1455, %v1453
    %v1641 = vunpack.c.l.b16 %v1636
    %v1642 = vunpack.c.l.b16 %v1637
    %v1643 = vpack.c.b16 %v1642, %v1641
    %v1645 = vsel %vm658, %v1643, 0
    %1647 = vmatpush.bf16.msra.mxu0 0
    %1648 = vmatpush.bf16.msra.mxu0 0
    %1649 = vmatpush.bf16.msra.mxu0 0
    %1650 = vmatpush.bf16.msra.mxu0 0
    %1651 = vmatpush.bf16.msra.mxu0 0
    %1652 = vmatpush.bf16.msra.mxu0 0
    %1653 = vmatpush.bf16.msra.mxu0 0
    %1654 = vmatpush.bf16.msra.mxu0 %v1638
    %1655 = vmatmul.bf16.gmra.mxu0 %v1645
    %v1656 = vpop.f32.mrf.mxu0
    %v1657 = vadd.f32 0.0, %v1656
    %v1658 = vpop.f32.mrf.mxu0
    %v1659 = vadd.f32 0.0, %v1658
    %1660 = vdwg.mxu0
    %v1661 = vadd.f32 %v1632, %v1657
    %v1662 = vadd.f32 %v1634, %v1659
    %vm1663 = vcmp.ge.f32.partialorder %v1661, 0.0
    %vm1664 = vcmp.ge.f32.partialorder %v1662, 0.0
    %v1665 = vmul.f32 %v1661, 0.1
    %v1666 = vmul.f32 %v1662, 0.1
    %v1667 = vsel %vm1663, %v1661, %v1665
    %v1668 = vsel %vm1664, %v1662, %v1666
    %v1669 = vpack.c.bf16 %v1667, %v1667
    %v1670 = vpack.c.bf16 %v1668, %v1668
    %1671 = vst [vmem:[#allocation2 + $0xc] sm:$0xf] %v1669
    %1672 = vst [vmem:[#allocation2 + $0x24] sm:$0xf] %v1670
    %v1673 = vld [vmem:[%s826] sm:$0xf]
    %v1674 = vld [vmem:[%s826 + $0x4] sm:$0xf]
    %v1675 = vpack.c.bf16 %v1469, %v1467
    %v1676 = vld [vmem:[%s830] sm:$0xf]
    %v1677 = vld [vmem:[%s830 + $0x4] sm:$0xf]
    %v1678 = vpack.c.bf16 %v1483, %v1481
    %v1681 = vunpack.c.l.b16 %v1676
    %v1682 = vunpack.c.l.b16 %v1677
    %v1683 = vpack.c.b16 %v1682, %v1681
    %v1685 = vsel %vm658, %v1683, 0
    %1687 = vmatpush.bf16.msra.mxu0 0
    %1688 = vmatpush.bf16.msra.mxu0 0
    %1689 = vmatpush.bf16.msra.mxu0 0
    %1690 = vmatpush.bf16.msra.mxu0 0
    %1691 = vmatpush.bf16.msra.mxu0 0
    %1692 = vmatpush.bf16.msra.mxu0 0
    %1693 = vmatpush.bf16.msra.mxu0 0
    %1694 = vmatpush.bf16.msra.mxu0 %v1678
    %1695 = vmatmul.bf16.gmra.mxu0 %v1685
    %v1696 = vpop.f32.mrf.mxu0
    %v1697 = vadd.f32 0.0, %v1696
    %v1698 = vpop.f32.mrf.mxu0
    %v1699 = vadd.f32 0.0, %v1698
    %1700 = vdwg.mxu0
    %v1703 = vunpack.c.l.b16 %v1673
    %v1704 = vunpack.c.l.b16 %v1674
    %v1705 = vpack.c.b16 %v1704, %v1703
    %v1707 = vsel %vm658, %v1705, 0
    %1709 = vmatpush.bf16.msra.mxu0 0
    %1710 = vmatpush.bf16.msra.mxu0 0
    %1711 = vmatpush.bf16.msra.mxu0 0
    %1712 = vmatpush.bf16.msra.mxu0 0
    %1713 = vmatpush.bf16.msra.mxu0 0
    %1714 = vmatpush.bf16.msra.mxu0 0
    %1715 = vmatpush.bf16.msra.mxu0 0
    %1716 = vmatpush.bf16.msra.mxu0 %v1675
    %1717 = vmatmul.bf16.gmra.mxu0 %v1707
    %v1718 = vpop.f32.mrf.mxu0
    %v1719 = vadd.f32 %v1697, %v1718
    %v1720 = vpop.f32.mrf.mxu0
    %v1721 = vadd.f32 %v1699, %v1720
    %1722 = vdwg.mxu0
    %v1723 = vld [vmem:[%s878] sm:$0xf]
    %v1724 = vld [vmem:[%s878 + $0x4] sm:$0xf]
    %v1725 = vpack.c.bf16 %v1497, %v1495
    %v1728 = vunpack.c.l.b16 %v1723
    %v1729 = vunpack.c.l.b16 %v1724
    %v1730 = vpack.c.b16 %v1729, %v1728
    %v1732 = vsel %vm658, %v1730, 0
    %1734 = vmatpush.bf16.msra.mxu0 0
    %1735 = vmatpush.bf16.msra.mxu0 0
    %1736 = vmatpush.bf16.msra.mxu0 0
    %1737 = vmatpush.bf16.msra.mxu0 0
    %1738 = vmatpush.bf16.msra.mxu0 0
    %1739 = vmatpush.bf16.msra.mxu0 0
    %1740 = vmatpush.bf16.msra.mxu0 0
    %1741 = vmatpush.bf16.msra.mxu0 %v1725
    %1742 = vmatmul.bf16.gmra.mxu0 %v1732
    %v1743 = vpop.f32.mrf.mxu0
    %v1744 = vadd.f32 0.0, %v1743
    %v1745 = vpop.f32.mrf.mxu0
    %v1746 = vadd.f32 0.0, %v1745
    %1747 = vdwg.mxu0
    %v1748 = vadd.f32 %v1719, %v1744
    %v1749 = vadd.f32 %v1721, %v1746
    %vm1750 = vcmp.ge.f32.partialorder %v1748, 0.0
    %vm1751 = vcmp.ge.f32.partialorder %v1749, 0.0
    %v1752 = vmul.f32 %v1748, 0.1
    %v1753 = vmul.f32 %v1749, 0.1
    %v1754 = vsel %vm1750, %v1748, %v1752
    %v1755 = vsel %vm1751, %v1749, %v1753
    %v1756 = vpack.c.bf16 %v1754, %v1754
    %v1757 = vpack.c.bf16 %v1755, %v1755
    %1758 = vst [vmem:[#allocation2 + $0x14] sm:$0xf] %v1756
    %1759 = vst [vmem:[#allocation2 + $0x2c] sm:$0xf] %v1757
    %v1760 = vld [vmem:[%s3] sm:$0xff]
    %v1761 = vld [vmem:[%s3 + $0x8] sm:$0xff]
    %v1762 = vld [vmem:[%s4] sm:$0xff]
    %v1763 = vld [vmem:[%s4 + $0x8] sm:$0xff]
    %v1765 = vsel %vm658, %v1760, 0
    %v1768 = vsel %vm658, %v1761, 0
    %1770 = vmatpush.msra.mxu0 0.0
    %1771 = vmatpush.msra.mxu0 0.0
    %1772 = vmatpush.msra.mxu0 0.0
    %1773 = vmatpush.msra.mxu0 0.0
    %1774 = vmatpush.msra.mxu0 0.0
    %1775 = vmatpush.msra.mxu0 0.0
    %1776 = vmatpush.msra.mxu0 0.0
    %1777 = vmatpush.msra.mxu0 0.0
    %1778 = vmatpush.msra.mxu0 0.0
    %1779 = vmatpush.msra.mxu0 0.0
    %1780 = vmatpush.msra.mxu0 0.0
    %1781 = vmatpush.msra.mxu0 0.0
    %1782 = vmatpush.msra.mxu0 0.0
    %1783 = vmatpush.msra.mxu0 0.0
    %1784 = vmatpush.msra.mxu0 %v1763
    %1785 = vmatpush.msra.mxu0 %v1762
    %1786 = vmatmul.f32.gmra.mxu0 %v1765
    %v1787 = vpop.f32.mrf.mxu0
    %v1788 = vadd.f32 0.0, %v1787
    %1789 = vmatmul.f32.gmra.mxu0 %v1768
    %v1790 = vpop.f32.mrf.mxu0
    %v1791 = vadd.f32 0.0, %v1790
    %1792 = vdwg.mxu0
    %v1793 = vld [vmem:[%s5] sm:$0xff]
    %v1794 = vld [vmem:[%s5 + $0x8] sm:$0xff]
    %v1796 = vsel %vm658, %v1793, 0
    %v1799 = vsel %vm658, %v1794, 0
    %1801 = vmatpush.msra.mxu0 0.0
    %1802 = vmatpush.msra.mxu0 0.0
    %1803 = vmatpush.msra.mxu0 0.0
    %1804 = vmatpush.msra.mxu0 0.0
    %1805 = vmatpush.msra.mxu0 0.0
    %1806 = vmatpush.msra.mxu0 0.0
    %1807 = vmatpush.msra.mxu0 0.0
    %1808 = vmatpush.msra.mxu0 0.0
    %1809 = vmatpush.msra.mxu0 0.0
    %1810 = vmatpush.msra.mxu0 0.0
    %1811 = vmatpush.msra.mxu0 0.0
    %1812 = vmatpush.msra.mxu0 0.0
    %1813 = vmatpush.msra.mxu0 0.0
    %1814 = vmatpush.msra.mxu0 0.0
    %1815 = vmatpush.msra.mxu0 %v1791
    %1816 = vmatpush.msra.mxu0 %v1788
    %1817 = vmatmul.f32.gmra.mxu0 %v1796
    %v1818 = vpop.f32.mrf.mxu0
    %v1819 = vadd.f32 0.0, %v1818
    %1820 = vmatmul.f32.gmra.mxu0 %v1799
    %v1821 = vpop.f32.mrf.mxu0
    %v1822 = vadd.f32 0.0, %v1821
    %1823 = vdwg.mxu0
    %v1824 = vmax.f32 %v1819, 0.0
    %v1825 = vmax.f32 %v1822, 0.0
    %v1826 = vld [vmem:[%s7] sm:$0xff]
    %v1827 = vld [vmem:[%s7 + $0x8] sm:$0xff]
    %v1828 = vld [vmem:[%s7 + $0x10] sm:$0xff]
    %v1829 = vld [vmem:[%s7 + $0x18] sm:$0xff]
    %v1830 = vld [vmem:[%s7 + $0x20] sm:$0xff]
    %v1831 = vld [vmem:[%s7 + $0x28] sm:$0xff]
    %v1832 = vld [vmem:[%s7 + $0x30] sm:$0xff]
    %v1833 = vld [vmem:[%s7 + $0x38] sm:$0xff]
    %v1835 = vsel %vm658, %v1826, 0
    %v1838 = vsel %vm658, %v1827, 0
    %v1841 = vsel %vm658, %v1828, 0
    %v1844 = vsel %vm658, %v1829, 0
    %v1847 = vsel %vm658, %v1830, 0
    %v1850 = vsel %vm658, %v1831, 0
    %v1853 = vsel %vm658, %v1832, 0
    %v1856 = vsel %vm658, %v1833, 0
    %1858 = vmatpush.msra.mxu0 0.0
    %1859 = vmatpush.msra.mxu0 0.0
    %1860 = vmatpush.msra.mxu0 0.0
    %1861 = vmatpush.msra.mxu0 0.0
    %1862 = vmatpush.msra.mxu0 0.0
    %1863 = vmatpush.msra.mxu0 0.0
    %1864 = vmatpush.msra.mxu0 0.0
    %1865 = vmatpush.msra.mxu0 0.0
    %1866 = vmatpush.msra.mxu0 0.0
    %1867 = vmatpush.msra.mxu0 0.0
    %1868 = vmatpush.msra.mxu0 0.0
    %1869 = vmatpush.msra.mxu0 0.0
    %1870 = vmatpush.msra.mxu0 0.0
    %1871 = vmatpush.msra.mxu0 0.0
    %1872 = vmatpush.msra.mxu0 %v1825
    %1873 = vmatpush.msra.mxu0 %v1824
    %1874 = vmatmul.f32.gmra.mxu0 %v1835
    %v1875 = vpop.f32.mrf.mxu0
    %v1876 = vadd.f32 0.0, %v1875
    %1877 = vmatmul.f32.gmra.mxu0 %v1838
    %v1878 = vpop.f32.mrf.mxu0
    %v1879 = vadd.f32 0.0, %v1878
    %1880 = vmatmul.f32.gmra.mxu0 %v1841
    %v1881 = vpop.f32.mrf.mxu0
    %v1882 = vadd.f32 0.0, %v1881
    %1883 = vmatmul.f32.gmra.mxu0 %v1844
    %v1884 = vpop.f32.mrf.mxu0
    %v1885 = vadd.f32 0.0, %v1884
    %1886 = vmatmul.f32.gmra.mxu0 %v1847
    %v1887 = vpop.f32.mrf.mxu0
    %v1888 = vadd.f32 0.0, %v1887
    %1889 = vmatmul.f32.gmra.mxu0 %v1850
    %v1890 = vpop.f32.mrf.mxu0
    %v1891 = vadd.f32 0.0, %v1890
    %1892 = vmatmul.f32.gmra.mxu0 %v1853
    %v1893 = vpop.f32.mrf.mxu0
    %v1894 = vadd.f32 0.0, %v1893
    %1895 = vmatmul.f32.gmra.mxu0 %v1856
    %v1896 = vpop.f32.mrf.mxu0
    %v1897 = vadd.f32 0.0, %v1896
    %1898 = vdwg.mxu0
    %1900 = vset.pattern.permute.xlu0 0
    %1901 = vperm.xlu0 %1900, %v1876
    %v1902 = vpop.permute.xlu0 %1901
    %1905 = vset.pattern.permute.xlu0 0
    %1906 = vperm.xlu0 %1905, %v1879
    %v1907 = vpop.permute.xlu0 %1906
    %1910 = vset.pattern.permute.xlu0 0
    %1911 = vperm.xlu0 %1910, %v1882
    %v1912 = vpop.permute.xlu0 %1911
    %1915 = vset.pattern.permute.xlu0 0
    %1916 = vperm.xlu0 %1915, %v1885
    %v1917 = vpop.permute.xlu0 %1916
    %1920 = vset.pattern.permute.xlu0 0
    %1921 = vperm.xlu0 %1920, %v1888
    %v1922 = vpop.permute.xlu0 %1921
    %1925 = vset.pattern.permute.xlu0 0
    %1926 = vperm.xlu0 %1925, %v1891
    %v1927 = vpop.permute.xlu0 %1926
    %1930 = vset.pattern.permute.xlu0 0
    %1931 = vperm.xlu0 %1930, %v1894
    %v1932 = vpop.permute.xlu0 %1931
    %1935 = vset.pattern.permute.xlu0 0
    %1936 = vperm.xlu0 %1935, %v1897
    %v1937 = vpop.permute.xlu0 %1936
    %1939 = vset.pattern.permute.xlu0 1
    %1940 = vperm.xlu0 %1939, %v1876
    %v1941 = vpop.permute.xlu0 %1940
    %1943 = vset.pattern.permute.xlu0 1
    %1944 = vperm.xlu0 %1943, %v1879
    %v1945 = vpop.permute.xlu0 %1944
    %1947 = vset.pattern.permute.xlu0 1
    %1948 = vperm.xlu0 %1947, %v1882
    %v1949 = vpop.permute.xlu0 %1948
    %1951 = vset.pattern.permute.xlu0 1
    %1952 = vperm.xlu0 %1951, %v1885
    %v1953 = vpop.permute.xlu0 %1952
    %1955 = vset.pattern.permute.xlu0 1
    %1956 = vperm.xlu0 %1955, %v1888
    %v1957 = vpop.permute.xlu0 %1956
    %1959 = vset.pattern.permute.xlu0 1
    %1960 = vperm.xlu0 %1959, %v1891
    %v1961 = vpop.permute.xlu0 %1960
    %1963 = vset.pattern.permute.xlu0 1
    %1964 = vperm.xlu0 %1963, %v1894
    %v1965 = vpop.permute.xlu0 %1964
    %1967 = vset.pattern.permute.xlu0 1
    %1968 = vperm.xlu0 %1967, %v1897
    %v1969 = vpop.permute.xlu0 %1968
    %v1971 = vld [vmem:[%s6] sm:$0xf]
    %v1972 = vld [vmem:[%s6 + $0x4] sm:$0xf]
    %v1973 = vld [vmem:[%s6 + $0x8] sm:$0xf]
    %v1974 = vld [vmem:[%s6 + $0xc] sm:$0xf]
    %v1975 = vld [vmem:[%s6 + $0x10] sm:$0xf]
    %v1976 = vld [vmem:[%s6 + $0x14] sm:$0xf]
    %v1977 = vld [vmem:[%s6 + $0x18] sm:$0xf]
    %v1978 = vld [vmem:[%s6 + $0x1c] sm:$0xf]
    %v1979 = vld [vmem:[#allocation2] sm:$0xff]
    %v1980 = vld [vmem:[#allocation2 + $0x8] sm:$0xff]
    %v1981 = vld [vmem:[#allocation2 + $0x10] sm:$0xff]
    %v1982 = vld [vmem:[#allocation2 + $0x18] sm:$0xff]
    %v1983 = vld [vmem:[#allocation2 + $0x20] sm:$0xff]
    %v1984 = vld [vmem:[#allocation2 + $0x28] sm:$0xff]
    %v1993 = vunpack.c.l.b16 %v1971
    %v1994 = vunpack.c.l.b16 %v1972
    %v1995 = vunpack.c.l.b16 %v1973
    %v1996 = vunpack.c.l.b16 %v1974
    %v1997 = vunpack.c.l.b16 %v1975
    %v1998 = vunpack.c.l.b16 %v1976
    %v1999 = vunpack.c.l.b16 %v1977
    %v2000 = vunpack.c.l.b16 %v1978
    %v2001 = vpack.c.b16 %v1994, %v1993
    %v2002 = vpack.c.b16 %v1996, %v1995
    %v2003 = vpack.c.b16 %v1998, %v1997
    %v2004 = vpack.c.b16 %v2000, %v1999
    %v2011 = vunpack.c.l.b16 %v1979
    %v2012 = vunpack.c.h.b16 %v1979
    %v2013 = vunpack.c.l.b16 %v1980
    %v2014 = vunpack.c.h.b16 %v1980
    %v2015 = vunpack.c.l.b16 %v1981
    %v2016 = vunpack.c.h.b16 %v1981
    %v2017 = vunpack.c.l.b16 %v1982
    %v2018 = vunpack.c.h.b16 %v1982
    %v2019 = vunpack.c.l.b16 %v1983
    %v2020 = vunpack.c.h.b16 %v1983
    %v2021 = vunpack.c.l.b16 %v1984
    %v2022 = vunpack.c.h.b16 %v1984
    %v2023 = vpack.c.b16 %v2017, %v2011
    %v2024 = vpack.c.b16 %v2018, %v2012
    %v2025 = vpack.c.b16 %v2019, %v2013
    %v2026 = vpack.c.b16 %v2020, %v2014
    %v2027 = vpack.c.b16 %v2021, %v2015
    %v2028 = vpack.c.b16 %v2022, %v2016
    %v2036 = vsel %vm658, %v2001, 0
    %v2039 = vsel %vm658, %v2002, 0
    %v2042 = vsel %vm658, %v2003, 0
    %v2045 = vsel %vm658, %v2004, 0
    %2047 = vmatpush.bf16.msra.mxu0 0
    %2048 = vmatpush.bf16.msra.mxu0 0
    %2049 = vmatpush.bf16.msra.mxu0 0
    %2050 = vmatpush.bf16.msra.mxu0 0
    %2051 = vmatpush.bf16.msra.mxu0 0
    %2052 = vmatpush.bf16.msra.mxu0 0
    %2053 = vmatpush.bf16.msra.mxu0 0
    %2054 = vmatpush.bf16.msra.mxu0 %v2023
    %2055 = vmatmul.bf16.gmra.mxu0 %v2036
    %v2056 = vpop.f32.mrf.mxu0
    %v2057 = vadd.f32 %v1902, %v2056
    %v2058 = vpop.f32.mrf.mxu0
    %v2059 = vadd.f32 %v1907, %v2058
    %2060 = vmatmul.bf16.gmra.mxu0 %v2039
    %v2061 = vpop.f32.mrf.mxu0
    %v2062 = vadd.f32 %v1912, %v2061
    %v2063 = vpop.f32.mrf.mxu0
    %v2064 = vadd.f32 %v1917, %v2063
    %2065 = vmatmul.bf16.gmra.mxu0 %v2042
    %v2066 = vpop.f32.mrf.mxu0
    %v2067 = vadd.f32 %v1922, %v2066
    %v2068 = vpop.f32.mrf.mxu0
    %v2069 = vadd.f32 %v1927, %v2068
    %2070 = vmatmul.bf16.gmra.mxu0 %v2045
    %v2071 = vpop.f32.mrf.mxu0
    %v2072 = vadd.f32 %v1932, %v2071
    %v2073 = vpop.f32.mrf.mxu0
    %v2074 = vadd.f32 %v1937, %v2073
    %2075 = vdwg.mxu0
    %2076 = vmatpush.bf16.msra.mxu0 0
    %2077 = vmatpush.bf16.msra.mxu0 0
    %2078 = vmatpush.bf16.msra.mxu0 0
    %2079 = vmatpush.bf16.msra.mxu0 0
    %2080 = vmatpush.bf16.msra.mxu0 0
    %2081 = vmatpush.bf16.msra.mxu0 0
    %2082 = vmatpush.bf16.msra.mxu0 0
    %2083 = vmatpush.bf16.msra.mxu0 %v2024
    %2084 = vmatmul.bf16.gmra.mxu0 %v2036
    %v2085 = vpop.f32.mrf.mxu0
    %v2086 = vadd.f32 %v1941, %v2085
    %v2087 = vpop.f32.mrf.mxu0
    %v2088 = vadd.f32 %v1945, %v2087
    %2089 = vmatmul.bf16.gmra.mxu0 %v2039
    %v2090 = vpop.f32.mrf.mxu0
    %v2091 = vadd.f32 %v1949, %v2090
    %v2092 = vpop.f32.mrf.mxu0
    %v2093 = vadd.f32 %v1953, %v2092
    %2094 = vmatmul.bf16.gmra.mxu0 %v2042
    %v2095 = vpop.f32.mrf.mxu0
    %v2096 = vadd.f32 %v1957, %v2095
    %v2097 = vpop.f32.mrf.mxu0
    %v2098 = vadd.f32 %v1961, %v2097
    %2099 = vmatmul.bf16.gmra.mxu0 %v2045
    %v2100 = vpop.f32.mrf.mxu0
    %v2101 = vadd.f32 %v1965, %v2100
    %v2102 = vpop.f32.mrf.mxu0
    %v2103 = vadd.f32 %v1969, %v2102
    %2104 = vdwg.mxu0
    %2105 = vmatpush.bf16.msra.mxu0 0
    %2106 = vmatpush.bf16.msra.mxu0 0
    %2107 = vmatpush.bf16.msra.mxu0 0
    %2108 = vmatpush.bf16.msra.mxu0 0
    %2109 = vmatpush.bf16.msra.mxu0 0
    %2110 = vmatpush.bf16.msra.mxu0 0
    %2111 = vmatpush.bf16.msra.mxu0 0
    %2112 = vmatpush.bf16.msra.mxu0 %v2025
    %2113 = vmatmul.bf16.gmra.mxu0 %v2036
    %v2114 = vpop.f32.mrf.mxu0
    %v2115 = vadd.f32 %v1902, %v2114
    %v2116 = vpop.f32.mrf.mxu0
    %v2117 = vadd.f32 %v1907, %v2116
    %2118 = vmatmul.bf16.gmra.mxu0 %v2039
    %v2119 = vpop.f32.mrf.mxu0
    %v2120 = vadd.f32 %v1912, %v2119
    %v2121 = vpop.f32.mrf.mxu0
    %v2122 = vadd.f32 %v1917, %v2121
    %2123 = vmatmul.bf16.gmra.mxu0 %v2042
    %v2124 = vpop.f32.mrf.mxu0
    %v2125 = vadd.f32 %v1922, %v2124
    %v2126 = vpop.f32.mrf.mxu0
    %v2127 = vadd.f32 %v1927, %v2126
    %2128 = vmatmul.bf16.gmra.mxu0 %v2045
    %v2129 = vpop.f32.mrf.mxu0
    %v2130 = vadd.f32 %v1932, %v2129
    %v2131 = vpop.f32.mrf.mxu0
    %v2132 = vadd.f32 %v1937, %v2131
    %2133 = vdwg.mxu0
    %2134 = vmatpush.bf16.msra.mxu0 0
    %2135 = vmatpush.bf16.msra.mxu0 0
    %2136 = vmatpush.bf16.msra.mxu0 0
    %2137 = vmatpush.bf16.msra.mxu0 0
    %2138 = vmatpush.bf16.msra.mxu0 0
    %2139 = vmatpush.bf16.msra.mxu0 0
    %2140 = vmatpush.bf16.msra.mxu0 0
    %2141 = vmatpush.bf16.msra.mxu0 %v2026
    %2142 = vmatmul.bf16.gmra.mxu0 %v2036
    %v2143 = vpop.f32.mrf.mxu0
    %v2144 = vadd.f32 %v1941, %v2143
    %v2145 = vpop.f32.mrf.mxu0
    %v2146 = vadd.f32 %v1945, %v2145
    %2147 = vmatmul.bf16.gmra.mxu0 %v2039
    %v2148 = vpop.f32.mrf.mxu0
    %v2149 = vadd.f32 %v1949, %v2148
    %v2150 = vpop.f32.mrf.mxu0
    %v2151 = vadd.f32 %v1953, %v2150
    %2152 = vmatmul.bf16.gmra.mxu0 %v2042
    %v2153 = vpop.f32.mrf.mxu0
    %v2154 = vadd.f32 %v1957, %v2153
    %v2155 = vpop.f32.mrf.mxu0
    %v2156 = vadd.f32 %v1961, %v2155
    %2157 = vmatmul.bf16.gmra.mxu0 %v2045
    %v2158 = vpop.f32.mrf.mxu0
    %v2159 = vadd.f32 %v1965, %v2158
    %v2160 = vpop.f32.mrf.mxu0
    %v2161 = vadd.f32 %v1969, %v2160
    %2162 = vdwg.mxu0
    %2163 = vmatpush.bf16.msra.mxu0 0
    %2164 = vmatpush.bf16.msra.mxu0 0
    %2165 = vmatpush.bf16.msra.mxu0 0
    %2166 = vmatpush.bf16.msra.mxu0 0
    %2167 = vmatpush.bf16.msra.mxu0 0
    %2168 = vmatpush.bf16.msra.mxu0 0
    %2169 = vmatpush.bf16.msra.mxu0 0
    %2170 = vmatpush.bf16.msra.mxu0 %v2027
    %2171 = vmatmul.bf16.gmra.mxu0 %v2036
    %v2172 = vpop.f32.mrf.mxu0
    %v2173 = vadd.f32 %v1902, %v2172
    %v2174 = vpop.f32.mrf.mxu0
    %v2175 = vadd.f32 %v1907, %v2174
    %2176 = vmatmul.bf16.gmra.mxu0 %v2039
    %v2177 = vpop.f32.mrf.mxu0
    %v2178 = vadd.f32 %v1912, %v2177
    %v2179 = vpop.f32.mrf.mxu0
    %v2180 = vadd.f32 %v1917, %v2179
    %2181 = vmatmul.bf16.gmra.mxu0 %v2042
    %v2182 = vpop.f32.mrf.mxu0
    %v2183 = vadd.f32 %v1922, %v2182
    %v2184 = vpop.f32.mrf.mxu0
    %v2185 = vadd.f32 %v1927, %v2184
    %2186 = vmatmul.bf16.gmra.mxu0 %v2045
    %v2187 = vpop.f32.mrf.mxu0
    %v2188 = vadd.f32 %v1932, %v2187
    %v2189 = vpop.f32.mrf.mxu0
    %v2190 = vadd.f32 %v1937, %v2189
    %2191 = vdwg.mxu0
    %2192 = vmatpush.bf16.msra.mxu0 0
    %2193 = vmatpush.bf16.msra.mxu0 0
    %2194 = vmatpush.bf16.msra.mxu0 0
    %2195 = vmatpush.bf16.msra.mxu0 0
    %2196 = vmatpush.bf16.msra.mxu0 0
    %2197 = vmatpush.bf16.msra.mxu0 0
    %2198 = vmatpush.bf16.msra.mxu0 0
    %2199 = vmatpush.bf16.msra.mxu0 %v2028
    %2200 = vmatmul.bf16.gmra.mxu0 %v2036
    %v2201 = vpop.f32.mrf.mxu0
    %v2202 = vadd.f32 %v1941, %v2201
    %v2203 = vpop.f32.mrf.mxu0
    %v2204 = vadd.f32 %v1945, %v2203
    %2205 = vmatmul.bf16.gmra.mxu0 %v2039
    %v2206 = vpop.f32.mrf.mxu0
    %v2207 = vadd.f32 %v1949, %v2206
    %v2208 = vpop.f32.mrf.mxu0
    %v2209 = vadd.f32 %v1953, %v2208
    %2210 = vmatmul.bf16.gmra.mxu0 %v2042
    %v2211 = vpop.f32.mrf.mxu0
    %v2212 = vadd.f32 %v1957, %v2211
    %v2213 = vpop.f32.mrf.mxu0
    %v2214 = vadd.f32 %v1961, %v2213
    %2215 = vmatmul.bf16.gmra.mxu0 %v2045
    %v2216 = vpop.f32.mrf.mxu0
    %v2217 = vadd.f32 %v1965, %v2216
    %v2218 = vpop.f32.mrf.mxu0
    %v2219 = vadd.f32 %v1969, %v2218
    %2220 = vdwg.mxu0
    %v2221 = vadd.f32 %v2057, %v2086
    %v2222 = vadd.f32 %v2221, %v2115
    %v2223 = vadd.f32 %v2222, %v2144
    %v2224 = vadd.f32 %v2223, %v2173
    %v2225 = vadd.f32 %v2224, %v2202
    %2226 = vadd.xlane.f32.xlu0 %v2225
    %v2227 = vpop.xlane.xlu0 %2226
    %v2228 = vadd.f32 %v2059, %v2088
    %v2229 = vadd.f32 %v2228, %v2117
    %v2230 = vadd.f32 %v2229, %v2146
    %v2231 = vadd.f32 %v2230, %v2175
    %v2232 = vadd.f32 %v2231, %v2204
    %2233 = vadd.xlane.f32.xlu0 %v2232
    %v2234 = vpop.xlane.xlu0 %2233
    %v2235 = vadd.f32 %v2062, %v2091
    %v2236 = vadd.f32 %v2235, %v2120
    %v2237 = vadd.f32 %v2236, %v2149
    %v2238 = vadd.f32 %v2237, %v2178
    %v2239 = vadd.f32 %v2238, %v2207
    %2240 = vadd.xlane.f32.xlu0 %v2239
    %v2241 = vpop.xlane.xlu0 %2240
    %v2242 = vadd.f32 %v2064, %v2093
    %v2243 = vadd.f32 %v2242, %v2122
    %v2244 = vadd.f32 %v2243, %v2151
    %v2245 = vadd.f32 %v2244, %v2180
    %v2246 = vadd.f32 %v2245, %v2209
    %2247 = vadd.xlane.f32.xlu0 %v2246
    %v2248 = vpop.xlane.xlu0 %2247
    %v2249 = vadd.f32 %v2067, %v2096
    %v2250 = vadd.f32 %v2249, %v2125
    %v2251 = vadd.f32 %v2250, %v2154
    %v2252 = vadd.f32 %v2251, %v2183
    %v2253 = vadd.f32 %v2252, %v2212
    %2254 = vadd.xlane.f32.xlu0 %v2253
    %v2255 = vpop.xlane.xlu0 %2254
    %v2256 = vadd.f32 %v2069, %v2098
    %v2257 = vadd.f32 %v2256, %v2127
    %v2258 = vadd.f32 %v2257, %v2156
    %v2259 = vadd.f32 %v2258, %v2185
    %v2260 = vadd.f32 %v2259, %v2214
    %2261 = vadd.xlane.f32.xlu0 %v2260
    %v2262 = vpop.xlane.xlu0 %2261
    %v2263 = vadd.f32 %v2072, %v2101
    %v2264 = vadd.f32 %v2263, %v2130
    %v2265 = vadd.f32 %v2264, %v2159
    %v2266 = vadd.f32 %v2265, %v2188
    %v2267 = vadd.f32 %v2266, %v2217
    %2268 = vadd.xlane.f32.xlu0 %v2267
    %v2269 = vpop.xlane.xlu0 %2268
    %v2270 = vadd.f32 %v2074, %v2103
    %v2271 = vadd.f32 %v2270, %v2132
    %v2272 = vadd.f32 %v2271, %v2161
    %v2273 = vadd.f32 %v2272, %v2190
    %v2274 = vadd.f32 %v2273, %v2219
    %2275 = vadd.xlane.f32.xlu0 %v2274
    %v2276 = vpop.xlane.xlu0 %2275
    %v2277 = vmul.f32 %v2057, %v2057
    %v2278 = vmul.f32 %v2086, %v2086
    %v2279 = vmul.f32 %v2115, %v2115
    %v2280 = vmul.f32 %v2144, %v2144
    %v2281 = vmul.f32 %v2173, %v2173
    %v2282 = vmul.f32 %v2202, %v2202
    %v2283 = vmul.f32 %v2059, %v2059
    %v2284 = vmul.f32 %v2088, %v2088
    %v2285 = vmul.f32 %v2117, %v2117
    %v2286 = vmul.f32 %v2146, %v2146
    %v2287 = vmul.f32 %v2175, %v2175
    %v2288 = vmul.f32 %v2204, %v2204
    %v2289 = vmul.f32 %v2062, %v2062
    %v2290 = vmul.f32 %v2091, %v2091
    %v2291 = vmul.f32 %v2120, %v2120
    %v2292 = vmul.f32 %v2149, %v2149
    %v2293 = vmul.f32 %v2178, %v2178
    %v2294 = vmul.f32 %v2207, %v2207
    %v2295 = vmul.f32 %v2064, %v2064
    %v2296 = vmul.f32 %v2093, %v2093
    %v2297 = vmul.f32 %v2122, %v2122
    %v2298 = vmul.f32 %v2151, %v2151
    %v2299 = vmul.f32 %v2180, %v2180
    %v2300 = vmul.f32 %v2209, %v2209
    %v2301 = vmul.f32 %v2067, %v2067
    %v2302 = vmul.f32 %v2096, %v2096
    %v2303 = vmul.f32 %v2125, %v2125
    %v2304 = vmul.f32 %v2154, %v2154
    %v2305 = vmul.f32 %v2183, %v2183
    %v2306 = vmul.f32 %v2212, %v2212
    %v2307 = vmul.f32 %v2069, %v2069
    %v2308 = vmul.f32 %v2098, %v2098
    %v2309 = vmul.f32 %v2127, %v2127
    %v2310 = vmul.f32 %v2156, %v2156
    %v2311 = vmul.f32 %v2185, %v2185
    %v2312 = vmul.f32 %v2214, %v2214
    %v2313 = vmul.f32 %v2072, %v2072
    %v2314 = vmul.f32 %v2101, %v2101
    %v2315 = vmul.f32 %v2130, %v2130
    %v2316 = vmul.f32 %v2159, %v2159
    %v2317 = vmul.f32 %v2188, %v2188
    %v2318 = vmul.f32 %v2217, %v2217
    %v2319 = vmul.f32 %v2074, %v2074
    %v2320 = vmul.f32 %v2103, %v2103
    %v2321 = vmul.f32 %v2132, %v2132
    %v2322 = vmul.f32 %v2161, %v2161
    %v2323 = vmul.f32 %v2190, %v2190
    %v2324 = vmul.f32 %v2219, %v2219
    %v2325 = vadd.f32 %v2277, %v2278
    %v2326 = vadd.f32 %v2325, %v2279
    %v2327 = vadd.f32 %v2326, %v2280
    %v2328 = vadd.f32 %v2327, %v2281
    %v2329 = vadd.f32 %v2328, %v2282
    %2330 = vadd.xlane.f32.xlu0 %v2329
    %v2331 = vpop.xlane.xlu0 %2330
    %v2332 = vadd.f32 %v2283, %v2284
    %v2333 = vadd.f32 %v2332, %v2285
    %v2334 = vadd.f32 %v2333, %v2286
    %v2335 = vadd.f32 %v2334, %v2287
    %v2336 = vadd.f32 %v2335, %v2288
    %2337 = vadd.xlane.f32.xlu0 %v2336
    %v2338 = vpop.xlane.xlu0 %2337
    %v2339 = vadd.f32 %v2289, %v2290
    %v2340 = vadd.f32 %v2339, %v2291
    %v2341 = vadd.f32 %v2340, %v2292
    %v2342 = vadd.f32 %v2341, %v2293
    %v2343 = vadd.f32 %v2342, %v2294
    %2344 = vadd.xlane.f32.xlu0 %v2343
    %v2345 = vpop.xlane.xlu0 %2344
    %v2346 = vadd.f32 %v2295, %v2296
    %v2347 = vadd.f32 %v2346, %v2297
    %v2348 = vadd.f32 %v2347, %v2298
    %v2349 = vadd.f32 %v2348, %v2299
    %v2350 = vadd.f32 %v2349, %v2300
    %2351 = vadd.xlane.f32.xlu0 %v2350
    %v2352 = vpop.xlane.xlu0 %2351
    %v2353 = vadd.f32 %v2301, %v2302
    %v2354 = vadd.f32 %v2353, %v2303
    %v2355 = vadd.f32 %v2354, %v2304
    %v2356 = vadd.f32 %v2355, %v2305
    %v2357 = vadd.f32 %v2356, %v2306
    %2358 = vadd.xlane.f32.xlu0 %v2357
    %v2359 = vpop.xlane.xlu0 %2358
    %v2360 = vadd.f32 %v2307, %v2308
    %v2361 = vadd.f32 %v2360, %v2309
    %v2362 = vadd.f32 %v2361, %v2310
    %v2363 = vadd.f32 %v2362, %v2311
    %v2364 = vadd.f32 %v2363, %v2312
    %2365 = vadd.xlane.f32.xlu0 %v2364
    %v2366 = vpop.xlane.xlu0 %2365
    %v2367 = vadd.f32 %v2313, %v2314
    %v2368 = vadd.f32 %v2367, %v2315
    %v2369 = vadd.f32 %v2368, %v2316
    %v2370 = vadd.f32 %v2369, %v2317
    %v2371 = vadd.f32 %v2370, %v2318
    %2372 = vadd.xlane.f32.xlu0 %v2371
    %v2373 = vpop.xlane.xlu0 %2372
    %v2374 = vadd.f32 %v2319, %v2320
    %v2375 = vadd.f32 %v2374, %v2321
    %v2376 = vadd.f32 %v2375, %v2322
    %v2377 = vadd.f32 %v2376, %v2323
    %v2378 = vadd.f32 %v2377, %v2324
    %2379 = vadd.xlane.f32.xlu0 %v2378
    %v2380 = vpop.xlane.xlu0 %2379
    %v2381 = vmul.f32 %v2227, 0.0013020834
    %v2382 = vmul.f32 %v2234, 0.0013020834
    %v2383 = vmul.f32 %v2241, 0.0013020834
    %v2384 = vmul.f32 %v2248, 0.0013020834
    %v2385 = vmul.f32 %v2255, 0.0013020834
    %v2386 = vmul.f32 %v2262, 0.0013020834
    %v2387 = vmul.f32 %v2269, 0.0013020834
    %v2388 = vmul.f32 %v2276, 0.0013020834
    %v2389 = vmul.f32 %v2331, 0.0013020834
    %v2390 = vmul.f32 %v2338, 0.0013020834
    %v2391 = vmul.f32 %v2345, 0.0013020834
    %v2392 = vmul.f32 %v2352, 0.0013020834
    %v2393 = vmul.f32 %v2359, 0.0013020834
    %v2394 = vmul.f32 %v2366, 0.0013020834
    %v2395 = vmul.f32 %v2373, 0.0013020834
    %v2396 = vmul.f32 %v2380, 0.0013020834
    %v2397 = vmul.f32 %v2381, %v2381
    %v2398 = vmul.f32 %v2382, %v2382
    %v2399 = vmul.f32 %v2383, %v2383
    %v2400 = vmul.f32 %v2384, %v2384
    %v2401 = vmul.f32 %v2385, %v2385
    %v2402 = vmul.f32 %v2386, %v2386
    %v2403 = vmul.f32 %v2387, %v2387
    %v2404 = vmul.f32 %v2388, %v2388
    %v2405 = vsub.f32 %v2389, %v2397
    %v2406 = vsub.f32 %v2390, %v2398
    %v2407 = vsub.f32 %v2391, %v2399
    %v2408 = vsub.f32 %v2392, %v2400
    %v2409 = vsub.f32 %v2393, %v2401
    %v2410 = vsub.f32 %v2394, %v2402
    %v2411 = vsub.f32 %v2395, %v2403
    %v2412 = vsub.f32 %v2396, %v2404
    %v2413 = vmax.f32 %v2405, 0.0
    %v2414 = vmax.f32 %v2406, 0.0
    %v2415 = vmax.f32 %v2407, 0.0
    %v2416 = vmax.f32 %v2408, 0.0
    %v2417 = vmax.f32 %v2409, 0.0
    %v2418 = vmax.f32 %v2410, 0.0
    %v2419 = vmax.f32 %v2411, 0.0
    %v2420 = vmax.f32 %v2412, 0.0
    %v2421 = vld [vmem:[%s8] sm:$0xff]
    %v2422 = vld [vmem:[%s8 + $0x8] sm:$0xff]
    %v2423 = vld [vmem:[%s8 + $0x10] sm:$0xff]
    %v2424 = vld [vmem:[%s8 + $0x18] sm:$0xff]
    %v2425 = vld [vmem:[%s8 + $0x20] sm:$0xff]
    %v2426 = vld [vmem:[%s8 + $0x28] sm:$0xff]
    %v2427 = vld [vmem:[%s8 + $0x30] sm:$0xff]
    %v2428 = vld [vmem:[%s8 + $0x38] sm:$0xff]
    %v2429 = vadd.f32 %v2413, 1e-05
    %v2430 = vadd.f32 %v2414, 1e-05
    %v2431 = vadd.f32 %v2415, 1e-05
    %v2432 = vadd.f32 %v2416, 1e-05
    %v2433 = vadd.f32 %v2417, 1e-05
    %v2434 = vadd.f32 %v2418, 1e-05
    %v2435 = vadd.f32 %v2419, 1e-05
    %v2436 = vadd.f32 %v2420, 1e-05
    %v2437 = vrsqrt.pop %v2429
    %v2438 = vmul.f32 %v2437, %v2429
    %v2439 = vmul.f32 %v2438, %v2437
    %v2440 = vmul.f32 0.5, %v2439
    %v2441 = vsub.f32 1.5, %v2440
    %v2442 = vmul.f32 %v2437, %v2441
    %vm2443 = vweird.f32 %v2429
    %vm2444 = vweird.f32 %v2437
    %vm2445 = vmor %vm2443, %vm2444
    %v2446 = vsel %vm2445, %v2437, %v2442
    %v2447 = vrsqrt.pop %v2430
    %v2448 = vmul.f32 %v2447, %v2430
    %v2449 = vmul.f32 %v2448, %v2447
    %v2450 = vmul.f32 0.5, %v2449
    %v2451 = vsub.f32 1.5, %v2450
    %v2452 = vmul.f32 %v2447, %v2451
    %vm2453 = vweird.f32 %v2430
    %vm2454 = vweird.f32 %v2447
    %vm2455 = vmor %vm2453, %vm2454
    %v2456 = vsel %vm2455, %v2447, %v2452
    %v2457 = vrsqrt.pop %v2431
    %v2458 = vmul.f32 %v2457, %v2431
    %v2459 = vmul.f32 %v2458, %v2457
    %v2460 = vmul.f32 0.5, %v2459
    %v2461 = vsub.f32 1.5, %v2460
    %v2462 = vmul.f32 %v2457, %v2461
    %vm2463 = vweird.f32 %v2431
    %vm2464 = vweird.f32 %v2457
    %vm2465 = vmor %vm2463, %vm2464
    %v2466 = vsel %vm2465, %v2457, %v2462
    %v2467 = vrsqrt.pop %v2432
    %v2468 = vmul.f32 %v2467, %v2432
    %v2469 = vmul.f32 %v2468, %v2467
    %v2470 = vmul.f32 0.5, %v2469
    %v2471 = vsub.f32 1.5, %v2470
    %v2472 = vmul.f32 %v2467, %v2471
    %vm2473 = vweird.f32 %v2432
    %vm2474 = vweird.f32 %v2467
    %vm2475 = vmor %vm2473, %vm2474
    %v2476 = vsel %vm2475, %v2467, %v2472
    %v2477 = vrsqrt.pop %v2433
    %v2478 = vmul.f32 %v2477, %v2433
    %v2479 = vmul.f32 %v2478, %v2477
    %v2480 = vmul.f32 0.5, %v2479
    %v2481 = vsub.f32 1.5, %v2480
    %v2482 = vmul.f32 %v2477, %v2481
    %vm2483 = vweird.f32 %v2433
    %vm2484 = vweird.f32 %v2477
    %vm2485 = vmor %vm2483, %vm2484
    %v2486 = vsel %vm2485, %v2477, %v2482
    %v2487 = vrsqrt.pop %v2434
    %v2488 = vmul.f32 %v2487, %v2434
    %v2489 = vmul.f32 %v2488, %v2487
    %v2490 = vmul.f32 0.5, %v2489
    %v2491 = vsub.f32 1.5, %v2490
    %v2492 = vmul.f32 %v2487, %v2491
    %vm2493 = vweird.f32 %v2434
    %vm2494 = vweird.f32 %v2487
    %vm2495 = vmor %vm2493, %vm2494
    %v2496 = vsel %vm2495, %v2487, %v2492
    %v2497 = vrsqrt.pop %v2435
    %v2498 = vmul.f32 %v2497, %v2435
    %v2499 = vmul.f32 %v2498, %v2497
    %v2500 = vmul.f32 0.5, %v2499
    %v2501 = vsub.f32 1.5, %v2500
    %v2502 = vmul.f32 %v2497, %v2501
    %vm2503 = vweird.f32 %v2435
    %vm2504 = vweird.f32 %v2497
    %vm2505 = vmor %vm2503, %vm2504
    %v2506 = vsel %vm2505, %v2497, %v2502
    %v2507 = vrsqrt.pop %v2436
    %v2508 = vmul.f32 %v2507, %v2436
    %v2509 = vmul.f32 %v2508, %v2507
    %v2510 = vmul.f32 0.5, %v2509
    %v2511 = vsub.f32 1.5, %v2510
    %v2512 = vmul.f32 %v2507, %v2511
    %vm2513 = vweird.f32 %v2436
    %vm2514 = vweird.f32 %v2507
    %vm2515 = vmor %vm2513, %vm2514
    %v2516 = vsel %vm2515, %v2507, %v2512
    %v2517 = vmul.f32 %v2421, %v2446
    %v2518 = vmul.f32 %v2422, %v2456
    %v2519 = vmul.f32 %v2423, %v2466
    %v2520 = vmul.f32 %v2424, %v2476
    %v2521 = vmul.f32 %v2425, %v2486
    %v2522 = vmul.f32 %v2426, %v2496
    %v2523 = vmul.f32 %v2427, %v2506
    %v2524 = vmul.f32 %v2428, %v2516
    %v2525 = vld [vmem:[%s9] sm:$0xff]
    %v2526 = vld [vmem:[%s9 + $0x8] sm:$0xff]
    %v2527 = vld [vmem:[%s9 + $0x10] sm:$0xff]
    %v2528 = vld [vmem:[%s9 + $0x18] sm:$0xff]
    %v2529 = vld [vmem:[%s9 + $0x20] sm:$0xff]
    %v2530 = vld [vmem:[%s9 + $0x28] sm:$0xff]
    %v2531 = vld [vmem:[%s9 + $0x30] sm:$0xff]
    %v2532 = vld [vmem:[%s9 + $0x38] sm:$0xff]
    %v2533 = vmul.f32 %v2381, %v2517
    %v2534 = vmul.f32 %v2382, %v2518
    %v2535 = vmul.f32 %v2383, %v2519
    %v2536 = vmul.f32 %v2384, %v2520
    %v2537 = vmul.f32 %v2385, %v2521
    %v2538 = vmul.f32 %v2386, %v2522
    %v2539 = vmul.f32 %v2387, %v2523
    %v2540 = vmul.f32 %v2388, %v2524
    %v2541 = vsub.f32 %v2525, %v2533
    %v2542 = vsub.f32 %v2526, %v2534
    %v2543 = vsub.f32 %v2527, %v2535
    %v2544 = vsub.f32 %v2528, %v2536
    %v2545 = vsub.f32 %v2529, %v2537
    %v2546 = vsub.f32 %v2530, %v2538
    %v2547 = vsub.f32 %v2531, %v2539
    %v2548 = vsub.f32 %v2532, %v2540
    %2550 = vset.pattern.permute.xlu0 0
    %2551 = vperm.xlu0 %2550, %v2517
    %v2552 = vpop.permute.xlu0 %2551
    %2555 = vset.pattern.permute.xlu0 0
    %2556 = vperm.xlu0 %2555, %v2518
    %v2557 = vpop.permute.xlu0 %2556
    %2560 = vset.pattern.permute.xlu0 0
    %2561 = vperm.xlu0 %2560, %v2519
    %v2562 = vpop.permute.xlu0 %2561
    %2565 = vset.pattern.permute.xlu0 0
    %2566 = vperm.xlu0 %2565, %v2520
    %v2567 = vpop.permute.xlu0 %2566
    %2570 = vset.pattern.permute.xlu0 0
    %2571 = vperm.xlu0 %2570, %v2521
    %v2572 = vpop.permute.xlu0 %2571
    %2575 = vset.pattern.permute.xlu0 0
    %2576 = vperm.xlu0 %2575, %v2522
    %v2577 = vpop.permute.xlu0 %2576
    %2580 = vset.pattern.permute.xlu0 0
    %2581 = vperm.xlu0 %2580, %v2523
    %v2582 = vpop.permute.xlu0 %2581
    %2585 = vset.pattern.permute.xlu0 0
    %2586 = vperm.xlu0 %2585, %v2524
    %v2587 = vpop.permute.xlu0 %2586
    %v2589 = vmul.f32 %v2057, %v2552
    %v2590 = vmul.f32 %v2086, %v2552
    %v2591 = vmul.f32 %v2115, %v2552
    %v2592 = vmul.f32 %v2144, %v2552
    %v2593 = vmul.f32 %v2173, %v2552
    %v2594 = vmul.f32 %v2202, %v2552
    %v2595 = vmul.f32 %v2059, %v2557
    %v2596 = vmul.f32 %v2088, %v2557
    %v2597 = vmul.f32 %v2117, %v2557
    %v2598 = vmul.f32 %v2146, %v2557
    %v2599 = vmul.f32 %v2175, %v2557
    %v2600 = vmul.f32 %v2204, %v2557
    %v2601 = vmul.f32 %v2062, %v2562
    %v2602 = vmul.f32 %v2091, %v2562
    %v2603 = vmul.f32 %v2120, %v2562
    %v2604 = vmul.f32 %v2149, %v2562
    %v2605 = vmul.f32 %v2178, %v2562
    %v2606 = vmul.f32 %v2207, %v2562
    %v2607 = vmul.f32 %v2064, %v2567
    %v2608 = vmul.f32 %v2093, %v2567
    %v2609 = vmul.f32 %v2122, %v2567
    %v2610 = vmul.f32 %v2151, %v2567
    %v2611 = vmul.f32 %v2180, %v2567
    %v2612 = vmul.f32 %v2209, %v2567
    %v2613 = vmul.f32 %v2067, %v2572
    %v2614 = vmul.f32 %v2096, %v2572
    %v2615 = vmul.f32 %v2125, %v2572
    %v2616 = vmul.f32 %v2154, %v2572
    %v2617 = vmul.f32 %v2183, %v2572
    %v2618 = vmul.f32 %v2212, %v2572
    %v2619 = vmul.f32 %v2069, %v2577
    %v2620 = vmul.f32 %v2098, %v2577
    %v2621 = vmul.f32 %v2127, %v2577
    %v2622 = vmul.f32 %v2156, %v2577
    %v2623 = vmul.f32 %v2185, %v2577
    %v2624 = vmul.f32 %v2214, %v2577
    %v2625 = vmul.f32 %v2072, %v2582
    %v2626 = vmul.f32 %v2101, %v2582
    %v2627 = vmul.f32 %v2130, %v2582
    %v2628 = vmul.f32 %v2159, %v2582
    %v2629 = vmul.f32 %v2188, %v2582
    %v2630 = vmul.f32 %v2217, %v2582
    %v2631 = vmul.f32 %v2074, %v2587
    %v2632 = vmul.f32 %v2103, %v2587
    %v2633 = vmul.f32 %v2132, %v2587
    %v2634 = vmul.f32 %v2161, %v2587
    %v2635 = vmul.f32 %v2190, %v2587
    %v2636 = vmul.f32 %v2219, %v2587
    %2638 = vset.pattern.permute.xlu0 0
    %2639 = vperm.xlu0 %2638, %v2541
    %v2640 = vpop.permute.xlu0 %2639
    %2643 = vset.pattern.permute.xlu0 0
    %2644 = vperm.xlu0 %2643, %v2542
    %v2645 = vpop.permute.xlu0 %2644
    %2648 = vset.pattern.permute.xlu0 0
    %2649 = vperm.xlu0 %2648, %v2543
    %v2650 = vpop.permute.xlu0 %2649
    %2653 = vset.pattern.permute.xlu0 0
    %2654 = vperm.xlu0 %2653, %v2544
    %v2655 = vpop.permute.xlu0 %2654
    %2658 = vset.pattern.permute.xlu0 0
    %2659 = vperm.xlu0 %2658, %v2545
    %v2660 = vpop.permute.xlu0 %2659
    %2663 = vset.pattern.permute.xlu0 0
    %2664 = vperm.xlu0 %2663, %v2546
    %v2665 = vpop.permute.xlu0 %2664
    %2668 = vset.pattern.permute.xlu0 0
    %2669 = vperm.xlu0 %2668, %v2547
    %v2670 = vpop.permute.xlu0 %2669
    %2673 = vset.pattern.permute.xlu0 0
    %2674 = vperm.xlu0 %2673, %v2548
    %v2675 = vpop.permute.xlu0 %2674
    %v2677 = vadd.f32 %v2589, %v2640
    %v2678 = vadd.f32 %v2590, %v2640
    %v2679 = vadd.f32 %v2591, %v2640
    %v2680 = vadd.f32 %v2592, %v2640
    %v2681 = vadd.f32 %v2593, %v2640
    %v2682 = vadd.f32 %v2594, %v2640
    %v2683 = vadd.f32 %v2595, %v2645
    %v2684 = vadd.f32 %v2596, %v2645
    %v2685 = vadd.f32 %v2597, %v2645
    %v2686 = vadd.f32 %v2598, %v2645
    %v2687 = vadd.f32 %v2599, %v2645
    %v2688 = vadd.f32 %v2600, %v2645
    %v2689 = vadd.f32 %v2601, %v2650
    %v2690 = vadd.f32 %v2602, %v2650
    %v2691 = vadd.f32 %v2603, %v2650
    %v2692 = vadd.f32 %v2604, %v2650
    %v2693 = vadd.f32 %v2605, %v2650
    %v2694 = vadd.f32 %v2606, %v2650
    %v2695 = vadd.f32 %v2607, %v2655
    %v2696 = vadd.f32 %v2608, %v2655
    %v2697 = vadd.f32 %v2609, %v2655
    %v2698 = vadd.f32 %v2610, %v2655
    %v2699 = vadd.f32 %v2611, %v2655
    %v2700 = vadd.f32 %v2612, %v2655
    %v2701 = vadd.f32 %v2613, %v2660
    %v2702 = vadd.f32 %v2614, %v2660
    %v2703 = vadd.f32 %v2615, %v2660
    %v2704 = vadd.f32 %v2616, %v2660
    %v2705 = vadd.f32 %v2617, %v2660
    %v2706 = vadd.f32 %v2618, %v2660
    %v2707 = vadd.f32 %v2619, %v2665
    %v2708 = vadd.f32 %v2620, %v2665
    %v2709 = vadd.f32 %v2621, %v2665
    %v2710 = vadd.f32 %v2622, %v2665
    %v2711 = vadd.f32 %v2623, %v2665
    %v2712 = vadd.f32 %v2624, %v2665
    %v2713 = vadd.f32 %v2625, %v2670
    %v2714 = vadd.f32 %v2626, %v2670
    %v2715 = vadd.f32 %v2627, %v2670
    %v2716 = vadd.f32 %v2628, %v2670
    %v2717 = vadd.f32 %v2629, %v2670
    %v2718 = vadd.f32 %v2630, %v2670
    %v2719 = vadd.f32 %v2631, %v2675
    %v2720 = vadd.f32 %v2632, %v2675
    %v2721 = vadd.f32 %v2633, %v2675
    %v2722 = vadd.f32 %v2634, %v2675
    %v2723 = vadd.f32 %v2635, %v2675
    %v2724 = vadd.f32 %v2636, %v2675
    %vm2725 = vcmp.ge.f32.partialorder %v2677, 0.0
    %vm2726 = vcmp.ge.f32.partialorder %v2678, 0.0
    %vm2727 = vcmp.ge.f32.partialorder %v2679, 0.0
    %vm2728 = vcmp.ge.f32.partialorder %v2680, 0.0
    %vm2729 = vcmp.ge.f32.partialorder %v2681, 0.0
    %vm2730 = vcmp.ge.f32.partialorder %v2682, 0.0
    %vm2731 = vcmp.ge.f32.partialorder %v2683, 0.0
    %vm2732 = vcmp.ge.f32.partialorder %v2684, 0.0
    %vm2733 = vcmp.ge.f32.partialorder %v2685, 0.0
    %vm2734 = vcmp.ge.f32.partialorder %v2686, 0.0
    %vm2735 = vcmp.ge.f32.partialorder %v2687, 0.0
    %vm2736 = vcmp.ge.f32.partialorder %v2688, 0.0
    %vm2737 = vcmp.ge.f32.partialorder %v2689, 0.0
    %vm2738 = vcmp.ge.f32.partialorder %v2690, 0.0
    %vm2739 = vcmp.ge.f32.partialorder %v2691, 0.0
    %vm2740 = vcmp.ge.f32.partialorder %v2692, 0.0
    %vm2741 = vcmp.ge.f32.partialorder %v2693, 0.0
    %vm2742 = vcmp.ge.f32.partialorder %v2694, 0.0
    %vm2743 = vcmp.ge.f32.partialorder %v2695, 0.0
    %vm2744 = vcmp.ge.f32.partialorder %v2696, 0.0
    %vm2745 = vcmp.ge.f32.partialorder %v2697, 0.0
    %vm2746 = vcmp.ge.f32.partialorder %v2698, 0.0
    %vm2747 = vcmp.ge.f32.partialorder %v2699, 0.0
    %vm2748 = vcmp.ge.f32.partialorder %v2700, 0.0
    %vm2749 = vcmp.ge.f32.partialorder %v2701, 0.0
    %vm2750 = vcmp.ge.f32.partialorder %v2702, 0.0
    %vm2751 = vcmp.ge.f32.partialorder %v2703, 0.0
    %vm2752 = vcmp.ge.f32.partialorder %v2704, 0.0
    %vm2753 = vcmp.ge.f32.partialorder %v2705, 0.0
    %vm2754 = vcmp.ge.f32.partialorder %v2706, 0.0
    %vm2755 = vcmp.ge.f32.partialorder %v2707, 0.0
    %vm2756 = vcmp.ge.f32.partialorder %v2708, 0.0
    %vm2757 = vcmp.ge.f32.partialorder %v2709, 0.0
    %vm2758 = vcmp.ge.f32.partialorder %v2710, 0.0
    %vm2759 = vcmp.ge.f32.partialorder %v2711, 0.0
    %vm2760 = vcmp.ge.f32.partialorder %v2712, 0.0
    %vm2761 = vcmp.ge.f32.partialorder %v2713, 0.0
    %vm2762 = vcmp.ge.f32.partialorder %v2714, 0.0
    %vm2763 = vcmp.ge.f32.partialorder %v2715, 0.0
    %vm2764 = vcmp.ge.f32.partialorder %v2716, 0.0
    %vm2765 = vcmp.ge.f32.partialorder %v2717, 0.0
    %vm2766 = vcmp.ge.f32.partialorder %v2718, 0.0
    %vm2767 = vcmp.ge.f32.partialorder %v2719, 0.0
    %vm2768 = vcmp.ge.f32.partialorder %v2720, 0.0
    %vm2769 = vcmp.ge.f32.partialorder %v2721, 0.0
    %vm2770 = vcmp.ge.f32.partialorder %v2722, 0.0
    %vm2771 = vcmp.ge.f32.partialorder %v2723, 0.0
    %vm2772 = vcmp.ge.f32.partialorder %v2724, 0.0
    %v2773 = vmul.f32 %v2677, 0.1
    %v2774 = vmul.f32 %v2678, 0.1
    %v2775 = vmul.f32 %v2679, 0.1
    %v2776 = vmul.f32 %v2680, 0.1
    %v2777 = vmul.f32 %v2681, 0.1
    %v2778 = vmul.f32 %v2682, 0.1
    %v2779 = vmul.f32 %v2683, 0.1
    %v2780 = vmul.f32 %v2684, 0.1
    %v2781 = vmul.f32 %v2685, 0.1
    %v2782 = vmul.f32 %v2686, 0.1
    %v2783 = vmul.f32 %v2687, 0.1
    %v2784 = vmul.f32 %v2688, 0.1
    %v2785 = vmul.f32 %v2689, 0.1
    %v2786 = vmul.f32 %v2690, 0.1
    %v2787 = vmul.f32 %v2691, 0.1
    %v2788 = vmul.f32 %v2692, 0.1
    %v2789 = vmul.f32 %v2693, 0.1
    %v2790 = vmul.f32 %v2694, 0.1
    %v2791 = vmul.f32 %v2695, 0.1
    %v2792 = vmul.f32 %v2696, 0.1
    %v2793 = vmul.f32 %v2697, 0.1
    %v2794 = vmul.f32 %v2698, 0.1
    %v2795 = vmul.f32 %v2699, 0.1
    %v2796 = vmul.f32 %v2700, 0.1
    %v2797 = vmul.f32 %v2701, 0.1
    %v2798 = vmul.f32 %v2702, 0.1
    %v2799 = vmul.f32 %v2703, 0.1
    %v2800 = vmul.f32 %v2704, 0.1
    %v2801 = vmul.f32 %v2705, 0.1
    %v2802 = vmul.f32 %v2706, 0.1
    %v2803 = vmul.f32 %v2707, 0.1
    %v2804 = vmul.f32 %v2708, 0.1
    %v2805 = vmul.f32 %v2709, 0.1
    %v2806 = vmul.f32 %v2710, 0.1
    %v2807 = vmul.f32 %v2711, 0.1
    %v2808 = vmul.f32 %v2712, 0.1
    %v2809 = vmul.f32 %v2713, 0.1
    %v2810 = vmul.f32 %v2714, 0.1
    %v2811 = vmul.f32 %v2715, 0.1
    %v2812 = vmul.f32 %v2716, 0.1
    %v2813 = vmul.f32 %v2717, 0.1
    %v2814 = vmul.f32 %v2718, 0.1
    %v2815 = vmul.f32 %v2719, 0.1
    %v2816 = vmul.f32 %v2720, 0.1
    %v2817 = vmul.f32 %v2721, 0.1
    %v2818 = vmul.f32 %v2722, 0.1
    %v2819 = vmul.f32 %v2723, 0.1
    %v2820 = vmul.f32 %v2724, 0.1
    %v2821 = vsel %vm2725, %v2677, %v2773
    %v2822 = vsel %vm2726, %v2678, %v2774
    %v2823 = vsel %vm2727, %v2679, %v2775
    %v2824 = vsel %vm2728, %v2680, %v2776
    %v2825 = vsel %vm2729, %v2681, %v2777
    %v2826 = vsel %vm2730, %v2682, %v2778
    %v2827 = vsel %vm2731, %v2683, %v2779
    %v2828 = vsel %vm2732, %v2684, %v2780
    %v2829 = vsel %vm2733, %v2685, %v2781
    %v2830 = vsel %vm2734, %v2686, %v2782
    %v2831 = vsel %vm2735, %v2687, %v2783
    %v2832 = vsel %vm2736, %v2688, %v2784
    %v2833 = vsel %vm2737, %v2689, %v2785
    %v2834 = vsel %vm2738, %v2690, %v2786
    %v2835 = vsel %vm2739, %v2691, %v2787
    %v2836 = vsel %vm2740, %v2692, %v2788
    %v2837 = vsel %vm2741, %v2693, %v2789
    %v2838 = vsel %vm2742, %v2694, %v2790
    %v2839 = vsel %vm2743, %v2695, %v2791
    %v2840 = vsel %vm2744, %v2696, %v2792
    %v2841 = vsel %vm2745, %v2697, %v2793
    %v2842 = vsel %vm2746, %v2698, %v2794
    %v2843 = vsel %vm2747, %v2699, %v2795
    %v2844 = vsel %vm2748, %v2700, %v2796
    %v2845 = vsel %vm2749, %v2701, %v2797
    %v2846 = vsel %vm2750, %v2702, %v2798
    %v2847 = vsel %vm2751, %v2703, %v2799
    %v2848 = vsel %vm2752, %v2704, %v2800
    %v2849 = vsel %vm2753, %v2705, %v2801
    %v2850 = vsel %vm2754, %v2706, %v2802
    %v2851 = vsel %vm2755, %v2707, %v2803
    %v2852 = vsel %vm2756, %v2708, %v2804
    %v2853 = vsel %vm2757, %v2709, %v2805
    %v2854 = vsel %vm2758, %v2710, %v2806
    %v2855 = vsel %vm2759, %v2711, %v2807
    %v2856 = vsel %vm2760, %v2712, %v2808
    %v2857 = vsel %vm2761, %v2713, %v2809
    %v2858 = vsel %vm2762, %v2714, %v2810
    %v2859 = vsel %vm2763, %v2715, %v2811
    %v2860 = vsel %vm2764, %v2716, %v2812
    %v2861 = vsel %vm2765, %v2717, %v2813
    %v2862 = vsel %vm2766, %v2718, %v2814
    %v2863 = vsel %vm2767, %v2719, %v2815
    %v2864 = vsel %vm2768, %v2720, %v2816
    %v2865 = vsel %vm2769, %v2721, %v2817
    %v2866 = vsel %vm2770, %v2722, %v2818
    %v2867 = vsel %vm2771, %v2723, %v2819
    %v2868 = vsel %vm2772, %v2724, %v2820
    %v2869 = vld [vmem:[%s10] sm:$0xf]
    %v2870 = vld [vmem:[%s10 + $0x4] sm:$0xf]
    %v2871 = vld [vmem:[%s10 + $0x8] sm:$0xf]
    %v2872 = vld [vmem:[%s10 + $0xc] sm:$0xf]
    %v2873 = vld [vmem:[%s10 + $0x10] sm:$0xf]
    %v2874 = vld [vmem:[%s10 + $0x14] sm:$0xf]
    %v2875 = vld [vmem:[%s10 + $0x18] sm:$0xf]
    %v2876 = vld [vmem:[%s10 + $0x1c] sm:$0xf]
    %v2877 = vpack.c.bf16 %v2827, %v2821
    %v2878 = vpack.c.bf16 %v2828, %v2822
    %v2879 = vpack.c.bf16 %v2829, %v2823
    %v2880 = vpack.c.bf16 %v2830, %v2824
    %v2881 = vpack.c.bf16 %v2831, %v2825
    %v2882 = vpack.c.bf16 %v2832, %v2826
    %v2883 = vpack.c.bf16 %v2839, %v2833
    %v2884 = vpack.c.bf16 %v2840, %v2834
    %v2885 = vpack.c.bf16 %v2841, %v2835
    %v2886 = vpack.c.bf16 %v2842, %v2836
    %v2887 = vpack.c.bf16 %v2843, %v2837
    %v2888 = vpack.c.bf16 %v2844, %v2838
    %v2889 = vpack.c.bf16 %v2851, %v2845
    %v2890 = vpack.c.bf16 %v2852, %v2846
    %v2891 = vpack.c.bf16 %v2853, %v2847
    %v2892 = vpack.c.bf16 %v2854, %v2848
    %v2893 = vpack.c.bf16 %v2855, %v2849
    %v2894 = vpack.c.bf16 %v2856, %v2850
    %v2895 = vpack.c.bf16 %v2863, %v2857
    %v2896 = vpack.c.bf16 %v2864, %v2858
    %v2897 = vpack.c.bf16 %v2865, %v2859
    %v2898 = vpack.c.bf16 %v2866, %v2860
    %v2899 = vpack.c.bf16 %v2867, %v2861
    %v2900 = vpack.c.bf16 %v2868, %v2862
    %v2909 = vunpack.c.l.b16 %v2869
    %v2910 = vunpack.c.l.b16 %v2870
    %v2911 = vunpack.c.l.b16 %v2871
    %v2912 = vunpack.c.l.b16 %v2872
    %v2913 = vunpack.c.l.b16 %v2873
    %v2914 = vunpack.c.l.b16 %v2874
    %v2915 = vunpack.c.l.b16 %v2875
    %v2916 = vunpack.c.l.b16 %v2876
    %v2917 = vpack.c.b16 %v2910, %v2909
    %v2918 = vpack.c.b16 %v2912, %v2911
    %v2919 = vpack.c.b16 %v2914, %v2913
    %v2920 = vpack.c.b16 %v2916, %v2915
    %vm2921 = vcmask 523264
    %v2923 = vsel %vm2921, %v2917, 0
    %v2926 = vsel %vm2921, %v2918, 0
    %v2929 = vsel %vm2921, %v2919, 0
    %v2932 = vsel %vm2921, %v2920, 0
    %2934 = vmatpush.bf16.msra.mxu0 0
    %2935 = vmatpush.bf16.msra.mxu0 0
    %2936 = vmatpush.bf16.msra.mxu0 0
    %2937 = vmatpush.bf16.msra.mxu0 0
    %2938 = vmatpush.bf16.msra.mxu0 %v2895
    %2939 = vmatpush.bf16.msra.mxu0 %v2889
    %2940 = vmatpush.bf16.msra.mxu0 %v2883
    %2941 = vmatpush.bf16.msra.mxu0 %v2877
    %2942 = vmatmul.bf16.gmra.mxu0 %v2923
    %v2943 = vpop.f32.mrf.mxu0
    %v2944 = vadd.f32 0.0, %v2943
    %v2945 = vpop.f32.mrf.mxu0
    %v2946 = vadd.f32 0.0, %v2945
    %2947 = vmatmul.bf16.gmra.mxu0 %v2926
    %v2948 = vpop.f32.mrf.mxu0
    %v2949 = vadd.f32 0.0, %v2948
    %v2950 = vpop.f32.mrf.mxu0
    %v2951 = vadd.f32 0.0, %v2950
    %2952 = vmatmul.bf16.gmra.mxu0 %v2929
    %v2953 = vpop.f32.mrf.mxu0
    %v2954 = vadd.f32 0.0, %v2953
    %v2955 = vpop.f32.mrf.mxu0
    %v2956 = vadd.f32 0.0, %v2955
    %2957 = vmatmul.bf16.gmra.mxu0 %v2932
    %v2958 = vpop.f32.mrf.mxu0
    %v2959 = vadd.f32 0.0, %v2958
    %v2960 = vpop.f32.mrf.mxu0
    %v2961 = vadd.f32 0.0, %v2960
    %2962 = vdwg.mxu0
    %2963 = vmatpush.bf16.msra.mxu0 0
    %2964 = vmatpush.bf16.msra.mxu0 0
    %2965 = vmatpush.bf16.msra.mxu0 0
    %2966 = vmatpush.bf16.msra.mxu0 0
    %2967 = vmatpush.bf16.msra.mxu0 %v2896
    %2968 = vmatpush.bf16.msra.mxu0 %v2890
    %2969 = vmatpush.bf16.msra.mxu0 %v2884
    %2970 = vmatpush.bf16.msra.mxu0 %v2878
    %2971 = vmatmul.bf16.gmra.mxu0 %v2923
    %v2972 = vpop.f32.mrf.mxu0
    %v2973 = vadd.f32 0.0, %v2972
    %v2974 = vpop.f32.mrf.mxu0
    %v2975 = vadd.f32 0.0, %v2974
    %2976 = vmatmul.bf16.gmra.mxu0 %v2926
    %v2977 = vpop.f32.mrf.mxu0
    %v2978 = vadd.f32 0.0, %v2977
    %v2979 = vpop.f32.mrf.mxu0
    %v2980 = vadd.f32 0.0, %v2979
    %2981 = vmatmul.bf16.gmra.mxu0 %v2929
    %v2982 = vpop.f32.mrf.mxu0
    %v2983 = vadd.f32 0.0, %v2982
    %v2984 = vpop.f32.mrf.mxu0
    %v2985 = vadd.f32 0.0, %v2984
    %2986 = vmatmul.bf16.gmra.mxu0 %v2932
    %v2987 = vpop.f32.mrf.mxu0
    %v2988 = vadd.f32 0.0, %v2987
    %v2989 = vpop.f32.mrf.mxu0
    %v2990 = vadd.f32 0.0, %v2989
    %2991 = vdwg.mxu0
    %2992 = vmatpush.bf16.msra.mxu0 0
    %2993 = vmatpush.bf16.msra.mxu0 0
    %2994 = vmatpush.bf16.msra.mxu0 0
    %2995 = vmatpush.bf16.msra.mxu0 0
    %2996 = vmatpush.bf16.msra.mxu0 %v2897
    %2997 = vmatpush.bf16.msra.mxu0 %v2891
    %2998 = vmatpush.bf16.msra.mxu0 %v2885
    %2999 = vmatpush.bf16.msra.mxu0 %v2879
    %3000 = vmatmul.bf16.gmra.mxu0 %v2923
    %v3001 = vpop.f32.mrf.mxu0
    %v3002 = vadd.f32 0.0, %v3001
    %v3003 = vpop.f32.mrf.mxu0
    %v3004 = vadd.f32 0.0, %v3003
    %3005 = vmatmul.bf16.gmra.mxu0 %v2926
    %v3006 = vpop.f32.mrf.mxu0
    %v3007 = vadd.f32 0.0, %v3006
    %v3008 = vpop.f32.mrf.mxu0
    %v3009 = vadd.f32 0.0, %v3008
    %3010 = vmatmul.bf16.gmra.mxu0 %v2929
    %v3011 = vpop.f32.mrf.mxu0
    %v3012 = vadd.f32 0.0, %v3011
    %v3013 = vpop.f32.mrf.mxu0
    %v3014 = vadd.f32 0.0, %v3013
    %3015 = vmatmul.bf16.gmra.mxu0 %v2932
    %v3016 = vpop.f32.mrf.mxu0
    %v3017 = vadd.f32 0.0, %v3016
    %v3018 = vpop.f32.mrf.mxu0
    %v3019 = vadd.f32 0.0, %v3018
    %3020 = vdwg.mxu0
    %3021 = vmatpush.bf16.msra.mxu0 0
    %3022 = vmatpush.bf16.msra.mxu0 0
    %3023 = vmatpush.bf16.msra.mxu0 0
    %3024 = vmatpush.bf16.msra.mxu0 0
    %3025 = vmatpush.bf16.msra.mxu0 %v2898
    %3026 = vmatpush.bf16.msra.mxu0 %v2892
    %3027 = vmatpush.bf16.msra.mxu0 %v2886
    %3028 = vmatpush.bf16.msra.mxu0 %v2880
    %3029 = vmatmul.bf16.gmra.mxu0 %v2923
    %v3030 = vpop.f32.mrf.mxu0
    %v3031 = vadd.f32 0.0, %v3030
    %v3032 = vpop.f32.mrf.mxu0
    %v3033 = vadd.f32 0.0, %v3032
    %3034 = vmatmul.bf16.gmra.mxu0 %v2926
    %v3035 = vpop.f32.mrf.mxu0
    %v3036 = vadd.f32 0.0, %v3035
    %v3037 = vpop.f32.mrf.mxu0
    %v3038 = vadd.f32 0.0, %v3037
    %3039 = vmatmul.bf16.gmra.mxu0 %v2929
    %v3040 = vpop.f32.mrf.mxu0
    %v3041 = vadd.f32 0.0, %v3040
    %v3042 = vpop.f32.mrf.mxu0
    %v3043 = vadd.f32 0.0, %v3042
    %3044 = vmatmul.bf16.gmra.mxu0 %v2932
    %v3045 = vpop.f32.mrf.mxu0
    %v3046 = vadd.f32 0.0, %v3045
    %v3047 = vpop.f32.mrf.mxu0
    %v3048 = vadd.f32 0.0, %v3047
    %3049 = vdwg.mxu0
    %3050 = vmatpush.bf16.msra.mxu0 0
    %3051 = vmatpush.bf16.msra.mxu0 0
    %3052 = vmatpush.bf16.msra.mxu0 0
    %3053 = vmatpush.bf16.msra.mxu0 0
    %3054 = vmatpush.bf16.msra.mxu0 %v2899
    %3055 = vmatpush.bf16.msra.mxu0 %v2893
    %3056 = vmatpush.bf16.msra.mxu0 %v2887
    %3057 = vmatpush.bf16.msra.mxu0 %v2881
    %3058 = vmatmul.bf16.gmra.mxu0 %v2923
    %v3059 = vpop.f32.mrf.mxu0
    %v3060 = vadd.f32 0.0, %v3059
    %v3061 = vpop.f32.mrf.mxu0
    %v3062 = vadd.f32 0.0, %v3061
    %3063 = vmatmul.bf16.gmra.mxu0 %v2926
    %v3064 = vpop.f32.mrf.mxu0
    %v3065 = vadd.f32 0.0, %v3064
    %v3066 = vpop.f32.mrf.mxu0
    %v3067 = vadd.f32 0.0, %v3066
    %3068 = vmatmul.bf16.gmra.mxu0 %v2929
    %v3069 = vpop.f32.mrf.mxu0
    %v3070 = vadd.f32 0.0, %v3069
    %v3071 = vpop.f32.mrf.mxu0
    %v3072 = vadd.f32 0.0, %v3071
    %3073 = vmatmul.bf16.gmra.mxu0 %v2932
    %v3074 = vpop.f32.mrf.mxu0
    %v3075 = vadd.f32 0.0, %v3074
    %v3076 = vpop.f32.mrf.mxu0
    %v3077 = vadd.f32 0.0, %v3076
    %3078 = vdwg.mxu0
    %3079 = vmatpush.bf16.msra.mxu0 0
    %3080 = vmatpush.bf16.msra.mxu0 0
    %3081 = vmatpush.bf16.msra.mxu0 0
    %3082 = vmatpush.bf16.msra.mxu0 0
    %3083 = vmatpush.bf16.msra.mxu0 %v2900
    %3084 = vmatpush.bf16.msra.mxu0 %v2894
    %3085 = vmatpush.bf16.msra.mxu0 %v2888
    %3086 = vmatpush.bf16.msra.mxu0 %v2882
    %3087 = vmatmul.bf16.gmra.mxu0 %v2923
    %v3088 = vpop.f32.mrf.mxu0
    %v3089 = vadd.f32 0.0, %v3088
    %v3090 = vpop.f32.mrf.mxu0
    %v3091 = vadd.f32 0.0, %v3090
    %3092 = vmatmul.bf16.gmra.mxu0 %v2926
    %v3093 = vpop.f32.mrf.mxu0
    %v3094 = vadd.f32 0.0, %v3093
    %v3095 = vpop.f32.mrf.mxu0
    %v3096 = vadd.f32 0.0, %v3095
    %3097 = vmatmul.bf16.gmra.mxu0 %v2929
    %v3098 = vpop.f32.mrf.mxu0
    %v3099 = vadd.f32 0.0, %v3098
    %v3100 = vpop.f32.mrf.mxu0
    %v3101 = vadd.f32 0.0, %v3100
    %3102 = vmatmul.bf16.gmra.mxu0 %v2932
    %v3103 = vpop.f32.mrf.mxu0
    %v3104 = vadd.f32 0.0, %v3103
    %v3105 = vpop.f32.mrf.mxu0
    %v3106 = vadd.f32 0.0, %v3105
    %3107 = vdwg.mxu0
    %v3108 = vadd.f32 %v2944, %v2973
    %v3109 = vadd.f32 %v3108, %v3002
    %v3110 = vadd.f32 %v3109, %v3031
    %v3111 = vadd.f32 %v3110, %v3060
    %v3112 = vadd.f32 %v3111, %v3089
    %3113 = vadd.xlane.f32.xlu0 %v3112
    %v3114 = vpop.xlane.xlu0 %3113
    %v3115 = vadd.f32 %v2946, %v2975
    %v3116 = vadd.f32 %v3115, %v3004
    %v3117 = vadd.f32 %v3116, %v3033
    %v3118 = vadd.f32 %v3117, %v3062
    %v3119 = vadd.f32 %v3118, %v3091
    %3120 = vadd.xlane.f32.xlu0 %v3119
    %v3121 = vpop.xlane.xlu0 %3120
    %v3122 = vadd.f32 %v2949, %v2978
    %v3123 = vadd.f32 %v3122, %v3007
    %v3124 = vadd.f32 %v3123, %v3036
    %v3125 = vadd.f32 %v3124, %v3065
    %v3126 = vadd.f32 %v3125, %v3094
    %3127 = vadd.xlane.f32.xlu0 %v3126
    %v3128 = vpop.xlane.xlu0 %3127
    %v3129 = vadd.f32 %v2951, %v2980
    %v3130 = vadd.f32 %v3129, %v3009
    %v3131 = vadd.f32 %v3130, %v3038
    %v3132 = vadd.f32 %v3131, %v3067
    %v3133 = vadd.f32 %v3132, %v3096
    %3134 = vadd.xlane.f32.xlu0 %v3133
    %v3135 = vpop.xlane.xlu0 %3134
    %v3136 = vadd.f32 %v2954, %v2983
    %v3137 = vadd.f32 %v3136, %v3012
    %v3138 = vadd.f32 %v3137, %v3041
    %v3139 = vadd.f32 %v3138, %v3070
    %v3140 = vadd.f32 %v3139, %v3099
    %3141 = vadd.xlane.f32.xlu0 %v3140
    %v3142 = vpop.xlane.xlu0 %3141
    %v3143 = vadd.f32 %v2956, %v2985
    %v3144 = vadd.f32 %v3143, %v3014
    %v3145 = vadd.f32 %v3144, %v3043
    %v3146 = vadd.f32 %v3145, %v3072
    %v3147 = vadd.f32 %v3146, %v3101
    %3148 = vadd.xlane.f32.xlu0 %v3147
    %v3149 = vpop.xlane.xlu0 %3148
    %v3150 = vadd.f32 %v2959, %v2988
    %v3151 = vadd.f32 %v3150, %v3017
    %v3152 = vadd.f32 %v3151, %v3046
    %v3153 = vadd.f32 %v3152, %v3075
    %v3154 = vadd.f32 %v3153, %v3104
    %3155 = vadd.xlane.f32.xlu0 %v3154
    %v3156 = vpop.xlane.xlu0 %3155
    %v3157 = vadd.f32 %v2961, %v2990
    %v3158 = vadd.f32 %v3157, %v3019
    %v3159 = vadd.f32 %v3158, %v3048
    %v3160 = vadd.f32 %v3159, %v3077
    %v3161 = vadd.f32 %v3160, %v3106
    %3162 = vadd.xlane.f32.xlu0 %v3161
    %v3163 = vpop.xlane.xlu0 %3162
    %v3164 = vmul.f32 %v2944, %v2944
    %v3165 = vmul.f32 %v2973, %v2973
    %v3166 = vmul.f32 %v3002, %v3002
    %v3167 = vmul.f32 %v3031, %v3031
    %v3168 = vmul.f32 %v3060, %v3060
    %v3169 = vmul.f32 %v3089, %v3089
    %v3170 = vmul.f32 %v2946, %v2946
    %v3171 = vmul.f32 %v2975, %v2975
    %v3172 = vmul.f32 %v3004, %v3004
    %v3173 = vmul.f32 %v3033, %v3033
    %v3174 = vmul.f32 %v3062, %v3062
    %v3175 = vmul.f32 %v3091, %v3091
    %v3176 = vmul.f32 %v2949, %v2949
    %v3177 = vmul.f32 %v2978, %v2978
    %v3178 = vmul.f32 %v3007, %v3007
    %v3179 = vmul.f32 %v3036, %v3036
    %v3180 = vmul.f32 %v3065, %v3065
    %v3181 = vmul.f32 %v3094, %v3094
    %v3182 = vmul.f32 %v2951, %v2951
    %v3183 = vmul.f32 %v2980, %v2980
    %v3184 = vmul.f32 %v3009, %v3009
    %v3185 = vmul.f32 %v3038, %v3038
    %v3186 = vmul.f32 %v3067, %v3067
    %v3187 = vmul.f32 %v3096, %v3096
    %v3188 = vmul.f32 %v2954, %v2954
    %v3189 = vmul.f32 %v2983, %v2983
    %v3190 = vmul.f32 %v3012, %v3012
    %v3191 = vmul.f32 %v3041, %v3041
    %v3192 = vmul.f32 %v3070, %v3070
    %v3193 = vmul.f32 %v3099, %v3099
    %v3194 = vmul.f32 %v2956, %v2956
    %v3195 = vmul.f32 %v2985, %v2985
    %v3196 = vmul.f32 %v3014, %v3014
    %v3197 = vmul.f32 %v3043, %v3043
    %v3198 = vmul.f32 %v3072, %v3072
    %v3199 = vmul.f32 %v3101, %v3101
    %v3200 = vmul.f32 %v2959, %v2959
    %v3201 = vmul.f32 %v2988, %v2988
    %v3202 = vmul.f32 %v3017, %v3017
    %v3203 = vmul.f32 %v3046, %v3046
    %v3204 = vmul.f32 %v3075, %v3075
    %v3205 = vmul.f32 %v3104, %v3104
    %v3206 = vmul.f32 %v2961, %v2961
    %v3207 = vmul.f32 %v2990, %v2990
    %v3208 = vmul.f32 %v3019, %v3019
    %v3209 = vmul.f32 %v3048, %v3048
    %v3210 = vmul.f32 %v3077, %v3077
    %v3211 = vmul.f32 %v3106, %v3106
    %v3212 = vadd.f32 %v3164, %v3165
    %v3213 = vadd.f32 %v3212, %v3166
    %v3214 = vadd.f32 %v3213, %v3167
    %v3215 = vadd.f32 %v3214, %v3168
    %v3216 = vadd.f32 %v3215, %v3169
    %3217 = vadd.xlane.f32.xlu0 %v3216
    %v3218 = vpop.xlane.xlu0 %3217
    %v3219 = vadd.f32 %v3170, %v3171
    %v3220 = vadd.f32 %v3219, %v3172
    %v3221 = vadd.f32 %v3220, %v3173
    %v3222 = vadd.f32 %v3221, %v3174
    %v3223 = vadd.f32 %v3222, %v3175
    %3224 = vadd.xlane.f32.xlu0 %v3223
    %v3225 = vpop.xlane.xlu0 %3224
    %v3226 = vadd.f32 %v3176, %v3177
    %v3227 = vadd.f32 %v3226, %v3178
    %v3228 = vadd.f32 %v3227, %v3179
    %v3229 = vadd.f32 %v3228, %v3180
    %v3230 = vadd.f32 %v3229, %v3181
    %3231 = vadd.xlane.f32.xlu0 %v3230
    %v3232 = vpop.xlane.xlu0 %3231
    %v3233 = vadd.f32 %v3182, %v3183
    %v3234 = vadd.f32 %v3233, %v3184
    %v3235 = vadd.f32 %v3234, %v3185
    %v3236 = vadd.f32 %v3235, %v3186
    %v3237 = vadd.f32 %v3236, %v3187
    %3238 = vadd.xlane.f32.xlu0 %v3237
    %v3239 = vpop.xlane.xlu0 %3238
    %v3240 = vadd.f32 %v3188, %v3189
    %v3241 = vadd.f32 %v3240, %v3190
    %v3242 = vadd.f32 %v3241, %v3191
    %v3243 = vadd.f32 %v3242, %v3192
    %v3244 = vadd.f32 %v3243, %v3193
    %3245 = vadd.xlane.f32.xlu0 %v3244
    %v3246 = vpop.xlane.xlu0 %3245
    %v3247 = vadd.f32 %v3194, %v3195
    %v3248 = vadd.f32 %v3247, %v3196
    %v3249 = vadd.f32 %v3248, %v3197
    %v3250 = vadd.f32 %v3249, %v3198
    %v3251 = vadd.f32 %v3250, %v3199
    %3252 = vadd.xlane.f32.xlu0 %v3251
    %v3253 = vpop.xlane.xlu0 %3252
    %v3254 = vadd.f32 %v3200, %v3201
    %v3255 = vadd.f32 %v3254, %v3202
    %v3256 = vadd.f32 %v3255, %v3203
    %v3257 = vadd.f32 %v3256, %v3204
    %v3258 = vadd.f32 %v3257, %v3205
    %3259 = vadd.xlane.f32.xlu0 %v3258
    %v3260 = vpop.xlane.xlu0 %3259
    %v3261 = vadd.f32 %v3206, %v3207
    %v3262 = vadd.f32 %v3261, %v3208
    %v3263 = vadd.f32 %v3262, %v3209
    %v3264 = vadd.f32 %v3263, %v3210
    %v3265 = vadd.f32 %v3264, %v3211
    %3266 = vadd.xlane.f32.xlu0 %v3265
    %v3267 = vpop.xlane.xlu0 %3266
    %v3268 = vmul.f32 %v3114, 0.0013020834
    %v3269 = vmul.f32 %v3121, 0.0013020834
    %v3270 = vmul.f32 %v3128, 0.0013020834
    %v3271 = vmul.f32 %v3135, 0.0013020834
    %v3272 = vmul.f32 %v3142, 0.0013020834
    %v3273 = vmul.f32 %v3149, 0.0013020834
    %v3274 = vmul.f32 %v3156, 0.0013020834
    %v3275 = vmul.f32 %v3163, 0.0013020834
    %v3276 = vmul.f32 %v3218, 0.0013020834
    %v3277 = vmul.f32 %v3225, 0.0013020834
    %v3278 = vmul.f32 %v3232, 0.0013020834
    %v3279 = vmul.f32 %v3239, 0.0013020834
    %v3280 = vmul.f32 %v3246, 0.0013020834
    %v3281 = vmul.f32 %v3253, 0.0013020834
    %v3282 = vmul.f32 %v3260, 0.0013020834
    %v3283 = vmul.f32 %v3267, 0.0013020834
    %v3284 = vmul.f32 %v3268, %v3268
    %v3285 = vmul.f32 %v3269, %v3269
    %v3286 = vmul.f32 %v3270, %v3270
    %v3287 = vmul.f32 %v3271, %v3271
    %v3288 = vmul.f32 %v3272, %v3272
    %v3289 = vmul.f32 %v3273, %v3273
    %v3290 = vmul.f32 %v3274, %v3274
    %v3291 = vmul.f32 %v3275, %v3275
    %v3292 = vsub.f32 %v3276, %v3284
    %v3293 = vsub.f32 %v3277, %v3285
    %v3294 = vsub.f32 %v3278, %v3286
    %v3295 = vsub.f32 %v3279, %v3287
    %v3296 = vsub.f32 %v3280, %v3288
    %v3297 = vsub.f32 %v3281, %v3289
    %v3298 = vsub.f32 %v3282, %v3290
    %v3299 = vsub.f32 %v3283, %v3291
    %v3300 = vmax.f32 %v3292, 0.0
    %v3301 = vmax.f32 %v3293, 0.0
    %v3302 = vmax.f32 %v3294, 0.0
    %v3303 = vmax.f32 %v3295, 0.0
    %v3304 = vmax.f32 %v3296, 0.0
    %v3305 = vmax.f32 %v3297, 0.0
    %v3306 = vmax.f32 %v3298, 0.0
    %v3307 = vmax.f32 %v3299, 0.0
    %v3308 = vld [vmem:[%s11] sm:$0xff]
    %v3309 = vld [vmem:[%s11 + $0x8] sm:$0xff]
    %v3310 = vld [vmem:[%s11 + $0x10] sm:$0xff]
    %v3311 = vld [vmem:[%s11 + $0x18] sm:$0xff]
    %v3312 = vld [vmem:[%s11 + $0x20] sm:$0xff]
    %v3313 = vld [vmem:[%s11 + $0x28] sm:$0xff]
    %v3314 = vld [vmem:[%s11 + $0x30] sm:$0xff]
    %v3315 = vld [vmem:[%s11 + $0x38] sm:$0xff]
    %v3316 = vadd.f32 %v3300, 1e-05
    %v3317 = vadd.f32 %v3301, 1e-05
    %v3318 = vadd.f32 %v3302, 1e-05
    %v3319 = vadd.f32 %v3303, 1e-05
    %v3320 = vadd.f32 %v3304, 1e-05
    %v3321 = vadd.f32 %v3305, 1e-05
    %v3322 = vadd.f32 %v3306, 1e-05
    %v3323 = vadd.f32 %v3307, 1e-05
    %v3324 = vrsqrt.pop %v3316
    %v3325 = vmul.f32 %v3324, %v3316
    %v3326 = vmul.f32 %v3325, %v3324
    %v3327 = vmul.f32 0.5, %v3326
    %v3328 = vsub.f32 1.5, %v3327
    %v3329 = vmul.f32 %v3324, %v3328
    %vm3330 = vweird.f32 %v3316
    %vm3331 = vweird.f32 %v3324
    %vm3332 = vmor %vm3330, %vm3331
    %v3333 = vsel %vm3332, %v3324, %v3329
    %v3334 = vrsqrt.pop %v3317
    %v3335 = vmul.f32 %v3334, %v3317
    %v3336 = vmul.f32 %v3335, %v3334
    %v3337 = vmul.f32 0.5, %v3336
    %v3338 = vsub.f32 1.5, %v3337
    %v3339 = vmul.f32 %v3334, %v3338
    %vm3340 = vweird.f32 %v3317
    %vm3341 = vweird.f32 %v3334
    %vm3342 = vmor %vm3340, %vm3341
    %v3343 = vsel %vm3342, %v3334, %v3339
    %v3344 = vrsqrt.pop %v3318
    %v3345 = vmul.f32 %v3344, %v3318
    %v3346 = vmul.f32 %v3345, %v3344
    %v3347 = vmul.f32 0.5, %v3346
    %v3348 = vsub.f32 1.5, %v3347
    %v3349 = vmul.f32 %v3344, %v3348
    %vm3350 = vweird.f32 %v3318
    %vm3351 = vweird.f32 %v3344
    %vm3352 = vmor %vm3350, %vm3351
    %v3353 = vsel %vm3352, %v3344, %v3349
    %v3354 = vrsqrt.pop %v3319
    %v3355 = vmul.f32 %v3354, %v3319
    %v3356 = vmul.f32 %v3355, %v3354
    %v3357 = vmul.f32 0.5, %v3356
    %v3358 = vsub.f32 1.5, %v3357
    %v3359 = vmul.f32 %v3354, %v3358
    %vm3360 = vweird.f32 %v3319
    %vm3361 = vweird.f32 %v3354
    %vm3362 = vmor %vm3360, %vm3361
    %v3363 = vsel %vm3362, %v3354, %v3359
    %v3364 = vrsqrt.pop %v3320
    %v3365 = vmul.f32 %v3364, %v3320
    %v3366 = vmul.f32 %v3365, %v3364
    %v3367 = vmul.f32 0.5, %v3366
    %v3368 = vsub.f32 1.5, %v3367
    %v3369 = vmul.f32 %v3364, %v3368
    %vm3370 = vweird.f32 %v3320
    %vm3371 = vweird.f32 %v3364
    %vm3372 = vmor %vm3370, %vm3371
    %v3373 = vsel %vm3372, %v3364, %v3369
    %v3374 = vrsqrt.pop %v3321
    %v3375 = vmul.f32 %v3374, %v3321
    %v3376 = vmul.f32 %v3375, %v3374
    %v3377 = vmul.f32 0.5, %v3376
    %v3378 = vsub.f32 1.5, %v3377
    %v3379 = vmul.f32 %v3374, %v3378
    %vm3380 = vweird.f32 %v3321
    %vm3381 = vweird.f32 %v3374
    %vm3382 = vmor %vm3380, %vm3381
    %v3383 = vsel %vm3382, %v3374, %v3379
    %v3384 = vrsqrt.pop %v3322
    %v3385 = vmul.f32 %v3384, %v3322
    %v3386 = vmul.f32 %v3385, %v3384
    %v3387 = vmul.f32 0.5, %v3386
    %v3388 = vsub.f32 1.5, %v3387
    %v3389 = vmul.f32 %v3384, %v3388
    %vm3390 = vweird.f32 %v3322
    %vm3391 = vweird.f32 %v3384
    %vm3392 = vmor %vm3390, %vm3391
    %v3393 = vsel %vm3392, %v3384, %v3389
    %v3394 = vrsqrt.pop %v3323
    %v3395 = vmul.f32 %v3394, %v3323
    %v3396 = vmul.f32 %v3395, %v3394
    %v3397 = vmul.f32 0.5, %v3396
    %v3398 = vsub.f32 1.5, %v3397
    %v3399 = vmul.f32 %v3394, %v3398
    %vm3400 = vweird.f32 %v3323
    %vm3401 = vweird.f32 %v3394
    %vm3402 = vmor %vm3400, %vm3401
    %v3403 = vsel %vm3402, %v3394, %v3399
    %v3404 = vmul.f32 %v3308, %v3333
    %v3405 = vmul.f32 %v3309, %v3343
    %v3406 = vmul.f32 %v3310, %v3353
    %v3407 = vmul.f32 %v3311, %v3363
    %v3408 = vmul.f32 %v3312, %v3373
    %v3409 = vmul.f32 %v3313, %v3383
    %v3410 = vmul.f32 %v3314, %v3393
    %v3411 = vmul.f32 %v3315, %v3403
    %v3412 = vld [vmem:[%s12] sm:$0xff]
    %v3413 = vld [vmem:[%s12 + $0x8] sm:$0xff]
    %v3414 = vld [vmem:[%s12 + $0x10] sm:$0xff]
    %v3415 = vld [vmem:[%s12 + $0x18] sm:$0xff]
    %v3416 = vld [vmem:[%s12 + $0x20] sm:$0xff]
    %v3417 = vld [vmem:[%s12 + $0x28] sm:$0xff]
    %v3418 = vld [vmem:[%s12 + $0x30] sm:$0xff]
    %v3419 = vld [vmem:[%s12 + $0x38] sm:$0xff]
    %v3420 = vmul.f32 %v3268, %v3404
    %v3421 = vmul.f32 %v3269, %v3405
    %v3422 = vmul.f32 %v3270, %v3406
    %v3423 = vmul.f32 %v3271, %v3407
    %v3424 = vmul.f32 %v3272, %v3408
    %v3425 = vmul.f32 %v3273, %v3409
    %v3426 = vmul.f32 %v3274, %v3410
    %v3427 = vmul.f32 %v3275, %v3411
    %v3428 = vsub.f32 %v3412, %v3420
    %v3429 = vsub.f32 %v3413, %v3421
    %v3430 = vsub.f32 %v3414, %v3422
    %v3431 = vsub.f32 %v3415, %v3423
    %v3432 = vsub.f32 %v3416, %v3424
    %v3433 = vsub.f32 %v3417, %v3425
    %v3434 = vsub.f32 %v3418, %v3426
    %v3435 = vsub.f32 %v3419, %v3427
    %3437 = vset.pattern.permute.xlu0 0
    %3438 = vperm.xlu0 %3437, %v3404
    %v3439 = vpop.permute.xlu0 %3438
    %3442 = vset.pattern.permute.xlu0 0
    %3443 = vperm.xlu0 %3442, %v3405
    %v3444 = vpop.permute.xlu0 %3443
    %3447 = vset.pattern.permute.xlu0 0
    %3448 = vperm.xlu0 %3447, %v3406
    %v3449 = vpop.permute.xlu0 %3448
    %3452 = vset.pattern.permute.xlu0 0
    %3453 = vperm.xlu0 %3452, %v3407
    %v3454 = vpop.permute.xlu0 %3453
    %3457 = vset.pattern.permute.xlu0 0
    %3458 = vperm.xlu0 %3457, %v3408
    %v3459 = vpop.permute.xlu0 %3458
    %3462 = vset.pattern.permute.xlu0 0
    %3463 = vperm.xlu0 %3462, %v3409
    %v3464 = vpop.permute.xlu0 %3463
    %3467 = vset.pattern.permute.xlu0 0
    %3468 = vperm.xlu0 %3467, %v3410
    %v3469 = vpop.permute.xlu0 %3468
    %3472 = vset.pattern.permute.xlu0 0
    %3473 = vperm.xlu0 %3472, %v3411
    %v3474 = vpop.permute.xlu0 %3473
    %v3476 = vmul.f32 %v2944, %v3439
    %v3477 = vmul.f32 %v2973, %v3439
    %v3478 = vmul.f32 %v3002, %v3439
    %v3479 = vmul.f32 %v3031, %v3439
    %v3480 = vmul.f32 %v3060, %v3439
    %v3481 = vmul.f32 %v3089, %v3439
    %v3482 = vmul.f32 %v2946, %v3444
    %v3483 = vmul.f32 %v2975, %v3444
    %v3484 = vmul.f32 %v3004, %v3444
    %v3485 = vmul.f32 %v3033, %v3444
    %v3486 = vmul.f32 %v3062, %v3444
    %v3487 = vmul.f32 %v3091, %v3444
    %v3488 = vmul.f32 %v2949, %v3449
    %v3489 = vmul.f32 %v2978, %v3449
    %v3490 = vmul.f32 %v3007, %v3449
    %v3491 = vmul.f32 %v3036, %v3449
    %v3492 = vmul.f32 %v3065, %v3449
    %v3493 = vmul.f32 %v3094, %v3449
    %v3494 = vmul.f32 %v2951, %v3454
    %v3495 = vmul.f32 %v2980, %v3454
    %v3496 = vmul.f32 %v3009, %v3454
    %v3497 = vmul.f32 %v3038, %v3454
    %v3498 = vmul.f32 %v3067, %v3454
    %v3499 = vmul.f32 %v3096, %v3454
    %v3500 = vmul.f32 %v2954, %v3459
    %v3501 = vmul.f32 %v2983, %v3459
    %v3502 = vmul.f32 %v3012, %v3459
    %v3503 = vmul.f32 %v3041, %v3459
    %v3504 = vmul.f32 %v3070, %v3459
    %v3505 = vmul.f32 %v3099, %v3459
    %v3506 = vmul.f32 %v2956, %v3464
    %v3507 = vmul.f32 %v2985, %v3464
    %v3508 = vmul.f32 %v3014, %v3464
    %v3509 = vmul.f32 %v3043, %v3464
    %v3510 = vmul.f32 %v3072, %v3464
    %v3511 = vmul.f32 %v3101, %v3464
    %v3512 = vmul.f32 %v2959, %v3469
    %v3513 = vmul.f32 %v2988, %v3469
    %v3514 = vmul.f32 %v3017, %v3469
    %v3515 = vmul.f32 %v3046, %v3469
    %v3516 = vmul.f32 %v3075, %v3469
    %v3517 = vmul.f32 %v3104, %v3469
    %v3518 = vmul.f32 %v2961, %v3474
    %v3519 = vmul.f32 %v2990, %v3474
    %v3520 = vmul.f32 %v3019, %v3474
    %v3521 = vmul.f32 %v3048, %v3474
    %v3522 = vmul.f32 %v3077, %v3474
    %v3523 = vmul.f32 %v3106, %v3474
    %3525 = vset.pattern.permute.xlu0 0
    %3526 = vperm.xlu0 %3525, %v3428
    %v3527 = vpop.permute.xlu0 %3526
    %3530 = vset.pattern.permute.xlu0 0
    %3531 = vperm.xlu0 %3530, %v3429
    %v3532 = vpop.permute.xlu0 %3531
    %3535 = vset.pattern.permute.xlu0 0
    %3536 = vperm.xlu0 %3535, %v3430
    %v3537 = vpop.permute.xlu0 %3536
    %3540 = vset.pattern.permute.xlu0 0
    %3541 = vperm.xlu0 %3540, %v3431
    %v3542 = vpop.permute.xlu0 %3541
    %3545 = vset.pattern.permute.xlu0 0
    %3546 = vperm.xlu0 %3545, %v3432
    %v3547 = vpop.permute.xlu0 %3546
    %3550 = vset.pattern.permute.xlu0 0
    %3551 = vperm.xlu0 %3550, %v3433
    %v3552 = vpop.permute.xlu0 %3551
    %3555 = vset.pattern.permute.xlu0 0
    %3556 = vperm.xlu0 %3555, %v3434
    %v3557 = vpop.permute.xlu0 %3556
    %3560 = vset.pattern.permute.xlu0 0
    %3561 = vperm.xlu0 %3560, %v3435
    %v3562 = vpop.permute.xlu0 %3561
    %v3564 = vadd.f32 %v3476, %v3527
    %v3565 = vadd.f32 %v3477, %v3527
    %v3566 = vadd.f32 %v3478, %v3527
    %v3567 = vadd.f32 %v3479, %v3527
    %v3568 = vadd.f32 %v3480, %v3527
    %v3569 = vadd.f32 %v3481, %v3527
    %v3570 = vadd.f32 %v3482, %v3532
    %v3571 = vadd.f32 %v3483, %v3532
    %v3572 = vadd.f32 %v3484, %v3532
    %v3573 = vadd.f32 %v3485, %v3532
    %v3574 = vadd.f32 %v3486, %v3532
    %v3575 = vadd.f32 %v3487, %v3532
    %v3576 = vadd.f32 %v3488, %v3537
    %v3577 = vadd.f32 %v3489, %v3537
    %v3578 = vadd.f32 %v3490, %v3537
    %v3579 = vadd.f32 %v3491, %v3537
    %v3580 = vadd.f32 %v3492, %v3537
    %v3581 = vadd.f32 %v3493, %v3537
    %v3582 = vadd.f32 %v3494, %v3542
    %v3583 = vadd.f32 %v3495, %v3542
    %v3584 = vadd.f32 %v3496, %v3542
    %v3585 = vadd.f32 %v3497, %v3542
    %v3586 = vadd.f32 %v3498, %v3542
    %v3587 = vadd.f32 %v3499, %v3542
    %v3588 = vadd.f32 %v3500, %v3547
    %v3589 = vadd.f32 %v3501, %v3547
    %v3590 = vadd.f32 %v3502, %v3547
    %v3591 = vadd.f32 %v3503, %v3547
    %v3592 = vadd.f32 %v3504, %v3547
    %v3593 = vadd.f32 %v3505, %v3547
    %v3594 = vadd.f32 %v3506, %v3552
    %v3595 = vadd.f32 %v3507, %v3552
    %v3596 = vadd.f32 %v3508, %v3552
    %v3597 = vadd.f32 %v3509, %v3552
    %v3598 = vadd.f32 %v3510, %v3552
    %v3599 = vadd.f32 %v3511, %v3552
    %v3600 = vadd.f32 %v3512, %v3557
    %v3601 = vadd.f32 %v3513, %v3557
    %v3602 = vadd.f32 %v3514, %v3557
    %v3603 = vadd.f32 %v3515, %v3557
    %v3604 = vadd.f32 %v3516, %v3557
    %v3605 = vadd.f32 %v3517, %v3557
    %v3606 = vadd.f32 %v3518, %v3562
    %v3607 = vadd.f32 %v3519, %v3562
    %v3608 = vadd.f32 %v3520, %v3562
    %v3609 = vadd.f32 %v3521, %v3562
    %v3610 = vadd.f32 %v3522, %v3562
    %v3611 = vadd.f32 %v3523, %v3562
    %vm3612 = vcmp.ge.f32.partialorder %v3564, 0.0
    %vm3613 = vcmp.ge.f32.partialorder %v3565, 0.0
    %vm3614 = vcmp.ge.f32.partialorder %v3566, 0.0
    %vm3615 = vcmp.ge.f32.partialorder %v3567, 0.0
    %vm3616 = vcmp.ge.f32.partialorder %v3568, 0.0
    %vm3617 = vcmp.ge.f32.partialorder %v3569, 0.0
    %vm3618 = vcmp.ge.f32.partialorder %v3570, 0.0
    %vm3619 = vcmp.ge.f32.partialorder %v3571, 0.0
    %vm3620 = vcmp.ge.f32.partialorder %v3572, 0.0
    %vm3621 = vcmp.ge.f32.partialorder %v3573, 0.0
    %vm3622 = vcmp.ge.f32.partialorder %v3574, 0.0
    %vm3623 = vcmp.ge.f32.partialorder %v3575, 0.0
    %vm3624 = vcmp.ge.f32.partialorder %v3576, 0.0
    %vm3625 = vcmp.ge.f32.partialorder %v3577, 0.0
    %vm3626 = vcmp.ge.f32.partialorder %v3578, 0.0
    %vm3627 = vcmp.ge.f32.partialorder %v3579, 0.0
    %vm3628 = vcmp.ge.f32.partialorder %v3580, 0.0
    %vm3629 = vcmp.ge.f32.partialorder %v3581, 0.0
    %vm3630 = vcmp.ge.f32.partialorder %v3582, 0.0
    %vm3631 = vcmp.ge.f32.partialorder %v3583, 0.0
    %vm3632 = vcmp.ge.f32.partialorder %v3584, 0.0
    %vm3633 = vcmp.ge.f32.partialorder %v3585, 0.0
    %vm3634 = vcmp.ge.f32.partialorder %v3586, 0.0
    %vm3635 = vcmp.ge.f32.partialorder %v3587, 0.0
    %vm3636 = vcmp.ge.f32.partialorder %v3588, 0.0
    %vm3637 = vcmp.ge.f32.partialorder %v3589, 0.0
    %vm3638 = vcmp.ge.f32.partialorder %v3590, 0.0
    %vm3639 = vcmp.ge.f32.partialorder %v3591, 0.0
    %vm3640 = vcmp.ge.f32.partialorder %v3592, 0.0
    %vm3641 = vcmp.ge.f32.partialorder %v3593, 0.0
    %vm3642 = vcmp.ge.f32.partialorder %v3594, 0.0
    %vm3643 = vcmp.ge.f32.partialorder %v3595, 0.0
    %vm3644 = vcmp.ge.f32.partialorder %v3596, 0.0
    %vm3645 = vcmp.ge.f32.partialorder %v3597, 0.0
    %vm3646 = vcmp.ge.f32.partialorder %v3598, 0.0
    %vm3647 = vcmp.ge.f32.partialorder %v3599, 0.0
    %vm3648 = vcmp.ge.f32.partialorder %v3600, 0.0
    %vm3649 = vcmp.ge.f32.partialorder %v3601, 0.0
    %vm3650 = vcmp.ge.f32.partialorder %v3602, 0.0
    %vm3651 = vcmp.ge.f32.partialorder %v3603, 0.0
    %vm3652 = vcmp.ge.f32.partialorder %v3604, 0.0
    %vm3653 = vcmp.ge.f32.partialorder %v3605, 0.0
    %vm3654 = vcmp.ge.f32.partialorder %v3606, 0.0
    %vm3655 = vcmp.ge.f32.partialorder %v3607, 0.0
    %vm3656 = vcmp.ge.f32.partialorder %v3608, 0.0
    %vm3657 = vcmp.ge.f32.partialorder %v3609, 0.0
    %vm3658 = vcmp.ge.f32.partialorder %v3610, 0.0
    %vm3659 = vcmp.ge.f32.partialorder %v3611, 0.0
    %v3660 = vmul.f32 %v3564, 0.1
    %v3661 = vmul.f32 %v3565, 0.1
    %v3662 = vmul.f32 %v3566, 0.1
    %v3663 = vmul.f32 %v3567, 0.1
    %v3664 = vmul.f32 %v3568, 0.1
    %v3665 = vmul.f32 %v3569, 0.1
    %v3666 = vmul.f32 %v3570, 0.1
    %v3667 = vmul.f32 %v3571, 0.1
    %v3668 = vmul.f32 %v3572, 0.1
    %v3669 = vmul.f32 %v3573, 0.1
    %v3670 = vmul.f32 %v3574, 0.1
    %v3671 = vmul.f32 %v3575, 0.1
    %v3672 = vmul.f32 %v3576, 0.1
    %v3673 = vmul.f32 %v3577, 0.1
    %v3674 = vmul.f32 %v3578, 0.1
    %v3675 = vmul.f32 %v3579, 0.1
    %v3676 = vmul.f32 %v3580, 0.1
    %v3677 = vmul.f32 %v3581, 0.1
    %v3678 = vmul.f32 %v3582, 0.1
    %v3679 = vmul.f32 %v3583, 0.1
    %v3680 = vmul.f32 %v3584, 0.1
    %v3681 = vmul.f32 %v3585, 0.1
    %v3682 = vmul.f32 %v3586, 0.1
    %v3683 = vmul.f32 %v3587, 0.1
    %v3684 = vmul.f32 %v3588, 0.1
    %v3685 = vmul.f32 %v3589, 0.1
    %v3686 = vmul.f32 %v3590, 0.1
    %v3687 = vmul.f32 %v3591, 0.1
    %v3688 = vmul.f32 %v3592, 0.1
    %v3689 = vmul.f32 %v3593, 0.1
    %v3690 = vmul.f32 %v3594, 0.1
    %v3691 = vmul.f32 %v3595, 0.1
    %v3692 = vmul.f32 %v3596, 0.1
    %v3693 = vmul.f32 %v3597, 0.1
    %v3694 = vmul.f32 %v3598, 0.1
    %v3695 = vmul.f32 %v3599, 0.1
    %v3696 = vmul.f32 %v3600, 0.1
    %v3697 = vmul.f32 %v3601, 0.1
    %v3698 = vmul.f32 %v3602, 0.1
    %v3699 = vmul.f32 %v3603, 0.1
    %v3700 = vmul.f32 %v3604, 0.1
    %v3701 = vmul.f32 %v3605, 0.1
    %v3702 = vmul.f32 %v3606, 0.1
    %v3703 = vmul.f32 %v3607, 0.1
    %v3704 = vmul.f32 %v3608, 0.1
    %v3705 = vmul.f32 %v3609, 0.1
    %v3706 = vmul.f32 %v3610, 0.1
    %v3707 = vmul.f32 %v3611, 0.1
    %v3708 = vsel %vm3612, %v3564, %v3660
    %v3709 = vsel %vm3613, %v3565, %v3661
    %v3710 = vsel %vm3614, %v3566, %v3662
    %v3711 = vsel %vm3615, %v3567, %v3663
    %v3712 = vsel %vm3616, %v3568, %v3664
    %v3713 = vsel %vm3617, %v3569, %v3665
    %v3714 = vsel %vm3618, %v3570, %v3666
    %v3715 = vsel %vm3619, %v3571, %v3667
    %v3716 = vsel %vm3620, %v3572, %v3668
    %v3717 = vsel %vm3621, %v3573, %v3669
    %v3718 = vsel %vm3622, %v3574, %v3670
    %v3719 = vsel %vm3623, %v3575, %v3671
    %v3720 = vsel %vm3624, %v3576, %v3672
    %v3721 = vsel %vm3625, %v3577, %v3673
    %v3722 = vsel %vm3626, %v3578, %v3674
    %v3723 = vsel %vm3627, %v3579, %v3675
    %v3724 = vsel %vm3628, %v3580, %v3676
    %v3725 = vsel %vm3629, %v3581, %v3677
    %v3726 = vsel %vm3630, %v3582, %v3678
    %v3727 = vsel %vm3631, %v3583, %v3679
    %v3728 = vsel %vm3632, %v3584, %v3680
    %v3729 = vsel %vm3633, %v3585, %v3681
    %v3730 = vsel %vm3634, %v3586, %v3682
    %v3731 = vsel %vm3635, %v3587, %v3683
    %v3732 = vsel %vm3636, %v3588, %v3684
    %v3733 = vsel %vm3637, %v3589, %v3685
    %v3734 = vsel %vm3638, %v3590, %v3686
    %v3735 = vsel %vm3639, %v3591, %v3687
    %v3736 = vsel %vm3640, %v3592, %v3688
    %v3737 = vsel %vm3641, %v3593, %v3689
    %v3738 = vsel %vm3642, %v3594, %v3690
    %v3739 = vsel %vm3643, %v3595, %v3691
    %v3740 = vsel %vm3644, %v3596, %v3692
    %v3741 = vsel %vm3645, %v3597, %v3693
    %v3742 = vsel %vm3646, %v3598, %v3694
    %v3743 = vsel %vm3647, %v3599, %v3695
    %v3744 = vsel %vm3648, %v3600, %v3696
    %v3745 = vsel %vm3649, %v3601, %v3697
    %v3746 = vsel %vm3650, %v3602, %v3698
    %v3747 = vsel %vm3651, %v3603, %v3699
    %v3748 = vsel %vm3652, %v3604, %v3700
    %v3749 = vsel %vm3653, %v3605, %v3701
    %v3750 = vsel %vm3654, %v3606, %v3702
    %v3751 = vsel %vm3655, %v3607, %v3703
    %v3752 = vsel %vm3656, %v3608, %v3704
    %v3753 = vsel %vm3657, %v3609, %v3705
    %v3754 = vsel %vm3658, %v3610, %v3706
    %v3755 = vsel %vm3659, %v3611, %v3707
    %v3756 = vld [vmem:[%s13] sm:$0xf]
    %v3757 = vld [vmem:[%s13 + $0x4] sm:$0xf]
    %v3758 = vld [vmem:[%s13 + $0x8] sm:$0xf]
    %v3759 = vld [vmem:[%s13 + $0xc] sm:$0xf]
    %v3760 = vpack.c.bf16 %v3714, %v3708
    %v3761 = vpack.c.bf16 %v3715, %v3709
    %v3762 = vpack.c.bf16 %v3716, %v3710
    %v3763 = vpack.c.bf16 %v3717, %v3711
    %v3764 = vpack.c.bf16 %v3718, %v3712
    %v3765 = vpack.c.bf16 %v3719, %v3713
    %v3766 = vpack.c.bf16 %v3726, %v3720
    %v3767 = vpack.c.bf16 %v3727, %v3721
    %v3768 = vpack.c.bf16 %v3728, %v3722
    %v3769 = vpack.c.bf16 %v3729, %v3723
    %v3770 = vpack.c.bf16 %v3730, %v3724
    %v3771 = vpack.c.bf16 %v3731, %v3725
    %v3772 = vpack.c.bf16 %v3738, %v3732
    %v3773 = vpack.c.bf16 %v3739, %v3733
    %v3774 = vpack.c.bf16 %v3740, %v3734
    %v3775 = vpack.c.bf16 %v3741, %v3735
    %v3776 = vpack.c.bf16 %v3742, %v3736
    %v3777 = vpack.c.bf16 %v3743, %v3737
    %v3778 = vpack.c.bf16 %v3750, %v3744
    %v3779 = vpack.c.bf16 %v3751, %v3745
    %v3780 = vpack.c.bf16 %v3752, %v3746
    %v3781 = vpack.c.bf16 %v3753, %v3747
    %v3782 = vpack.c.bf16 %v3754, %v3748
    %v3783 = vpack.c.bf16 %v3755, %v3749
    %v3788 = vunpack.c.l.b16 %v3756
    %v3789 = vunpack.c.l.b16 %v3757
    %v3790 = vunpack.c.l.b16 %v3758
    %v3791 = vunpack.c.l.b16 %v3759
    %v3792 = vpack.c.b16 %v3789, %v3788
    %v3793 = vpack.c.b16 %v3791, %v3790
    %v3795 = vsel %vm2921, %v3792, 0
    %v3798 = vsel %vm2921, %v3793, 0
    %3800 = vmatpush.bf16.msra.mxu0 0
    %3801 = vmatpush.bf16.msra.mxu0 0
    %3802 = vmatpush.bf16.msra.mxu0 0
    %3803 = vmatpush.bf16.msra.mxu0 0
    %3804 = vmatpush.bf16.msra.mxu0 %v3778
    %3805 = vmatpush.bf16.msra.mxu0 %v3772
    %3806 = vmatpush.bf16.msra.mxu0 %v3766
    %3807 = vmatpush.bf16.msra.mxu0 %v3760
    %3808 = vmatmul.bf16.gmra.mxu0 %v3795
    %v3809 = vpop.f32.mrf.mxu0
    %v3810 = vadd.f32 0.0, %v3809
    %v3811 = vpop.f32.mrf.mxu0
    %v3812 = vadd.f32 0.0, %v3811
    %3813 = vmatmul.bf16.gmra.mxu0 %v3798
    %v3814 = vpop.f32.mrf.mxu0
    %v3815 = vadd.f32 0.0, %v3814
    %v3816 = vpop.f32.mrf.mxu0
    %v3817 = vadd.f32 0.0, %v3816
    %3818 = vdwg.mxu0
    %3819 = vmatpush.bf16.msra.mxu0 0
    %3820 = vmatpush.bf16.msra.mxu0 0
    %3821 = vmatpush.bf16.msra.mxu0 0
    %3822 = vmatpush.bf16.msra.mxu0 0
    %3823 = vmatpush.bf16.msra.mxu0 %v3779
    %3824 = vmatpush.bf16.msra.mxu0 %v3773
    %3825 = vmatpush.bf16.msra.mxu0 %v3767
    %3826 = vmatpush.bf16.msra.mxu0 %v3761
    %3827 = vmatmul.bf16.gmra.mxu0 %v3795
    %v3828 = vpop.f32.mrf.mxu0
    %v3829 = vadd.f32 0.0, %v3828
    %v3830 = vpop.f32.mrf.mxu0
    %v3831 = vadd.f32 0.0, %v3830
    %3832 = vmatmul.bf16.gmra.mxu0 %v3798
    %v3833 = vpop.f32.mrf.mxu0
    %v3834 = vadd.f32 0.0, %v3833
    %v3835 = vpop.f32.mrf.mxu0
    %v3836 = vadd.f32 0.0, %v3835
    %3837 = vdwg.mxu0
    %3838 = vmatpush.bf16.msra.mxu0 0
    %3839 = vmatpush.bf16.msra.mxu0 0
    %3840 = vmatpush.bf16.msra.mxu0 0
    %3841 = vmatpush.bf16.msra.mxu0 0
    %3842 = vmatpush.bf16.msra.mxu0 %v3780
    %3843 = vmatpush.bf16.msra.mxu0 %v3774
    %3844 = vmatpush.bf16.msra.mxu0 %v3768
    %3845 = vmatpush.bf16.msra.mxu0 %v3762
    %3846 = vmatmul.bf16.gmra.mxu0 %v3795
    %v3847 = vpop.f32.mrf.mxu0
    %v3848 = vadd.f32 0.0, %v3847
    %v3849 = vpop.f32.mrf.mxu0
    %v3850 = vadd.f32 0.0, %v3849
    %3851 = vmatmul.bf16.gmra.mxu0 %v3798
    %v3852 = vpop.f32.mrf.mxu0
    %v3853 = vadd.f32 0.0, %v3852
    %v3854 = vpop.f32.mrf.mxu0
    %v3855 = vadd.f32 0.0, %v3854
    %3856 = vdwg.mxu0
    %3857 = vmatpush.bf16.msra.mxu0 0
    %3858 = vmatpush.bf16.msra.mxu0 0
    %3859 = vmatpush.bf16.msra.mxu0 0
    %3860 = vmatpush.bf16.msra.mxu0 0
    %3861 = vmatpush.bf16.msra.mxu0 %v3781
    %3862 = vmatpush.bf16.msra.mxu0 %v3775
    %3863 = vmatpush.bf16.msra.mxu0 %v3769
    %3864 = vmatpush.bf16.msra.mxu0 %v3763
    %3865 = vmatmul.bf16.gmra.mxu0 %v3795
    %v3866 = vpop.f32.mrf.mxu0
    %v3867 = vadd.f32 0.0, %v3866
    %v3868 = vpop.f32.mrf.mxu0
    %v3869 = vadd.f32 0.0, %v3868
    %3870 = vmatmul.bf16.gmra.mxu0 %v3798
    %v3871 = vpop.f32.mrf.mxu0
    %v3872 = vadd.f32 0.0, %v3871
    %v3873 = vpop.f32.mrf.mxu0
    %v3874 = vadd.f32 0.0, %v3873
    %3875 = vdwg.mxu0
    %3876 = vmatpush.bf16.msra.mxu0 0
    %3877 = vmatpush.bf16.msra.mxu0 0
    %3878 = vmatpush.bf16.msra.mxu0 0
    %3879 = vmatpush.bf16.msra.mxu0 0
    %3880 = vmatpush.bf16.msra.mxu0 %v3782
    %3881 = vmatpush.bf16.msra.mxu0 %v3776
    %3882 = vmatpush.bf16.msra.mxu0 %v3770
    %3883 = vmatpush.bf16.msra.mxu0 %v3764
    %3884 = vmatmul.bf16.gmra.mxu0 %v3795
    %v3885 = vpop.f32.mrf.mxu0
    %v3886 = vadd.f32 0.0, %v3885
    %v3887 = vpop.f32.mrf.mxu0
    %v3888 = vadd.f32 0.0, %v3887
    %3889 = vmatmul.bf16.gmra.mxu0 %v3798
    %v3890 = vpop.f32.mrf.mxu0
    %v3891 = vadd.f32 0.0, %v3890
    %v3892 = vpop.f32.mrf.mxu0
    %v3893 = vadd.f32 0.0, %v3892
    %3894 = vdwg.mxu0
    %3895 = vmatpush.bf16.msra.mxu0 0
    %3896 = vmatpush.bf16.msra.mxu0 0
    %3897 = vmatpush.bf16.msra.mxu0 0
    %3898 = vmatpush.bf16.msra.mxu0 0
    %3899 = vmatpush.bf16.msra.mxu0 %v3783
    %3900 = vmatpush.bf16.msra.mxu0 %v3777
    %3901 = vmatpush.bf16.msra.mxu0 %v3771
    %3902 = vmatpush.bf16.msra.mxu0 %v3765
    %3903 = vmatmul.bf16.gmra.mxu0 %v3795
    %v3904 = vpop.f32.mrf.mxu0
    %v3905 = vadd.f32 0.0, %v3904
    %v3906 = vpop.f32.mrf.mxu0
    %v3907 = vadd.f32 0.0, %v3906
    %3908 = vmatmul.bf16.gmra.mxu0 %v3798
    %v3909 = vpop.f32.mrf.mxu0
    %v3910 = vadd.f32 0.0, %v3909
    %v3911 = vpop.f32.mrf.mxu0
    %v3912 = vadd.f32 0.0, %v3911
    %3913 = vdwg.mxu0
    %v3914 = vadd.f32 %v3810, %v3829
    %v3915 = vadd.f32 %v3914, %v3848
    %v3916 = vadd.f32 %v3915, %v3867
    %v3917 = vadd.f32 %v3916, %v3886
    %v3918 = vadd.f32 %v3917, %v3905
    %3919 = vadd.xlane.f32.xlu0 %v3918
    %v3920 = vpop.xlane.xlu0 %3919
    %v3921 = vadd.f32 %v3812, %v3831
    %v3922 = vadd.f32 %v3921, %v3850
    %v3923 = vadd.f32 %v3922, %v3869
    %v3924 = vadd.f32 %v3923, %v3888
    %v3925 = vadd.f32 %v3924, %v3907
    %3926 = vadd.xlane.f32.xlu0 %v3925
    %v3927 = vpop.xlane.xlu0 %3926
    %v3928 = vadd.f32 %v3815, %v3834
    %v3929 = vadd.f32 %v3928, %v3853
    %v3930 = vadd.f32 %v3929, %v3872
    %v3931 = vadd.f32 %v3930, %v3891
    %v3932 = vadd.f32 %v3931, %v3910
    %3933 = vadd.xlane.f32.xlu0 %v3932
    %v3934 = vpop.xlane.xlu0 %3933
    %v3935 = vadd.f32 %v3817, %v3836
    %v3936 = vadd.f32 %v3935, %v3855
    %v3937 = vadd.f32 %v3936, %v3874
    %v3938 = vadd.f32 %v3937, %v3893
    %v3939 = vadd.f32 %v3938, %v3912
    %3940 = vadd.xlane.f32.xlu0 %v3939
    %v3941 = vpop.xlane.xlu0 %3940
    %v3942 = vmul.f32 %v3810, %v3810
    %v3943 = vmul.f32 %v3829, %v3829
    %v3944 = vmul.f32 %v3848, %v3848
    %v3945 = vmul.f32 %v3867, %v3867
    %v3946 = vmul.f32 %v3886, %v3886
    %v3947 = vmul.f32 %v3905, %v3905
    %v3948 = vmul.f32 %v3812, %v3812
    %v3949 = vmul.f32 %v3831, %v3831
    %v3950 = vmul.f32 %v3850, %v3850
    %v3951 = vmul.f32 %v3869, %v3869
    %v3952 = vmul.f32 %v3888, %v3888
    %v3953 = vmul.f32 %v3907, %v3907
    %v3954 = vmul.f32 %v3815, %v3815
    %v3955 = vmul.f32 %v3834, %v3834
    %v3956 = vmul.f32 %v3853, %v3853
    %v3957 = vmul.f32 %v3872, %v3872
    %v3958 = vmul.f32 %v3891, %v3891
    %v3959 = vmul.f32 %v3910, %v3910
    %v3960 = vmul.f32 %v3817, %v3817
    %v3961 = vmul.f32 %v3836, %v3836
    %v3962 = vmul.f32 %v3855, %v3855
    %v3963 = vmul.f32 %v3874, %v3874
    %v3964 = vmul.f32 %v3893, %v3893
    %v3965 = vmul.f32 %v3912, %v3912
    %v3966 = vadd.f32 %v3942, %v3943
    %v3967 = vadd.f32 %v3966, %v3944
    %v3968 = vadd.f32 %v3967, %v3945
    %v3969 = vadd.f32 %v3968, %v3946
    %v3970 = vadd.f32 %v3969, %v3947
    %3971 = vadd.xlane.f32.xlu0 %v3970
    %v3972 = vpop.xlane.xlu0 %3971
    %v3973 = vadd.f32 %v3948, %v3949
    %v3974 = vadd.f32 %v3973, %v3950
    %v3975 = vadd.f32 %v3974, %v3951
    %v3976 = vadd.f32 %v3975, %v3952
    %v3977 = vadd.f32 %v3976, %v3953
    %3978 = vadd.xlane.f32.xlu0 %v3977
    %v3979 = vpop.xlane.xlu0 %3978
    %v3980 = vadd.f32 %v3954, %v3955
    %v3981 = vadd.f32 %v3980, %v3956
    %v3982 = vadd.f32 %v3981, %v3957
    %v3983 = vadd.f32 %v3982, %v3958
    %v3984 = vadd.f32 %v3983, %v3959
    %3985 = vadd.xlane.f32.xlu0 %v3984
    %v3986 = vpop.xlane.xlu0 %3985
    %v3987 = vadd.f32 %v3960, %v3961
    %v3988 = vadd.f32 %v3987, %v3962
    %v3989 = vadd.f32 %v3988, %v3963
    %v3990 = vadd.f32 %v3989, %v3964
    %v3991 = vadd.f32 %v3990, %v3965
    %3992 = vadd.xlane.f32.xlu0 %v3991
    %v3993 = vpop.xlane.xlu0 %3992
    %v3994 = vmul.f32 %v3920, 0.0013020834
    %v3995 = vmul.f32 %v3927, 0.0013020834
    %v3996 = vmul.f32 %v3934, 0.0013020834
    %v3997 = vmul.f32 %v3941, 0.0013020834
    %v3998 = vmul.f32 %v3972, 0.0013020834
    %v3999 = vmul.f32 %v3979, 0.0013020834
    %v4000 = vmul.f32 %v3986, 0.0013020834
    %v4001 = vmul.f32 %v3993, 0.0013020834
    %v4002 = vmul.f32 %v3994, %v3994
    %v4003 = vmul.f32 %v3995, %v3995
    %v4004 = vmul.f32 %v3996, %v3996
    %v4005 = vmul.f32 %v3997, %v3997
    %v4006 = vsub.f32 %v3998, %v4002
    %v4007 = vsub.f32 %v3999, %v4003
    %v4008 = vsub.f32 %v4000, %v4004
    %v4009 = vsub.f32 %v4001, %v4005
    %v4010 = vmax.f32 %v4006, 0.0
    %v4011 = vmax.f32 %v4007, 0.0
    %v4012 = vmax.f32 %v4008, 0.0
    %v4013 = vmax.f32 %v4009, 0.0
    %v4014 = vld [vmem:[%s14] sm:$0xff]
    %v4015 = vld [vmem:[%s14 + $0x8] sm:$0xff]
    %v4016 = vld [vmem:[%s14 + $0x10] sm:$0xff]
    %v4017 = vld [vmem:[%s14 + $0x18] sm:$0xff]
    %v4018 = vadd.f32 %v4010, 1e-05
    %v4019 = vadd.f32 %v4011, 1e-05
    %v4020 = vadd.f32 %v4012, 1e-05
    %v4021 = vadd.f32 %v4013, 1e-05
    %v4022 = vrsqrt.pop %v4018
    %v4023 = vmul.f32 %v4022, %v4018
    %v4024 = vmul.f32 %v4023, %v4022
    %v4025 = vmul.f32 0.5, %v4024
    %v4026 = vsub.f32 1.5, %v4025
    %v4027 = vmul.f32 %v4022, %v4026
    %vm4028 = vweird.f32 %v4018
    %vm4029 = vweird.f32 %v4022
    %vm4030 = vmor %vm4028, %vm4029
    %v4031 = vsel %vm4030, %v4022, %v4027
    %v4032 = vrsqrt.pop %v4019
    %v4033 = vmul.f32 %v4032, %v4019
    %v4034 = vmul.f32 %v4033, %v4032
    %v4035 = vmul.f32 0.5, %v4034
    %v4036 = vsub.f32 1.5, %v4035
    %v4037 = vmul.f32 %v4032, %v4036
    %vm4038 = vweird.f32 %v4019
    %vm4039 = vweird.f32 %v4032
    %vm4040 = vmor %vm4038, %vm4039
    %v4041 = vsel %vm4040, %v4032, %v4037
    %v4042 = vrsqrt.pop %v4020
    %v4043 = vmul.f32 %v4042, %v4020
    %v4044 = vmul.f32 %v4043, %v4042
    %v4045 = vmul.f32 0.5, %v4044
    %v4046 = vsub.f32 1.5, %v4045
    %v4047 = vmul.f32 %v4042, %v4046
    %vm4048 = vweird.f32 %v4020
    %vm4049 = vweird.f32 %v4042
    %vm4050 = vmor %vm4048, %vm4049
    %v4051 = vsel %vm4050, %v4042, %v4047
    %v4052 = vrsqrt.pop %v4021
    %v4053 = vmul.f32 %v4052, %v4021
    %v4054 = vmul.f32 %v4053, %v4052
    %v4055 = vmul.f32 0.5, %v4054
    %v4056 = vsub.f32 1.5, %v4055
    %v4057 = vmul.f32 %v4052, %v4056
    %vm4058 = vweird.f32 %v4021
    %vm4059 = vweird.f32 %v4052
    %vm4060 = vmor %vm4058, %vm4059
    %v4061 = vsel %vm4060, %v4052, %v4057
    %v4062 = vmul.f32 %v4014, %v4031
    %v4063 = vmul.f32 %v4015, %v4041
    %v4064 = vmul.f32 %v4016, %v4051
    %v4065 = vmul.f32 %v4017, %v4061
    %v4066 = vld [vmem:[%s15] sm:$0xff]
    %v4067 = vld [vmem:[%s15 + $0x8] sm:$0xff]
    %v4068 = vld [vmem:[%s15 + $0x10] sm:$0xff]
    %v4069 = vld [vmem:[%s15 + $0x18] sm:$0xff]
    %v4070 = vmul.f32 %v3994, %v4062
    %v4071 = vmul.f32 %v3995, %v4063
    %v4072 = vmul.f32 %v3996, %v4064
    %v4073 = vmul.f32 %v3997, %v4065
    %v4074 = vsub.f32 %v4066, %v4070
    %v4075 = vsub.f32 %v4067, %v4071
    %v4076 = vsub.f32 %v4068, %v4072
    %v4077 = vsub.f32 %v4069, %v4073
    %4079 = vset.pattern.permute.xlu0 0
    %4080 = vperm.xlu0 %4079, %v4062
    %v4081 = vpop.permute.xlu0 %4080
    %4084 = vset.pattern.permute.xlu0 0
    %4085 = vperm.xlu0 %4084, %v4063
    %v4086 = vpop.permute.xlu0 %4085
    %4089 = vset.pattern.permute.xlu0 0
    %4090 = vperm.xlu0 %4089, %v4064
    %v4091 = vpop.permute.xlu0 %4090
    %4094 = vset.pattern.permute.xlu0 0
    %4095 = vperm.xlu0 %4094, %v4065
    %v4096 = vpop.permute.xlu0 %4095
    %v4098 = vmul.f32 %v3810, %v4081
    %v4099 = vmul.f32 %v3829, %v4081
    %v4100 = vmul.f32 %v3848, %v4081
    %v4101 = vmul.f32 %v3867, %v4081
    %v4102 = vmul.f32 %v3886, %v4081
    %v4103 = vmul.f32 %v3905, %v4081
    %v4104 = vmul.f32 %v3812, %v4086
    %v4105 = vmul.f32 %v3831, %v4086
    %v4106 = vmul.f32 %v3850, %v4086
    %v4107 = vmul.f32 %v3869, %v4086
    %v4108 = vmul.f32 %v3888, %v4086
    %v4109 = vmul.f32 %v3907, %v4086
    %v4110 = vmul.f32 %v3815, %v4091
    %v4111 = vmul.f32 %v3834, %v4091
    %v4112 = vmul.f32 %v3853, %v4091
    %v4113 = vmul.f32 %v3872, %v4091
    %v4114 = vmul.f32 %v3891, %v4091
    %v4115 = vmul.f32 %v3910, %v4091
    %v4116 = vmul.f32 %v3817, %v4096
    %v4117 = vmul.f32 %v3836, %v4096
    %v4118 = vmul.f32 %v3855, %v4096
    %v4119 = vmul.f32 %v3874, %v4096
    %v4120 = vmul.f32 %v3893, %v4096
    %v4121 = vmul.f32 %v3912, %v4096
    %4123 = vset.pattern.permute.xlu0 0
    %4124 = vperm.xlu0 %4123, %v4074
    %v4125 = vpop.permute.xlu0 %4124
    %4128 = vset.pattern.permute.xlu0 0
    %4129 = vperm.xlu0 %4128, %v4075
    %v4130 = vpop.permute.xlu0 %4129
    %4133 = vset.pattern.permute.xlu0 0
    %4134 = vperm.xlu0 %4133, %v4076
    %v4135 = vpop.permute.xlu0 %4134
    %4138 = vset.pattern.permute.xlu0 0
    %4139 = vperm.xlu0 %4138, %v4077
    %v4140 = vpop.permute.xlu0 %4139
    %v4142 = vadd.f32 %v4098, %v4125
    %v4143 = vadd.f32 %v4099, %v4125
    %v4144 = vadd.f32 %v4100, %v4125
    %v4145 = vadd.f32 %v4101, %v4125
    %v4146 = vadd.f32 %v4102, %v4125
    %v4147 = vadd.f32 %v4103, %v4125
    %v4148 = vadd.f32 %v4104, %v4130
    %v4149 = vadd.f32 %v4105, %v4130
    %v4150 = vadd.f32 %v4106, %v4130
    %v4151 = vadd.f32 %v4107, %v4130
    %v4152 = vadd.f32 %v4108, %v4130
    %v4153 = vadd.f32 %v4109, %v4130
    %v4154 = vadd.f32 %v4110, %v4135
    %v4155 = vadd.f32 %v4111, %v4135
    %v4156 = vadd.f32 %v4112, %v4135
    %v4157 = vadd.f32 %v4113, %v4135
    %v4158 = vadd.f32 %v4114, %v4135
    %v4159 = vadd.f32 %v4115, %v4135
    %v4160 = vadd.f32 %v4116, %v4140
    %v4161 = vadd.f32 %v4117, %v4140
    %v4162 = vadd.f32 %v4118, %v4140
    %v4163 = vadd.f32 %v4119, %v4140
    %v4164 = vadd.f32 %v4120, %v4140
    %v4165 = vadd.f32 %v4121, %v4140
    %vm4166 = vcmp.ge.f32.partialorder %v4142, 0.0
    %vm4167 = vcmp.ge.f32.partialorder %v4143, 0.0
    %vm4168 = vcmp.ge.f32.partialorder %v4144, 0.0
    %vm4169 = vcmp.ge.f32.partialorder %v4145, 0.0
    %vm4170 = vcmp.ge.f32.partialorder %v4146, 0.0
    %vm4171 = vcmp.ge.f32.partialorder %v4147, 0.0
    %vm4172 = vcmp.ge.f32.partialorder %v4148, 0.0
    %vm4173 = vcmp.ge.f32.partialorder %v4149, 0.0
    %vm4174 = vcmp.ge.f32.partialorder %v4150, 0.0
    %vm4175 = vcmp.ge.f32.partialorder %v4151, 0.0
    %vm4176 = vcmp.ge.f32.partialorder %v4152, 0.0
    %vm4177 = vcmp.ge.f32.partialorder %v4153, 0.0
    %vm4178 = vcmp.ge.f32.partialorder %v4154, 0.0
    %vm4179 = vcmp.ge.f32.partialorder %v4155, 0.0
    %vm4180 = vcmp.ge.f32.partialorder %v4156, 0.0
    %vm4181 = vcmp.ge.f32.partialorder %v4157, 0.0
    %vm4182 = vcmp.ge.f32.partialorder %v4158, 0.0
    %vm4183 = vcmp.ge.f32.partialorder %v4159, 0.0
    %vm4184 = vcmp.ge.f32.partialorder %v4160, 0.0
    %vm4185 = vcmp.ge.f32.partialorder %v4161, 0.0
    %vm4186 = vcmp.ge.f32.partialorder %v4162, 0.0
    %vm4187 = vcmp.ge.f32.partialorder %v4163, 0.0
    %vm4188 = vcmp.ge.f32.partialorder %v4164, 0.0
    %vm4189 = vcmp.ge.f32.partialorder %v4165, 0.0
    %v4190 = vmul.f32 %v4142, 0.1
    %v4191 = vmul.f32 %v4143, 0.1
    %v4192 = vmul.f32 %v4144, 0.1
    %v4193 = vmul.f32 %v4145, 0.1
    %v4194 = vmul.f32 %v4146, 0.1
    %v4195 = vmul.f32 %v4147, 0.1
    %v4196 = vmul.f32 %v4148, 0.1
    %v4197 = vmul.f32 %v4149, 0.1
    %v4198 = vmul.f32 %v4150, 0.1
    %v4199 = vmul.f32 %v4151, 0.1
    %v4200 = vmul.f32 %v4152, 0.1
    %v4201 = vmul.f32 %v4153, 0.1
    %v4202 = vmul.f32 %v4154, 0.1
    %v4203 = vmul.f32 %v4155, 0.1
    %v4204 = vmul.f32 %v4156, 0.1
    %v4205 = vmul.f32 %v4157, 0.1
    %v4206 = vmul.f32 %v4158, 0.1
    %v4207 = vmul.f32 %v4159, 0.1
    %v4208 = vmul.f32 %v4160, 0.1
    %v4209 = vmul.f32 %v4161, 0.1
    %v4210 = vmul.f32 %v4162, 0.1
    %v4211 = vmul.f32 %v4163, 0.1
    %v4212 = vmul.f32 %v4164, 0.1
    %v4213 = vmul.f32 %v4165, 0.1
    %v4214 = vsel %vm4166, %v4142, %v4190
    %v4215 = vsel %vm4167, %v4143, %v4191
    %v4216 = vsel %vm4168, %v4144, %v4192
    %v4217 = vsel %vm4169, %v4145, %v4193
    %v4218 = vsel %vm4170, %v4146, %v4194
    %v4219 = vsel %vm4171, %v4147, %v4195
    %v4220 = vsel %vm4172, %v4148, %v4196
    %v4221 = vsel %vm4173, %v4149, %v4197
    %v4222 = vsel %vm4174, %v4150, %v4198
    %v4223 = vsel %vm4175, %v4151, %v4199
    %v4224 = vsel %vm4176, %v4152, %v4200
    %v4225 = vsel %vm4177, %v4153, %v4201
    %v4226 = vsel %vm4178, %v4154, %v4202
    %v4227 = vsel %vm4179, %v4155, %v4203
    %v4228 = vsel %vm4180, %v4156, %v4204
    %v4229 = vsel %vm4181, %v4157, %v4205
    %v4230 = vsel %vm4182, %v4158, %v4206
    %v4231 = vsel %vm4183, %v4159, %v4207
    %v4232 = vsel %vm4184, %v4160, %v4208
    %v4233 = vsel %vm4185, %v4161, %v4209
    %v4234 = vsel %vm4186, %v4162, %v4210
    %v4235 = vsel %vm4187, %v4163, %v4211
    %v4236 = vsel %vm4188, %v4164, %v4212
    %v4237 = vsel %vm4189, %v4165, %v4213
    %v4238 = vld [vmem:[%s16] sm:$0x3]
    %s4239 = scalar_lea.vmem %s16, 2
    %v4240 = vld [vmem:[%s4239] sm:$0x3]
    %vm4241 = vcmask 261120
    %v4243 = vsel %vm4241, %v4240, 0
    %4245 = vmatpush.msra.mxu0 0.0
    %4246 = vmatpush.msra.mxu0 0.0
    %4247 = vmatpush.msra.mxu0 0.0
    %4248 = vmatpush.msra.mxu0 0.0
    %4249 = vmatpush.msra.mxu0 0.0
    %4250 = vmatpush.msra.mxu0 0.0
    %4251 = vmatpush.msra.mxu0 0.0
    %4252 = vmatpush.msra.mxu0 0.0
    %4253 = vmatpush.msra.mxu0 0.0
    %4254 = vmatpush.msra.mxu0 0.0
    %4255 = vmatpush.msra.mxu0 0.0
    %4256 = vmatpush.msra.mxu0 0.0
    %4257 = vmatpush.msra.mxu0 %v4234
    %4258 = vmatpush.msra.mxu0 %v4228
    %4259 = vmatpush.msra.mxu0 %v4222
    %4260 = vmatpush.msra.mxu0 %v4216
    %4261 = vmatmul.f32.gmra.mxu0 %v4243
    %v4262 = vpop.f32.mrf.mxu0
    %v4263 = vadd.f32 0.0, %v4262
    %4264 = vdwg.mxu0
    %4265 = vmatpush.msra.mxu0 0.0
    %4266 = vmatpush.msra.mxu0 0.0
    %4267 = vmatpush.msra.mxu0 0.0
    %4268 = vmatpush.msra.mxu0 0.0
    %4269 = vmatpush.msra.mxu0 0.0
    %4270 = vmatpush.msra.mxu0 0.0
    %4271 = vmatpush.msra.mxu0 0.0
    %4272 = vmatpush.msra.mxu0 0.0
    %4273 = vmatpush.msra.mxu0 0.0
    %4274 = vmatpush.msra.mxu0 0.0
    %4275 = vmatpush.msra.mxu0 0.0
    %4276 = vmatpush.msra.mxu0 0.0
    %4277 = vmatpush.msra.mxu0 %v4235
    %4278 = vmatpush.msra.mxu0 %v4229
    %4279 = vmatpush.msra.mxu0 %v4223
    %4280 = vmatpush.msra.mxu0 %v4217
    %4281 = vmatmul.f32.gmra.mxu0 %v4243
    %v4282 = vpop.f32.mrf.mxu0
    %v4283 = vadd.f32 0.0, %v4282
    %4284 = vdwg.mxu0
    %v4286 = vsel %vm4241, %v4238, 0
    %4288 = vmatpush.msra.mxu0 0.0
    %4289 = vmatpush.msra.mxu0 0.0
    %4290 = vmatpush.msra.mxu0 0.0
    %4291 = vmatpush.msra.mxu0 0.0
    %4292 = vmatpush.msra.mxu0 0.0
    %4293 = vmatpush.msra.mxu0 0.0
    %4294 = vmatpush.msra.mxu0 0.0
    %4295 = vmatpush.msra.mxu0 0.0
    %4296 = vmatpush.msra.mxu0 0.0
    %4297 = vmatpush.msra.mxu0 0.0
    %4298 = vmatpush.msra.mxu0 0.0
    %4299 = vmatpush.msra.mxu0 0.0
    %4300 = vmatpush.msra.mxu0 %v4232
    %4301 = vmatpush.msra.mxu0 %v4226
    %4302 = vmatpush.msra.mxu0 %v4220
    %4303 = vmatpush.msra.mxu0 %v4214
    %4304 = vmatmul.f32.gmra.mxu0 %v4286
    %v4305 = vpop.f32.mrf.mxu0
    %v4306 = vadd.f32 %v4263, %v4305
    %4307 = vdwg.mxu0
    %4308 = vmatpush.msra.mxu0 0.0
    %4309 = vmatpush.msra.mxu0 0.0
    %4310 = vmatpush.msra.mxu0 0.0
    %4311 = vmatpush.msra.mxu0 0.0
    %4312 = vmatpush.msra.mxu0 0.0
    %4313 = vmatpush.msra.mxu0 0.0
    %4314 = vmatpush.msra.mxu0 0.0
    %4315 = vmatpush.msra.mxu0 0.0
    %4316 = vmatpush.msra.mxu0 0.0
    %4317 = vmatpush.msra.mxu0 0.0
    %4318 = vmatpush.msra.mxu0 0.0
    %4319 = vmatpush.msra.mxu0 0.0
    %4320 = vmatpush.msra.mxu0 %v4233
    %4321 = vmatpush.msra.mxu0 %v4227
    %4322 = vmatpush.msra.mxu0 %v4221
    %4323 = vmatpush.msra.mxu0 %v4215
    %4324 = vmatmul.f32.gmra.mxu0 %v4286
    %v4325 = vpop.f32.mrf.mxu0
    %v4326 = vadd.f32 %v4283, %v4325
    %4327 = vdwg.mxu0
    %s4328 = scalar_lea.vmem %s16, 4
    %v4329 = vld [vmem:[%s4328] sm:$0x3]
    %v4331 = vsel %vm4241, %v4329, 0
    %4333 = vmatpush.msra.mxu0 0.0
    %4334 = vmatpush.msra.mxu0 0.0
    %4335 = vmatpush.msra.mxu0 0.0
    %4336 = vmatpush.msra.mxu0 0.0
    %4337 = vmatpush.msra.mxu0 0.0
    %4338 = vmatpush.msra.mxu0 0.0
    %4339 = vmatpush.msra.mxu0 0.0
    %4340 = vmatpush.msra.mxu0 0.0
    %4341 = vmatpush.msra.mxu0 0.0
    %4342 = vmatpush.msra.mxu0 0.0
    %4343 = vmatpush.msra.mxu0 0.0
    %4344 = vmatpush.msra.mxu0 0.0
    %4345 = vmatpush.msra.mxu0 %v4236
    %4346 = vmatpush.msra.mxu0 %v4230
    %4347 = vmatpush.msra.mxu0 %v4224
    %4348 = vmatpush.msra.mxu0 %v4218
    %4349 = vmatmul.f32.gmra.mxu0 %v4331
    %v4350 = vpop.f32.mrf.mxu0
    %v4351 = vadd.f32 0.0, %v4350
    %4352 = vdwg.mxu0
    %4353 = vmatpush.msra.mxu0 0.0
    %4354 = vmatpush.msra.mxu0 0.0
    %4355 = vmatpush.msra.mxu0 0.0
    %4356 = vmatpush.msra.mxu0 0.0
    %4357 = vmatpush.msra.mxu0 0.0
    %4358 = vmatpush.msra.mxu0 0.0
    %4359 = vmatpush.msra.mxu0 0.0
    %4360 = vmatpush.msra.mxu0 0.0
    %4361 = vmatpush.msra.mxu0 0.0
    %4362 = vmatpush.msra.mxu0 0.0
    %4363 = vmatpush.msra.mxu0 0.0
    %4364 = vmatpush.msra.mxu0 0.0
    %4365 = vmatpush.msra.mxu0 %v4237
    %4366 = vmatpush.msra.mxu0 %v4231
    %4367 = vmatpush.msra.mxu0 %v4225
    %4368 = vmatpush.msra.mxu0 %v4219
    %4369 = vmatmul.f32.gmra.mxu0 %v4331
    %v4370 = vpop.f32.mrf.mxu0
    %v4371 = vadd.f32 0.0, %v4370
    %4372 = vdwg.mxu0
    %v4373 = vadd.f32 %v4306, %v4351
    %v4374 = vadd.f32 %v4326, %v4371
    %v4375 = vld [vmem:[%s17] sm:$0x1]
    %vm4376 = vcmp.gt.f32.partialorder %v4375, 0.5
    %v4377 = vsel %vm4376, -inf, %v4373
    %vm4378 = vcmask 1040384
    %v4379 = vsel %vm4378, %v4377, -inf
    %4380 = vmax.xlane.f32.xlu0 %v4379
    %v4381 = vpop.xlane.xlu0 %4380
    %v4382 = vsub.f32 %v4377, %v4381
    %v4383 = vmul.f32 %v4382, 1.442695
    %v4384 = vpow.pop %v4383
    %v4385 = vsel %vm4378, %v4384, 0.0
    %4386 = vadd.xlane.f32.xlu0 %v4385
    %v4387 = vpop.xlane.xlu0 %4386
    %v4388 = vlog2.pop %v4387
    %v4389 = vmul.f32 %v4388, 0.6931472
    %v4390 = vadd.f32 %v4381, %v4389
    %v4391 = vsub.f32 %v4377, %v4390
    %4392 = vst [vmem:[#allocation3] sm:$0x1] %v4391
    %v4394 = vrot.slane %v4373, 1
    %v4396 = vsel %vm4376, -inf, %v4394
    %v4397 = vsel %vm4378, %v4396, -inf
    %4398 = vmax.xlane.f32.xlu0 %v4397
    %v4399 = vpop.xlane.xlu0 %4398
    %v4400 = vsub.f32 %v4396, %v4399
    %v4401 = vmul.f32 %v4400, 1.442695
    %v4402 = vpow.pop %v4401
    %v4403 = vsel %vm4378, %v4402, 0.0
    %4404 = vadd.xlane.f32.xlu0 %v4403
    %v4405 = vpop.xlane.xlu0 %4404
    %v4406 = vlog2.pop %v4405
    %v4407 = vmul.f32 %v4406, 0.6931472
    %v4408 = vadd.f32 %v4399, %v4407
    %v4409 = vsub.f32 %v4396, %v4408
    %4410 = vst [vmem:[#allocation5] sm:$0x1] %v4409
    %v4411 = vld [vmem:[%s17 + $0x1] sm:$0x1]
    %vm4412 = vcmp.gt.f32.partialorder %v4411, 0.5
    %v4413 = vsel %vm4412, -inf, %v4374
    %v4414 = vsel %vm4378, %v4413, -inf
    %4415 = vmax.xlane.f32.xlu0 %v4414
    %v4416 = vpop.xlane.xlu0 %4415
    %v4417 = vsub.f32 %v4413, %v4416
    %v4418 = vmul.f32 %v4417, 1.442695
    %v4419 = vpow.pop %v4418
    %v4420 = vsel %vm4378, %v4419, 0.0
    %4421 = vadd.xlane.f32.xlu0 %v4420
    %v4422 = vpop.xlane.xlu0 %4421
    %v4423 = vlog2.pop %v4422
    %v4424 = vmul.f32 %v4423, 0.6931472
    %v4425 = vadd.f32 %v4416, %v4424
    %v4426 = vsub.f32 %v4413, %v4425
    %4427 = vst [vmem:[#allocation3 + $0x1] sm:$0x1] %v4426
    %v4429 = vrot.slane %v4374, 1
    %v4431 = vsel %vm4412, -inf, %v4429
    %v4432 = vsel %vm4378, %v4431, -inf
    %4433 = vmax.xlane.f32.xlu0 %v4432
    %v4434 = vpop.xlane.xlu0 %4433
    %v4435 = vsub.f32 %v4431, %v4434
    %v4436 = vmul.f32 %v4435, 1.442695
    %v4437 = vpow.pop %v4436
    %v4438 = vsel %vm4378, %v4437, 0.0
    %4439 = vadd.xlane.f32.xlu0 %v4438
    %v4440 = vpop.xlane.xlu0 %4439
    %v4441 = vlog2.pop %v4440
    %v4442 = vmul.f32 %v4441, 0.6931472
    %v4443 = vadd.f32 %v4434, %v4442
    %v4444 = vsub.f32 %v4431, %v4443
    %4445 = vst [vmem:[#allocation5 + $0x1] sm:$0x1] %v4444
    // Predicated region
    $region74: #{fofe_nn_forward.1} parent=1 // pred_check
      _
    $region75: #{fofe_nn_forward.1} parent=1 // pred_check_branch
      %4447 = sbr.rel (0) target = $region77
    $region76: #{fofe_nn_forward.1} parent=1 // pred_region
      %4449 = vsyncadd [#allocation4], 0
      %s4451 = sshll.u32 [#allocation3], 4
      %s4452 = int_to_ptr.vmem [resolvable:$true] %s4451
      %s4453 = sshll.u32 %s18, 4
      %s4454 = int_to_ptr.hbm [resolvable:$true] %s4453
      %4456 = dma.vmem_to_hbm [thread:$0]  %s4452, 32, %s4454, [#allocation4]
    $region77: #{fofe_nn_forward.1} parent=1 // pred_fallthru
      _
    // Predicated region
    $region78: #{fofe_nn_forward.1} parent=1 // pred_check
      _
    $region79: #{fofe_nn_forward.1} parent=1 // pred_check_branch
      %4458 = sbr.rel (0) target = $region81
    $region80: #{fofe_nn_forward.1} parent=1 // pred_region
      %4460 = vsyncadd [#allocation6], 0
      %s4462 = sshll.u32 [#allocation5], 4
      %s4463 = int_to_ptr.vmem [resolvable:$true] %s4462
      %s4464 = sshll.u32 %s19, 4
      %s4465 = int_to_ptr.hbm [resolvable:$true] %s4464
      %4467 = dma.vmem_to_hbm [thread:$0]  %s4463, 32, %s4465, [#allocation6]
    $region81: #{fofe_nn_forward.1} parent=1 // pred_fallthru
      _
    // Predicated region
    $region82: #{fofe_nn_forward.1} parent=1 // pred_check
      _
    $region83: #{fofe_nn_forward.1} parent=1 // pred_check_branch
      %4469 = sbr.rel (0) target = $region85
    $region84: #{fofe_nn_forward.1} parent=1 // pred_region
      %4471 = dma.done [#allocation4], 32
    $region85: #{fofe_nn_forward.1} parent=1 // pred_fallthru
      _
    // Predicated region
    $region86: #{fofe_nn_forward.1} parent=1 // pred_check
      _
    $region87: #{fofe_nn_forward.1} parent=1 // pred_check_branch
      %4473 = sbr.rel (0) target = $region89
    $region88: #{fofe_nn_forward.1} parent=1 // pred_region
      %4475 = dma.done [#allocation6], 32
    $region89: #{fofe_nn_forward.1} parent=1 // pred_fallthru
      _
    %4476 = vsyncpa [#allocation4], 1
    %4477 = vsyncpa [#allocation6], 1

</llo_original>
